<compile_context>
chip_gen: v6e
topology: v6e:2x2x1
jax: 0.10.0
libtpu: 0.0.40
codegen_flags: <defaults>
</compile_context>

<pallas_src>
import functools

import jax
import jax.numpy as jnp
from jax.experimental import pallas as pl
from jax.experimental.pallas import tpu as pltpu

NGROUPS = 16
EPS = 1e-4        # nn.GroupNorm(NGROUPS, dim, eps=0.0001)
PADL = 8          # 8-aligned column offset of the conv interior in the scratch


def _round_up(x, m):
    return (x + m - 1) // m * m


def _basic_block_kernel(x_ref, w1_ref, w2_ref, g1_ref, b1_ref, g2_ref, b2_ref,
                        amat_ref, rp1_ref, cp1_ref, rp2_ref, cp2_ref,
                        o_ref, pad_ref, *, H, W, C):
    """One batch element per grid step.

    pad_ref : (H+2, Ws, C) bf16 scratch holding the zero-padded conv input.
              Interior lives at rows [1, H+1), cols [PADL, PADL+W).
    w*_ref  : (9, C, C) bf16 weights, index k = kh*3 + kw, layout [cin, cout].
    rp*/cp* : separable coord-channel conv contribution (f32):
              bias[i, j] = rp[i, jclass(j)] + cp[iclass(i), j].
    """
    Ws = pad_ref.shape[1]

    # --- zero only the 1-pixel border the taps read; interior is overwritten
    #     every step (no program_id==0 init -> megacore/parallel-axis safe).
    zrow = jnp.zeros((1, Ws, C), jnp.bfloat16)
    zcol = jnp.zeros((H + 2, 1, C), jnp.bfloat16)
    pad_ref[0:1, :, :] = zrow
    pad_ref[H + 1:H + 2, :, :] = zrow
    pad_ref[:, PADL - 1:PADL, :] = zcol
    pad_ref[:, PADL + W:PADL + W + 1, :] = zcol

    x2d = x_ref[0].reshape(H * W, C)      # (HW, C) f32: GN1 input + residual
    amat = amat_ref[...]                  # (C, C) f32 group-average matrix

    def gn_relu(y2d, gamma, beta):
        # GroupNorm(NGROUPS, C, eps=EPS) + ReLU; stable two-pass moments in f32.
        s = jnp.sum(y2d, axis=0, keepdims=True)                        # (1, C)
        mean = jnp.dot(s, amat, preferred_element_type=jnp.float32)    # (1, C)
        d = y2d - mean
        var = jnp.dot(jnp.sum(d * d, axis=0, keepdims=True), amat,
                      preferred_element_type=jnp.float32)               # (1, C)
        inv = jax.lax.rsqrt(var + EPS)
        return jnp.maximum(d * (inv * gamma) + beta, 0.0)

    def coord_bias(rp_ref, cp_ref):
        # Rebuild the data-independent coord-channel contribution from its
        # separable parts with a handful of VPU selects (f32).
        rp = rp_ref[...]    # (H, 3, C): j-class {0: j==0, 1: interior, 2: j==W-1}
        cp = cp_ref[...]    # (3, W, C): i-class {0: i==0, 1: interior, 2: i==H-1}
        jidx = jax.lax.broadcasted_iota(jnp.int32, (H, W, 1), 1)
        iidx = jax.lax.broadcasted_iota(jnp.int32, (H, W, 1), 0)
        rsel = jnp.where(jidx == 0, rp[:, 0:1, :],
                         jnp.where(jidx == W - 1, rp[:, 2:3, :], rp[:, 1:2, :]))
        csel = jnp.where(iidx == 0, cp[0:1, :, :],
                         jnp.where(iidx == H - 1, cp[2:3, :, :], cp[1:2, :, :]))
        return (rsel + csel).reshape(H * W, C)

    def conv3x3(w_ref, rp_ref, cp_ref):
        # 3x3 / stride 1 / pad 1 / no bias.  9 bf16 MXU matmuls with K = C read
        # the padded scratch taps directly (no concat slab); f32 accumulation.
        acc = coord_bias(rp_ref, cp_ref)                               # (HW, C) f32
        for kh in range(3):
            for kw in range(3):
                c0 = PADL - 1 + kw
                tap = pad_ref[kh:kh + H, c0:c0 + W, :]                 # (H, W, C) bf16
                acc = acc + jnp.dot(tap.reshape(H * W, C), w_ref[kh * 3 + kw],
                                    preferred_element_type=jnp.float32)
        return acc

    # ---- norm1 -> relu1 -> conv1 ----
    y1 = gn_relu(x2d, g1_ref[...], b1_ref[...])
    pad_ref[1:H + 1, PADL:PADL + W, :] = y1.reshape(H, W, C).astype(jnp.bfloat16)
    out1 = conv3x3(w1_ref, rp1_ref, cp1_ref)

    # ---- norm2 -> relu2 -> conv2 ----
    y2 = gn_relu(out1, g2_ref[...], b2_ref[...])
    pad_ref[1:H + 1, PADL:PADL + W, :] = y2.reshape(H, W, C).astype(jnp.bfloat16)
    out2 = conv3x3(w2_ref, rp2_ref, cp2_ref)

    # ---- residual add ----
    o_ref[...] = (out2 + x2d).reshape(1, H, W, C)


def basic_block_forward(t, x_nchw, params):
    """params: w1/w2 in PyTorch Conv2d layout (Cout, Cin+3, 3, 3); g*/b* shape (C,)."""
    N, C, H, W = x_nchw.shape
    assert C % NGROUPS == 0, "GroupNorm(16, dim) requires dim % 16 == 0"
    assert H >= 3 and W >= 3, "3x3 conv border handling assumes H, W >= 3"

    x_nhwc = jnp.transpose(x_nchw, (0, 2, 3, 1)).astype(jnp.float32)

    # ---- main-channel weights: (9, C, C) bf16, index k = kh*3 + kw, [cin, cout]
    def main_weights(w_oihw):
        w = jnp.transpose(w_oihw[:, :C, :, :], (2, 3, 1, 0))   # (kh, kw, cin, cout)
        return w.reshape(9, C, C).astype(jnp.bfloat16)

    w1k = main_weights(params["w1"])
    w2k = main_weights(params["w2"])

    # ---- coord-channel contribution, separable form (computed once, f32) ----
    hh = jnp.broadcast_to(jnp.arange(H, dtype=jnp.float32).reshape(1, 1, H, 1),
                          (1, 1, H, W))
    ww = jnp.broadcast_to(jnp.arange(W, dtype=jnp.float32).reshape(1, 1, 1, W),
                          (1, 1, H, W))
    tt = jnp.full((1, 1, H, W), jnp.asarray(t, jnp.float32))
    coord_tr = jnp.concatenate([tt, hh], axis=1)   # t + row channels: constant in j
    coord_c = ww                                   # col channel: constant in i

    def small_conv(inp, w):
        return jax.lax.conv_general_dilated(
            inp, w, window_strides=(1, 1), padding=((1, 1), (1, 1)),
            dimension_numbers=("NCHW", "OIHW", "NCHW"))

    def coord_parts(w_oihw):
        wc = w_oihw[:, C:, :, :].astype(jnp.float32)   # (C, 3, 3, 3): [{t,row,col}]
        tr = small_conv(coord_tr, wc[:, 0:2])          # varies with i, j-class only
        cc = small_conv(coord_c, wc[:, 2:3])           # varies with j, i-class only
        tr = jnp.transpose(tr[0], (1, 2, 0))           # (H, W, C)
        cc = jnp.transpose(cc[0], (1, 2, 0))           # (H, W, C)
        rowpart = jnp.stack([tr[:, 0, :], tr[:, 1, :], tr[:, W - 1, :]], axis=1)
        colpart = jnp.stack([cc[0, :, :], cc[1, :, :], cc[H - 1, :, :]], axis=0)
        return rowpart, colpart                        # (H, 3, C), (3, W, C)

    rp1, cp1 = coord_parts(params["w1"])
    rp2, cp2 = coord_parts(params["w2"])

    g1 = params["g1"].reshape(1, C).astype(jnp.float32)
    b1 = params["b1"].reshape(1, C).astype(jnp.float32)
    g2 = params["g2"].reshape(1, C).astype(jnp.float32)
    b2 = params["b2"].reshape(1, C).astype(jnp.float32)

    # group-averaging matrix: amat[j, c] = 1/(cpg*H*W) if channels j, c share a group
    cpg = C // NGROUPS
    gid = jnp.arange(C) // cpg
    amat = (gid[:, None] == gid[None, :]).astype(jnp.float32) / float(cpg * H * W)

    Ws = _round_up(PADL + W + 1, 8)   # sublane-friendly scratch width
    kernel = functools.partial(_basic_block_kernel, H=H, W=W, C=C)

    flops = 4 * N * H * W * 9 * C * C                       # 2 convs, 2 flops/MAC
    bytes_accessed = (2 * N * H * W * C * 4                  # x in + out (f32)
                      + 2 * 9 * C * C * 2                    # bf16 weights
                      + (6 * (H + W) + C) * C * 4)           # coord parts + amat
    cost = pl.CostEstimate(flops=flops, transcendentals=2 * N * C,
                           bytes_accessed=bytes_accessed)

    out_nhwc = pl.pallas_call(
        kernel,
        out_shape=jax.ShapeDtypeStruct((N, H, W, C), jnp.float32),
        grid=(N,),
        in_specs=[
            pl.BlockSpec((1, H, W, C), lambda n: (n, 0, 0, 0)),     # x
            pl.BlockSpec((9, C, C), lambda n: (0, 0, 0)),           # w1 (bf16)
            pl.BlockSpec((9, C, C), lambda n: (0, 0, 0)),           # w2 (bf16)
            pl.BlockSpec((1, C), lambda n: (0, 0)),                 # gamma1
            pl.BlockSpec((1, C), lambda n: (0, 0)),                 # beta1
            pl.BlockSpec((1, C), lambda n: (0, 0)),                 # gamma2
            pl.BlockSpec((1, C), lambda n: (0, 0)),                 # beta2
            pl.BlockSpec((C, C), lambda n: (0, 0)),                 # group matrix
            pl.BlockSpec((H, 3, C), lambda n: (0, 0, 0)),           # rowpart conv1
            pl.BlockSpec((3, W, C), lambda n: (0, 0, 0)),           # colpart conv1
            pl.BlockSpec((H, 3, C), lambda n: (0, 0, 0)),           # rowpart conv2
            pl.BlockSpec((3, W, C), lambda n: (0, 0, 0)),           # colpart conv2
        ],
        out_specs=pl.BlockSpec((1, H, W, C), lambda n: (n, 0, 0, 0)),
        scratch_shapes=[pltpu.VMEM((H + 2, Ws, C), jnp.bfloat16)],
        compiler_params=pltpu.CompilerParams(
            dimension_semantics=("parallel",),
            # 48 MiB fits under v7x's 64 MiB physical VMEM; raise on v5e/v6e
            # (128 MiB) if bigger row tiles / deeper buffering are wanted.
            vmem_limit_bytes=48 * 1024 * 1024),
        cost_estimate=cost,
    )(x_nhwc, w1k, w2k, g1, b1, g2, b2, amat, rp1, cp1, rp2, cp2)

    return jnp.transpose(out_nhwc, (0, 3, 1, 2))


# ----------------------------- pure-JAX reference -----------------------------
def _group_norm_ref(x, gamma, beta):
    N, C, H, W = x.shape
    cpg = C // NGROUPS
    xg = x.reshape(N, NGROUPS, cpg, H, W)
    mean = xg.mean(axis=(2, 3, 4), keepdims=True)
    var = ((xg - mean) ** 2).mean(axis=(2, 3, 4), keepdims=True)
    y = ((xg - mean) / jnp.sqrt(var + EPS)).reshape(N, C, H, W)
    return y * gamma.reshape(1, C, 1, 1) + beta.reshape(1, C, 1, 1)


def _concat_coord_conv_ref(t, x, w):
    N, C, H, W = x.shape
    tt = jnp.full((N, 1, H, W), t, x.dtype)
    hh = jnp.broadcast_to(jnp.arange(H, dtype=x.dtype).reshape(1, 1, H, 1), (N, 1, H, W))
    ww = jnp.broadcast_to(jnp.arange(W, dtype=x.dtype).reshape(1, 1, 1, W), (N, 1, H, W))
    xa = jnp.concatenate([x, tt, hh, ww], axis=1)
    return jax.lax.conv_general_dilated(
        xa, w, window_strides=(1, 1), padding=((1, 1), (1, 1)),
        dimension_numbers=("NCHW", "OIHW", "NCHW"))


def _basic_block_ref(t, x, params):
    out = jnp.maximum(_group_norm_ref(x, params["g1"], params["b1"]), 0.0)
    out = _concat_coord_conv_ref(t, out, params["w1"])
    out = jnp.maximum(_group_norm_ref(out, params["g2"], params["b2"]), 0.0)
    out = _concat_coord_conv_ref(t, out, params["w2"])
    return out + x


if __name__ == "__main__":
    key = jax.random.PRNGKey(0)
    N, C, H, W = 2, 16, 8, 8          # GroupNorm(16, dim) => dim multiple of 16
    ks = jax.random.split(key, 7)
    x = jax.random.normal(ks[0], (N, C, H, W), jnp.float32)
    t = jnp.float32(0.5)
    params = {
        "w1": 0.1 * jax.random.normal(ks[1], (C, C + 3, 3, 3), jnp.float32),
        "w2": 0.1 * jax.random.normal(ks[2], (C, C + 3, 3, 3), jnp.float32),
        "g1": 1.0 + 0.1 * jax.random.normal(ks[3], (C,), jnp.float32),
        "b1": 0.1 * jax.random.normal(ks[4], (C,), jnp.float32),
        "g2": 1.0 + 0.1 * jax.random.normal(ks[5], (C,), jnp.float32),
        "b2": 0.1 * jax.random.normal(ks[6], (C,), jnp.float32),
    }

    fwd = jax.jit(basic_block_forward)
    out = fwd(t, x, params)
    jax.block_until_ready(out)

    ref = _basic_block_ref(t, x, params)
    err = float(jnp.max(jnp.abs(out - ref)))
    # Conv matmuls run in bf16 (f32 accumulation) per the perf review, so the
    # comparison against the f32 reference uses a bf16-appropriate tolerance.
    assert jnp.allclose(out, ref, atol=3e-2, rtol=3e-2), f"max abs err = {err}"
    print("KERNEL_OK")
</pallas_src>

<mosaic_0001>
module attributes {stable_mosaic.version = 11 : i64} {
  func.func @_basic_block_kernel(%arg0: i32, %arg1: memref<1x8x8x16xf32, #tpu.memory_space<vmem>>, %arg2: memref<9x16x16xbf16, #tpu.memory_space<vmem>>, %arg3: memref<9x16x16xbf16, #tpu.memory_space<vmem>>, %arg4: memref<1x16xf32, #tpu.memory_space<vmem>>, %arg5: memref<1x16xf32, #tpu.memory_space<vmem>>, %arg6: memref<1x16xf32, #tpu.memory_space<vmem>>, %arg7: memref<1x16xf32, #tpu.memory_space<vmem>>, %arg8: memref<16x16xf32, #tpu.memory_space<vmem>>, %arg9: memref<8x3x16xf32, #tpu.memory_space<vmem>>, %arg10: memref<3x8x16xf32, #tpu.memory_space<vmem>>, %arg11: memref<8x3x16xf32, #tpu.memory_space<vmem>>, %arg12: memref<3x8x16xf32, #tpu.memory_space<vmem>>, %arg13: memref<1x8x8x16xf32, #tpu.memory_space<vmem>>, %arg14: memref<10x24x16xbf16, #tpu.memory_space<vmem>>) attributes {dimension_semantics = [#tpu.dimension_semantics<parallel>], iteration_bounds = array<i64: 2>, scalar_prefetch = 0 : i64, scratch_operands = 1 : i64, tpu.core_type = #tpu.core_type<tc>, window_params = [{transform_indices = @transform_0, window_bounds = array<i64: 1, 8, 8, 16>}, {pipeline_mode = #tpu.pipeline_mode<synchronous>, transform_indices = @transform_1, window_bounds = array<i64: 9, 16, 16>}, {pipeline_mode = #tpu.pipeline_mode<synchronous>, transform_indices = @transform_2, window_bounds = array<i64: 9, 16, 16>}, {pipeline_mode = #tpu.pipeline_mode<synchronous>, transform_indices = @transform_3, window_bounds = array<i64: 1, 16>}, {pipeline_mode = #tpu.pipeline_mode<synchronous>, transform_indices = @transform_4, window_bounds = array<i64: 1, 16>}, {pipeline_mode = #tpu.pipeline_mode<synchronous>, transform_indices = @transform_5, window_bounds = array<i64: 1, 16>}, {pipeline_mode = #tpu.pipeline_mode<synchronous>, transform_indices = @transform_6, window_bounds = array<i64: 1, 16>}, {pipeline_mode = #tpu.pipeline_mode<synchronous>, transform_indices = @transform_7, window_bounds = array<i64: 16, 16>}, {pipeline_mode = #tpu.pipeline_mode<synchronous>, transform_indices = @transform_8, window_bounds = array<i64: 8, 3, 16>}, {pipeline_mode = #tpu.pipeline_mode<synchronous>, transform_indices = @transform_9, window_bounds = array<i64: 3, 8, 16>}, {pipeline_mode = #tpu.pipeline_mode<synchronous>, transform_indices = @transform_10, window_bounds = array<i64: 8, 3, 16>}, {pipeline_mode = #tpu.pipeline_mode<synchronous>, transform_indices = @transform_11, window_bounds = array<i64: 3, 8, 16>}, {transform_indices = @transform_12, window_bounds = array<i64: 1, 8, 8, 16>}]} {
    %cst = arith.constant 0.000000e+00 : bf16
    %0 = vector.broadcast %cst : bf16 to vector<1x24x16xbf16>
    %cst_0 = arith.constant 0.000000e+00 : bf16
    %1 = vector.broadcast %cst_0 : bf16 to vector<10x1x16xbf16>
    %c0 = arith.constant 0 : index
    %c0_1 = arith.constant 0 : index
    %c0_2 = arith.constant 0 : index
    %2 = vector.load %arg14[%c0, %c0_1, %c0_2] : memref<10x24x16xbf16, #tpu.memory_space<vmem>>, vector<1x24x16xbf16>
    tpu.vector_store %arg14[%c0, %c0_1, %c0_2], %0 {strides = array<i32>} : memref<10x24x16xbf16, #tpu.memory_space<vmem>>, vector<1x24x16xbf16>,
    %c9 = arith.constant 9 : index
    %c0_3 = arith.constant 0 : index
    %c0_4 = arith.constant 0 : index
    %3 = vector.load %arg14[%c9, %c0_3, %c0_4] : memref<10x24x16xbf16, #tpu.memory_space<vmem>>, vector<1x24x16xbf16>
    tpu.vector_store %arg14[%c9, %c0_3, %c0_4], %0 {strides = array<i32>} : memref<10x24x16xbf16, #tpu.memory_space<vmem>>, vector<1x24x16xbf16>,
    %c0_5 = arith.constant 0 : index
    %c7 = arith.constant 7 : index
    %c0_6 = arith.constant 0 : index
    %4 = vector.load %arg14[%c0_5, %c7, %c0_6] : memref<10x24x16xbf16, #tpu.memory_space<vmem>>, vector<10x1x16xbf16>
    tpu.vector_store %arg14[%c0_5, %c7, %c0_6], %1 {strides = array<i32>} : memref<10x24x16xbf16, #tpu.memory_space<vmem>>, vector<10x1x16xbf16>,
    %c0_7 = arith.constant 0 : index
    %c16 = arith.constant 16 : index
    %c0_8 = arith.constant 0 : index
    %5 = vector.load %arg14[%c0_7, %c16, %c0_8] : memref<10x24x16xbf16, #tpu.memory_space<vmem>>, vector<10x1x16xbf16>
    tpu.vector_store %arg14[%c0_7, %c16, %c0_8], %1 {strides = array<i32>} : memref<10x24x16xbf16, #tpu.memory_space<vmem>>, vector<10x1x16xbf16>,
    %c0_9 = arith.constant 0 : index
    %c0_10 = arith.constant 0 : index
    %c0_11 = arith.constant 0 : index
    %c0_12 = arith.constant 0 : index
    %6 = vector.load %arg1[%c0_9, %c0_10, %c0_11, %c0_12] : memref<1x8x8x16xf32, #tpu.memory_space<vmem>>, vector<1x8x8x16xf32>
    %7 = vector.shape_cast %6 : vector<1x8x8x16xf32> to vector<8x8x16xf32>
    %8 = vector.shape_cast %7 : vector<8x8x16xf32> to vector<64x16xf32>
    %c0_13 = arith.constant 0 : index
    %c0_14 = arith.constant 0 : index
    %9 = vector.load %arg8[%c0_13, %c0_14] : memref<16x16xf32, #tpu.memory_space<vmem>>, vector<16x16xf32>
    %c0_15 = arith.constant 0 : index
    %c0_16 = arith.constant 0 : index
    %10 = vector.load %arg4[%c0_15, %c0_16] : memref<1x16xf32, #tpu.memory_space<vmem>>, vector<1x16xf32>
    %c0_17 = arith.constant 0 : index
    %c0_18 = arith.constant 0 : index
    %11 = vector.load %arg5[%c0_17, %c0_18] : memref<1x16xf32, #tpu.memory_space<vmem>>, vector<1x16xf32>
    %cst_19 = arith.constant dense<0.000000e+00> : vector<16xf32>
    %12 = vector.multi_reduction <add>, %8, %cst_19 [0] : vector<64x16xf32> to vector<16xf32>
    %13 = vector.shape_cast %12 : vector<16xf32> to vector<1x16xf32>
    %cst_20 = arith.constant dense<0.000000e+00> : vector<1x16xf32>
    %14 = tpu.matmul %13, %9, %cst_20 {dimension_numbers = #tpu.dot_dimension_numbers<[1], [0], [0], [1], [0, 0, 1, 1], [], []>} : vector<1x16xf32>, vector<16x16xf32>, vector<1x16xf32> -> vector<1x16xf32>
    %15 = vector.broadcast %14 : vector<1x16xf32> to vector<64x16xf32>
    %16 = arith.subf %8, %15 : vector<64x16xf32>
    %17 = arith.mulf %16, %16 : vector<64x16xf32>
    %cst_21 = arith.constant dense<0.000000e+00> : vector<16xf32>
    %18 = vector.multi_reduction <add>, %17, %cst_21 [0] : vector<64x16xf32> to vector<16xf32>
    %19 = vector.shape_cast %18 : vector<16xf32> to vector<1x16xf32>
    %cst_22 = arith.constant dense<0.000000e+00> : vector<1x16xf32>
    %20 = tpu.matmul %19, %9, %cst_22 {dimension_numbers = #tpu.dot_dimension_numbers<[1], [0], [0], [1], [0, 0, 1, 1], [], []>} : vector<1x16xf32>, vector<16x16xf32>, vector<1x16xf32> -> vector<1x16xf32>
    %cst_23 = arith.constant 9.99999974E-5 : f32
    %21 = vector.broadcast %cst_23 : f32 to vector<1x16xf32>
    %22 = arith.addf %20, %21 : vector<1x16xf32>
    %23 = math.rsqrt %22 : vector<1x16xf32>
    %24 = arith.mulf %23, %10 : vector<1x16xf32>
    %25 = vector.broadcast %24 : vector<1x16xf32> to vector<64x16xf32>
    %26 = arith.mulf %16, %25 : vector<64x16xf32>
    %27 = vector.broadcast %11 : vector<1x16xf32> to vector<64x16xf32>
    %28 = arith.addf %26, %27 : vector<64x16xf32>
    %cst_24 = arith.constant 0.000000e+00 : f32
    %29 = vector.broadcast %cst_24 : f32 to vector<64x16xf32>
    %30 = arith.maximumf %28, %29 : vector<64x16xf32>
    %31 = vector.shape_cast %30 : vector<64x16xf32> to vector<8x8x16xf32>
    %32 = arith.truncf %31 : vector<8x8x16xf32> to vector<8x8x16xbf16>
    %c1 = arith.constant 1 : index
    %c8 = arith.constant 8 : index
    %c0_25 = arith.constant 0 : index
    %33 = vector.load %arg14[%c1, %c8, %c0_25] : memref<10x24x16xbf16, #tpu.memory_space<vmem>>, vector<8x8x16xbf16>
    tpu.vector_store %arg14[%c1, %c8, %c0_25], %32 {strides = array<i32>} : memref<10x24x16xbf16, #tpu.memory_space<vmem>>, vector<8x8x16xbf16>,
    %c0_26 = arith.constant 0 : index
    %c0_27 = arith.constant 0 : index
    %c0_28 = arith.constant 0 : index
    %34 = vector.load %arg9[%c0_26, %c0_27, %c0_28] : memref<8x3x16xf32, #tpu.memory_space<vmem>>, vector<8x3x16xf32>
    %c0_29 = arith.constant 0 : index
    %c0_30 = arith.constant 0 : index
    %c0_31 = arith.constant 0 : index
    %35 = vector.load %arg10[%c0_29, %c0_30, %c0_31] : memref<3x8x16xf32, #tpu.memory_space<vmem>>, vector<3x8x16xf32>
    %36 = tpu.iota {dimensions = array<i32: 1>} : vector<8x8x1xi32>
    %37 = tpu.iota {dimensions = array<i32: 0>} : vector<8x8x1xi32>
    %c0_i32 = arith.constant 0 : i32
    %38 = vector.broadcast %c0_i32 : i32 to vector<8x8x1xi32>
    %39 = arith.cmpi eq, %36, %38 : vector<8x8x1xi32>
    %40 = vector.extract_strided_slice %34 {offsets = [0, 0, 0], sizes = [8, 1, 16], strides = [1, 1, 1]} : vector<8x3x16xf32> to vector<8x1x16xf32>
    %c7_i32 = arith.constant 7 : i32
    %41 = vector.broadcast %c7_i32 : i32 to vector<8x8x1xi32>
    %42 = arith.cmpi eq, %36, %41 : vector<8x8x1xi32>
    %43 = vector.extract_strided_slice %34 {offsets = [0, 2, 0], sizes = [8, 1, 16], strides = [1, 1, 1]} : vector<8x3x16xf32> to vector<8x1x16xf32>
    %44 = vector.extract_strided_slice %34 {offsets = [0, 1, 0], sizes = [8, 1, 16], strides = [1, 1, 1]} : vector<8x3x16xf32> to vector<8x1x16xf32>
    %45 = vector.shape_cast %42 : vector<8x8x1xi1> to vector<8x8x1xi1>
    %46 = vector.broadcast %45 : vector<8x8x1xi1> to vector<8x8x16xi1>
    %47 = vector.shape_cast %43 : vector<8x1x16xf32> to vector<8x1x16xf32>
    %48 = vector.broadcast %47 : vector<8x1x16xf32> to vector<8x8x16xf32>
    %49 = vector.shape_cast %44 : vector<8x1x16xf32> to vector<8x1x16xf32>
    %50 = vector.broadcast %49 : vector<8x1x16xf32> to vector<8x8x16xf32>
    %51 = arith.select %46, %48, %50 : vector<8x8x16xi1>, vector<8x8x16xf32>
    %52 = vector.shape_cast %39 : vector<8x8x1xi1> to vector<8x8x1xi1>
    %53 = vector.broadcast %52 : vector<8x8x1xi1> to vector<8x8x16xi1>
    %54 = vector.shape_cast %40 : vector<8x1x16xf32> to vector<8x1x16xf32>
    %55 = vector.broadcast %54 : vector<8x1x16xf32> to vector<8x8x16xf32>
    %56 = arith.select %53, %55, %51 : vector<8x8x16xi1>, vector<8x8x16xf32>
    %c0_i32_32 = arith.constant 0 : i32
    %57 = vector.broadcast %c0_i32_32 : i32 to vector<8x8x1xi32>
    %58 = arith.cmpi eq, %37, %57 : vector<8x8x1xi32>
    %59 = vector.extract_strided_slice %35 {offsets = [0, 0, 0], sizes = [1, 8, 16], strides = [1, 1, 1]} : vector<3x8x16xf32> to vector<1x8x16xf32>
    %c7_i32_33 = arith.constant 7 : i32
    %60 = vector.broadcast %c7_i32_33 : i32 to vector<8x8x1xi32>
    %61 = arith.cmpi eq, %37, %60 : vector<8x8x1xi32>
    %62 = vector.extract_strided_slice %35 {offsets = [2, 0, 0], sizes = [1, 8, 16], strides = [1, 1, 1]} : vector<3x8x16xf32> to vector<1x8x16xf32>
    %63 = vector.extract_strided_slice %35 {offsets = [1, 0, 0], sizes = [1, 8, 16], strides = [1, 1, 1]} : vector<3x8x16xf32> to vector<1x8x16xf32>
    %64 = vector.shape_cast %61 : vector<8x8x1xi1> to vector<8x8x1xi1>
    %65 = vector.broadcast %64 : vector<8x8x1xi1> to vector<8x8x16xi1>
    %66 = vector.shape_cast %62 : vector<1x8x16xf32> to vector<1x8x16xf32>
    %67 = vector.broadcast %66 : vector<1x8x16xf32> to vector<8x8x16xf32>
    %68 = vector.shape_cast %63 : vector<1x8x16xf32> to vector<1x8x16xf32>
    %69 = vector.broadcast %68 : vector<1x8x16xf32> to vector<8x8x16xf32>
    %70 = arith.select %65, %67, %69 : vector<8x8x16xi1>, vector<8x8x16xf32>
    %71 = vector.shape_cast %58 : vector<8x8x1xi1> to vector<8x8x1xi1>
    %72 = vector.broadcast %71 : vector<8x8x1xi1> to vector<8x8x16xi1>
    %73 = vector.shape_cast %59 : vector<1x8x16xf32> to vector<1x8x16xf32>
    %74 = vector.broadcast %73 : vector<1x8x16xf32> to vector<8x8x16xf32>
    %75 = arith.select %72, %74, %70 : vector<8x8x16xi1>, vector<8x8x16xf32>
    %76 = arith.addf %56, %75 : vector<8x8x16xf32>
    %77 = vector.shape_cast %76 : vector<8x8x16xf32> to vector<64x16xf32>
    %c0_34 = arith.constant 0 : index
    %c7_35 = arith.constant 7 : index
    %c0_36 = arith.constant 0 : index
    %78 = vector.load %arg14[%c0_34, %c7_35, %c0_36] : memref<10x24x16xbf16, #tpu.memory_space<vmem>>, vector<8x8x16xbf16>
    %79 = vector.shape_cast %78 : vector<8x8x16xbf16> to vector<64x16xbf16>
    %c0_37 = arith.constant 0 : index
    %c0_38 = arith.constant 0 : index
    %c0_39 = arith.constant 0 : index
    %80 = vector.load %arg2[%c0_37, %c0_38, %c0_39] : memref<9x16x16xbf16, #tpu.memory_space<vmem>>, vector<1x16x16xbf16>
    %81 = vector.shape_cast %80 : vector<1x16x16xbf16> to vector<16x16xbf16>
    %cst_40 = arith.constant dense<0.000000e+00> : vector<64x16xf32>
    %82 = tpu.matmul %79, %81, %cst_40 {dimension_numbers = #tpu.dot_dimension_numbers<[1], [0], [0], [1], [0, 0, 1, 1], [], []>} : vector<64x16xbf16>, vector<16x16xbf16>, vector<64x16xf32> -> vector<64x16xf32>
    %83 = arith.addf %77, %82 : vector<64x16xf32>
    %c0_41 = arith.constant 0 : index
    %c8_42 = arith.constant 8 : index
    %c0_43 = arith.constant 0 : index
    %84 = vector.load %arg14[%c0_41, %c8_42, %c0_43] : memref<10x24x16xbf16, #tpu.memory_space<vmem>>, vector<8x8x16xbf16>
    %85 = vector.shape_cast %84 : vector<8x8x16xbf16> to vector<64x16xbf16>
    %c1_44 = arith.constant 1 : index
    %c0_45 = arith.constant 0 : index
    %c0_46 = arith.constant 0 : index
    %86 = vector.load %arg2[%c1_44, %c0_45, %c0_46] : memref<9x16x16xbf16, #tpu.memory_space<vmem>>, vector<1x16x16xbf16>
    %87 = vector.shape_cast %86 : vector<1x16x16xbf16> to vector<16x16xbf16>
    %cst_47 = arith.constant dense<0.000000e+00> : vector<64x16xf32>
    %88 = tpu.matmul %85, %87, %cst_47 {dimension_numbers = #tpu.dot_dimension_numbers<[1], [0], [0], [1], [0, 0, 1, 1], [], []>} : vector<64x16xbf16>, vector<16x16xbf16>, vector<64x16xf32> -> vector<64x16xf32>
    %89 = arith.addf %83, %88 : vector<64x16xf32>
    %c0_48 = arith.constant 0 : index
    %c9_49 = arith.constant 9 : index
    %c0_50 = arith.constant 0 : index
    %90 = vector.load %arg14[%c0_48, %c9_49, %c0_50] : memref<10x24x16xbf16, #tpu.memory_space<vmem>>, vector<8x8x16xbf16>
    %91 = vector.shape_cast %90 : vector<8x8x16xbf16> to vector<64x16xbf16>
    %c2 = arith.constant 2 : index
    %c0_51 = arith.constant 0 : index
    %c0_52 = arith.constant 0 : index
    %92 = vector.load %arg2[%c2, %c0_51, %c0_52] : memref<9x16x16xbf16, #tpu.memory_space<vmem>>, vector<1x16x16xbf16>
    %93 = vector.shape_cast %92 : vector<1x16x16xbf16> to vector<16x16xbf16>
    %cst_53 = arith.constant dense<0.000000e+00> : vector<64x16xf32>
    %94 = tpu.matmul %91, %93, %cst_53 {dimension_numbers = #tpu.dot_dimension_numbers<[1], [0], [0], [1], [0, 0, 1, 1], [], []>} : vector<64x16xbf16>, vector<16x16xbf16>, vector<64x16xf32> -> vector<64x16xf32>
    %95 = arith.addf %89, %94 : vector<64x16xf32>
    %c1_54 = arith.constant 1 : index
    %c7_55 = arith.constant 7 : index
    %c0_56 = arith.constant 0 : index
    %96 = vector.load %arg14[%c1_54, %c7_55, %c0_56] : memref<10x24x16xbf16, #tpu.memory_space<vmem>>, vector<8x8x16xbf16>
    %97 = vector.shape_cast %96 : vector<8x8x16xbf16> to vector<64x16xbf16>
    %c3 = arith.constant 3 : index
    %c0_57 = arith.constant 0 : index
    %c0_58 = arith.constant 0 : index
    %98 = vector.load %arg2[%c3, %c0_57, %c0_58] : memref<9x16x16xbf16, #tpu.memory_space<vmem>>, vector<1x16x16xbf16>
    %99 = vector.shape_cast %98 : vector<1x16x16xbf16> to vector<16x16xbf16>
    %cst_59 = arith.constant dense<0.000000e+00> : vector<64x16xf32>
    %100 = tpu.matmul %97, %99, %cst_59 {dimension_numbers = #tpu.dot_dimension_numbers<[1], [0], [0], [1], [0, 0, 1, 1], [], []>} : vector<64x16xbf16>, vector<16x16xbf16>, vector<64x16xf32> -> vector<64x16xf32>
    %101 = arith.addf %95, %100 : vector<64x16xf32>
    %c1_60 = arith.constant 1 : index
    %c8_61 = arith.constant 8 : index
    %c0_62 = arith.constant 0 : index
    %102 = vector.load %arg14[%c1_60, %c8_61, %c0_62] : memref<10x24x16xbf16, #tpu.memory_space<vmem>>, vector<8x8x16xbf16>
    %103 = vector.shape_cast %102 : vector<8x8x16xbf16> to vector<64x16xbf16>
    %c4 = arith.constant 4 : index
    %c0_63 = arith.constant 0 : index
    %c0_64 = arith.constant 0 : index
    %104 = vector.load %arg2[%c4, %c0_63, %c0_64] : memref<9x16x16xbf16, #tpu.memory_space<vmem>>, vector<1x16x16xbf16>
    %105 = vector.shape_cast %104 : vector<1x16x16xbf16> to vector<16x16xbf16>
    %cst_65 = arith.constant dense<0.000000e+00> : vector<64x16xf32>
    %106 = tpu.matmul %103, %105, %cst_65 {dimension_numbers = #tpu.dot_dimension_numbers<[1], [0], [0], [1], [0, 0, 1, 1], [], []>} : vector<64x16xbf16>, vector<16x16xbf16>, vector<64x16xf32> -> vector<64x16xf32>
    %107 = arith.addf %101, %106 : vector<64x16xf32>
    %c1_66 = arith.constant 1 : index
    %c9_67 = arith.constant 9 : index
    %c0_68 = arith.constant 0 : index
    %108 = vector.load %arg14[%c1_66, %c9_67, %c0_68] : memref<10x24x16xbf16, #tpu.memory_space<vmem>>, vector<8x8x16xbf16>
    %109 = vector.shape_cast %108 : vector<8x8x16xbf16> to vector<64x16xbf16>
    %c5 = arith.constant 5 : index
    %c0_69 = arith.constant 0 : index
    %c0_70 = arith.constant 0 : index
    %110 = vector.load %arg2[%c5, %c0_69, %c0_70] : memref<9x16x16xbf16, #tpu.memory_space<vmem>>, vector<1x16x16xbf16>
    %111 = vector.shape_cast %110 : vector<1x16x16xbf16> to vector<16x16xbf16>
    %cst_71 = arith.constant dense<0.000000e+00> : vector<64x16xf32>
    %112 = tpu.matmul %109, %111, %cst_71 {dimension_numbers = #tpu.dot_dimension_numbers<[1], [0], [0], [1], [0, 0, 1, 1], [], []>} : vector<64x16xbf16>, vector<16x16xbf16>, vector<64x16xf32> -> vector<64x16xf32>
    %113 = arith.addf %107, %112 : vector<64x16xf32>
    %c2_72 = arith.constant 2 : index
    %c7_73 = arith.constant 7 : index
    %c0_74 = arith.constant 0 : index
    %114 = vector.load %arg14[%c2_72, %c7_73, %c0_74] : memref<10x24x16xbf16, #tpu.memory_space<vmem>>, vector<8x8x16xbf16>
    %115 = vector.shape_cast %114 : vector<8x8x16xbf16> to vector<64x16xbf16>
    %c6 = arith.constant 6 : index
    %c0_75 = arith.constant 0 : index
    %c0_76 = arith.constant 0 : index
    %116 = vector.load %arg2[%c6, %c0_75, %c0_76] : memref<9x16x16xbf16, #tpu.memory_space<vmem>>, vector<1x16x16xbf16>
    %117 = vector.shape_cast %116 : vector<1x16x16xbf16> to vector<16x16xbf16>
    %cst_77 = arith.constant dense<0.000000e+00> : vector<64x16xf32>
    %118 = tpu.matmul %115, %117, %cst_77 {dimension_numbers = #tpu.dot_dimension_numbers<[1], [0], [0], [1], [0, 0, 1, 1], [], []>} : vector<64x16xbf16>, vector<16x16xbf16>, vector<64x16xf32> -> vector<64x16xf32>
    %119 = arith.addf %113, %118 : vector<64x16xf32>
    %c2_78 = arith.constant 2 : index
    %c8_79 = arith.constant 8 : index
    %c0_80 = arith.constant 0 : index
    %120 = vector.load %arg14[%c2_78, %c8_79, %c0_80] : memref<10x24x16xbf16, #tpu.memory_space<vmem>>, vector<8x8x16xbf16>
    %121 = vector.shape_cast %120 : vector<8x8x16xbf16> to vector<64x16xbf16>
    %c7_81 = arith.constant 7 : index
    %c0_82 = arith.constant 0 : index
    %c0_83 = arith.constant 0 : index
    %122 = vector.load %arg2[%c7_81, %c0_82, %c0_83] : memref<9x16x16xbf16, #tpu.memory_space<vmem>>, vector<1x16x16xbf16>
    %123 = vector.shape_cast %122 : vector<1x16x16xbf16> to vector<16x16xbf16>
    %cst_84 = arith.constant dense<0.000000e+00> : vector<64x16xf32>
    %124 = tpu.matmul %121, %123, %cst_84 {dimension_numbers = #tpu.dot_dimension_numbers<[1], [0], [0], [1], [0, 0, 1, 1], [], []>} : vector<64x16xbf16>, vector<16x16xbf16>, vector<64x16xf32> -> vector<64x16xf32>
    %125 = arith.addf %119, %124 : vector<64x16xf32>
    %c2_85 = arith.constant 2 : index
    %c9_86 = arith.constant 9 : index
    %c0_87 = arith.constant 0 : index
    %126 = vector.load %arg14[%c2_85, %c9_86, %c0_87] : memref<10x24x16xbf16, #tpu.memory_space<vmem>>, vector<8x8x16xbf16>
    %127 = vector.shape_cast %126 : vector<8x8x16xbf16> to vector<64x16xbf16>
    %c8_88 = arith.constant 8 : index
    %c0_89 = arith.constant 0 : index
    %c0_90 = arith.constant 0 : index
    %128 = vector.load %arg2[%c8_88, %c0_89, %c0_90] : memref<9x16x16xbf16, #tpu.memory_space<vmem>>, vector<1x16x16xbf16>
    %129 = vector.shape_cast %128 : vector<1x16x16xbf16> to vector<16x16xbf16>
    %cst_91 = arith.constant dense<0.000000e+00> : vector<64x16xf32>
    %130 = tpu.matmul %127, %129, %cst_91 {dimension_numbers = #tpu.dot_dimension_numbers<[1], [0], [0], [1], [0, 0, 1, 1], [], []>} : vector<64x16xbf16>, vector<16x16xbf16>, vector<64x16xf32> -> vector<64x16xf32>
    %131 = arith.addf %125, %130 : vector<64x16xf32>
    %c0_92 = arith.constant 0 : index
    %c0_93 = arith.constant 0 : index
    %132 = vector.load %arg6[%c0_92, %c0_93] : memref<1x16xf32, #tpu.memory_space<vmem>>, vector<1x16xf32>
    %c0_94 = arith.constant 0 : index
    %c0_95 = arith.constant 0 : index
    %133 = vector.load %arg7[%c0_94, %c0_95] : memref<1x16xf32, #tpu.memory_space<vmem>>, vector<1x16xf32>
    %cst_96 = arith.constant dense<0.000000e+00> : vector<16xf32>
    %134 = vector.multi_reduction <add>, %131, %cst_96 [0] : vector<64x16xf32> to vector<16xf32>
    %135 = vector.shape_cast %134 : vector<16xf32> to vector<1x16xf32>
    %cst_97 = arith.constant dense<0.000000e+00> : vector<1x16xf32>
    %136 = tpu.matmul %135, %9, %cst_97 {dimension_numbers = #tpu.dot_dimension_numbers<[1], [0], [0], [1], [0, 0, 1, 1], [], []>} : vector<1x16xf32>, vector<16x16xf32>, vector<1x16xf32> -> vector<1x16xf32>
    %137 = vector.broadcast %136 : vector<1x16xf32> to vector<64x16xf32>
    %138 = arith.subf %131, %137 : vector<64x16xf32>
    %139 = arith.mulf %138, %138 : vector<64x16xf32>
    %cst_98 = arith.constant dense<0.000000e+00> : vector<16xf32>
    %140 = vector.multi_reduction <add>, %139, %cst_98 [0] : vector<64x16xf32> to vector<16xf32>
    %141 = vector.shape_cast %140 : vector<16xf32> to vector<1x16xf32>
    %cst_99 = arith.constant dense<0.000000e+00> : vector<1x16xf32>
    %142 = tpu.matmul %141, %9, %cst_99 {dimension_numbers = #tpu.dot_dimension_numbers<[1], [0], [0], [1], [0, 0, 1, 1], [], []>} : vector<1x16xf32>, vector<16x16xf32>, vector<1x16xf32> -> vector<1x16xf32>
    %cst_100 = arith.constant 9.99999974E-5 : f32
    %143 = vector.broadcast %cst_100 : f32 to vector<1x16xf32>
    %144 = arith.addf %142, %143 : vector<1x16xf32>
    %145 = math.rsqrt %144 : vector<1x16xf32>
    %146 = arith.mulf %145, %132 : vector<1x16xf32>
    %147 = vector.broadcast %146 : vector<1x16xf32> to vector<64x16xf32>
    %148 = arith.mulf %138, %147 : vector<64x16xf32>
    %149 = vector.broadcast %133 : vector<1x16xf32> to vector<64x16xf32>
    %150 = arith.addf %148, %149 : vector<64x16xf32>
    %cst_101 = arith.constant 0.000000e+00 : f32
    %151 = vector.broadcast %cst_101 : f32 to vector<64x16xf32>
    %152 = arith.maximumf %150, %151 : vector<64x16xf32>
    %153 = vector.shape_cast %152 : vector<64x16xf32> to vector<8x8x16xf32>
    %154 = arith.truncf %153 : vector<8x8x16xf32> to vector<8x8x16xbf16>
    %c1_102 = arith.constant 1 : index
    %c8_103 = arith.constant 8 : index
    %c0_104 = arith.constant 0 : index
    %155 = vector.load %arg14[%c1_102, %c8_103, %c0_104] : memref<10x24x16xbf16, #tpu.memory_space<vmem>>, vector<8x8x16xbf16>
    tpu.vector_store %arg14[%c1_102, %c8_103, %c0_104], %154 {strides = array<i32>} : memref<10x24x16xbf16, #tpu.memory_space<vmem>>, vector<8x8x16xbf16>,
    %c0_105 = arith.constant 0 : index
    %c0_106 = arith.constant 0 : index
    %c0_107 = arith.constant 0 : index
    %156 = vector.load %arg11[%c0_105, %c0_106, %c0_107] : memref<8x3x16xf32, #tpu.memory_space<vmem>>, vector<8x3x16xf32>
    %c0_108 = arith.constant 0 : index
    %c0_109 = arith.constant 0 : index
    %c0_110 = arith.constant 0 : index
    %157 = vector.load %arg12[%c0_108, %c0_109, %c0_110] : memref<3x8x16xf32, #tpu.memory_space<vmem>>, vector<3x8x16xf32>
    %158 = tpu.iota {dimensions = array<i32: 1>} : vector<8x8x1xi32>
    %159 = tpu.iota {dimensions = array<i32: 0>} : vector<8x8x1xi32>
    %c0_i32_111 = arith.constant 0 : i32
    %160 = vector.broadcast %c0_i32_111 : i32 to vector<8x8x1xi32>
    %161 = arith.cmpi eq, %158, %160 : vector<8x8x1xi32>
    %162 = vector.extract_strided_slice %156 {offsets = [0, 0, 0], sizes = [8, 1, 16], strides = [1, 1, 1]} : vector<8x3x16xf32> to vector<8x1x16xf32>
    %c7_i32_112 = arith.constant 7 : i32
    %163 = vector.broadcast %c7_i32_112 : i32 to vector<8x8x1xi32>
    %164 = arith.cmpi eq, %158, %163 : vector<8x8x1xi32>
    %165 = vector.extract_strided_slice %156 {offsets = [0, 2, 0], sizes = [8, 1, 16], strides = [1, 1, 1]} : vector<8x3x16xf32> to vector<8x1x16xf32>
    %166 = vector.extract_strided_slice %156 {offsets = [0, 1, 0], sizes = [8, 1, 16], strides = [1, 1, 1]} : vector<8x3x16xf32> to vector<8x1x16xf32>
    %167 = vector.shape_cast %164 : vector<8x8x1xi1> to vector<8x8x1xi1>
    %168 = vector.broadcast %167 : vector<8x8x1xi1> to vector<8x8x16xi1>
    %169 = vector.shape_cast %165 : vector<8x1x16xf32> to vector<8x1x16xf32>
    %170 = vector.broadcast %169 : vector<8x1x16xf32> to vector<8x8x16xf32>
    %171 = vector.shape_cast %166 : vector<8x1x16xf32> to vector<8x1x16xf32>
    %172 = vector.broadcast %171 : vector<8x1x16xf32> to vector<8x8x16xf32>
    %173 = arith.select %168, %170, %172 : vector<8x8x16xi1>, vector<8x8x16xf32>
    %174 = vector.shape_cast %161 : vector<8x8x1xi1> to vector<8x8x1xi1>
    %175 = vector.broadcast %174 : vector<8x8x1xi1> to vector<8x8x16xi1>
    %176 = vector.shape_cast %162 : vector<8x1x16xf32> to vector<8x1x16xf32>
    %177 = vector.broadcast %176 : vector<8x1x16xf32> to vector<8x8x16xf32>
    %178 = arith.select %175, %177, %173 : vector<8x8x16xi1>, vector<8x8x16xf32>
    %c0_i32_113 = arith.constant 0 : i32
    %179 = vector.broadcast %c0_i32_113 : i32 to vector<8x8x1xi32>
    %180 = arith.cmpi eq, %159, %179 : vector<8x8x1xi32>
    %181 = vector.extract_strided_slice %157 {offsets = [0, 0, 0], sizes = [1, 8, 16], strides = [1, 1, 1]} : vector<3x8x16xf32> to vector<1x8x16xf32>
    %c7_i32_114 = arith.constant 7 : i32
    %182 = vector.broadcast %c7_i32_114 : i32 to vector<8x8x1xi32>
    %183 = arith.cmpi eq, %159, %182 : vector<8x8x1xi32>
    %184 = vector.extract_strided_slice %157 {offsets = [2, 0, 0], sizes = [1, 8, 16], strides = [1, 1, 1]} : vector<3x8x16xf32> to vector<1x8x16xf32>
    %185 = vector.extract_strided_slice %157 {offsets = [1, 0, 0], sizes = [1, 8, 16], strides = [1, 1, 1]} : vector<3x8x16xf32> to vector<1x8x16xf32>
    %186 = vector.shape_cast %183 : vector<8x8x1xi1> to vector<8x8x1xi1>
    %187 = vector.broadcast %186 : vector<8x8x1xi1> to vector<8x8x16xi1>
    %188 = vector.shape_cast %184 : vector<1x8x16xf32> to vector<1x8x16xf32>
    %189 = vector.broadcast %188 : vector<1x8x16xf32> to vector<8x8x16xf32>
    %190 = vector.shape_cast %185 : vector<1x8x16xf32> to vector<1x8x16xf32>
    %191 = vector.broadcast %190 : vector<1x8x16xf32> to vector<8x8x16xf32>
    %192 = arith.select %187, %189, %191 : vector<8x8x16xi1>, vector<8x8x16xf32>
    %193 = vector.shape_cast %180 : vector<8x8x1xi1> to vector<8x8x1xi1>
    %194 = vector.broadcast %193 : vector<8x8x1xi1> to vector<8x8x16xi1>
    %195 = vector.shape_cast %181 : vector<1x8x16xf32> to vector<1x8x16xf32>
    %196 = vector.broadcast %195 : vector<1x8x16xf32> to vector<8x8x16xf32>
    %197 = arith.select %194, %196, %192 : vector<8x8x16xi1>, vector<8x8x16xf32>
    %198 = arith.addf %178, %197 : vector<8x8x16xf32>
    %199 = vector.shape_cast %198 : vector<8x8x16xf32> to vector<64x16xf32>
    %c0_115 = arith.constant 0 : index
    %c7_116 = arith.constant 7 : index
    %c0_117 = arith.constant 0 : index
    %200 = vector.load %arg14[%c0_115, %c7_116, %c0_117] : memref<10x24x16xbf16, #tpu.memory_space<vmem>>, vector<8x8x16xbf16>
    %201 = vector.shape_cast %200 : vector<8x8x16xbf16> to vector<64x16xbf16>
    %c0_118 = arith.constant 0 : index
    %c0_119 = arith.constant 0 : index
    %c0_120 = arith.constant 0 : index
    %202 = vector.load %arg3[%c0_118, %c0_119, %c0_120] : memref<9x16x16xbf16, #tpu.memory_space<vmem>>, vector<1x16x16xbf16>
    %203 = vector.shape_cast %202 : vector<1x16x16xbf16> to vector<16x16xbf16>
    %cst_121 = arith.constant dense<0.000000e+00> : vector<64x16xf32>
    %204 = tpu.matmul %201, %203, %cst_121 {dimension_numbers = #tpu.dot_dimension_numbers<[1], [0], [0], [1], [0, 0, 1, 1], [], []>} : vector<64x16xbf16>, vector<16x16xbf16>, vector<64x16xf32> -> vector<64x16xf32>
    %205 = arith.addf %199, %204 : vector<64x16xf32>
    %c0_122 = arith.constant 0 : index
    %c8_123 = arith.constant 8 : index
    %c0_124 = arith.constant 0 : index
    %206 = vector.load %arg14[%c0_122, %c8_123, %c0_124] : memref<10x24x16xbf16, #tpu.memory_space<vmem>>, vector<8x8x16xbf16>
    %207 = vector.shape_cast %206 : vector<8x8x16xbf16> to vector<64x16xbf16>
    %c1_125 = arith.constant 1 : index
    %c0_126 = arith.constant 0 : index
    %c0_127 = arith.constant 0 : index
    %208 = vector.load %arg3[%c1_125, %c0_126, %c0_127] : memref<9x16x16xbf16, #tpu.memory_space<vmem>>, vector<1x16x16xbf16>
    %209 = vector.shape_cast %208 : vector<1x16x16xbf16> to vector<16x16xbf16>
    %cst_128 = arith.constant dense<0.000000e+00> : vector<64x16xf32>
    %210 = tpu.matmul %207, %209, %cst_128 {dimension_numbers = #tpu.dot_dimension_numbers<[1], [0], [0], [1], [0, 0, 1, 1], [], []>} : vector<64x16xbf16>, vector<16x16xbf16>, vector<64x16xf32> -> vector<64x16xf32>
    %211 = arith.addf %205, %210 : vector<64x16xf32>
    %c0_129 = arith.constant 0 : index
    %c9_130 = arith.constant 9 : index
    %c0_131 = arith.constant 0 : index
    %212 = vector.load %arg14[%c0_129, %c9_130, %c0_131] : memref<10x24x16xbf16, #tpu.memory_space<vmem>>, vector<8x8x16xbf16>
    %213 = vector.shape_cast %212 : vector<8x8x16xbf16> to vector<64x16xbf16>
    %c2_132 = arith.constant 2 : index
    %c0_133 = arith.constant 0 : index
    %c0_134 = arith.constant 0 : index
    %214 = vector.load %arg3[%c2_132, %c0_133, %c0_134] : memref<9x16x16xbf16, #tpu.memory_space<vmem>>, vector<1x16x16xbf16>
    %215 = vector.shape_cast %214 : vector<1x16x16xbf16> to vector<16x16xbf16>
    %cst_135 = arith.constant dense<0.000000e+00> : vector<64x16xf32>
    %216 = tpu.matmul %213, %215, %cst_135 {dimension_numbers = #tpu.dot_dimension_numbers<[1], [0], [0], [1], [0, 0, 1, 1], [], []>} : vector<64x16xbf16>, vector<16x16xbf16>, vector<64x16xf32> -> vector<64x16xf32>
    %217 = arith.addf %211, %216 : vector<64x16xf32>
    %c1_136 = arith.constant 1 : index
    %c7_137 = arith.constant 7 : index
    %c0_138 = arith.constant 0 : index
    %218 = vector.load %arg14[%c1_136, %c7_137, %c0_138] : memref<10x24x16xbf16, #tpu.memory_space<vmem>>, vector<8x8x16xbf16>
    %219 = vector.shape_cast %218 : vector<8x8x16xbf16> to vector<64x16xbf16>
    %c3_139 = arith.constant 3 : index
    %c0_140 = arith.constant 0 : index
    %c0_141 = arith.constant 0 : index
    %220 = vector.load %arg3[%c3_139, %c0_140, %c0_141] : memref<9x16x16xbf16, #tpu.memory_space<vmem>>, vector<1x16x16xbf16>
    %221 = vector.shape_cast %220 : vector<1x16x16xbf16> to vector<16x16xbf16>
    %cst_142 = arith.constant dense<0.000000e+00> : vector<64x16xf32>
    %222 = tpu.matmul %219, %221, %cst_142 {dimension_numbers = #tpu.dot_dimension_numbers<[1], [0], [0], [1], [0, 0, 1, 1], [], []>} : vector<64x16xbf16>, vector<16x16xbf16>, vector<64x16xf32> -> vector<64x16xf32>
    %223 = arith.addf %217, %222 : vector<64x16xf32>
    %c1_143 = arith.constant 1 : index
    %c8_144 = arith.constant 8 : index
    %c0_145 = arith.constant 0 : index
    %224 = vector.load %arg14[%c1_143, %c8_144, %c0_145] : memref<10x24x16xbf16, #tpu.memory_space<vmem>>, vector<8x8x16xbf16>
    %225 = vector.shape_cast %224 : vector<8x8x16xbf16> to vector<64x16xbf16>
    %c4_146 = arith.constant 4 : index
    %c0_147 = arith.constant 0 : index
    %c0_148 = arith.constant 0 : index
    %226 = vector.load %arg3[%c4_146, %c0_147, %c0_148] : memref<9x16x16xbf16, #tpu.memory_space<vmem>>, vector<1x16x16xbf16>
    %227 = vector.shape_cast %226 : vector<1x16x16xbf16> to vector<16x16xbf16>
    %cst_149 = arith.constant dense<0.000000e+00> : vector<64x16xf32>
    %228 = tpu.matmul %225, %227, %cst_149 {dimension_numbers = #tpu.dot_dimension_numbers<[1], [0], [0], [1], [0, 0, 1, 1], [], []>} : vector<64x16xbf16>, vector<16x16xbf16>, vector<64x16xf32> -> vector<64x16xf32>
    %229 = arith.addf %223, %228 : vector<64x16xf32>
    %c1_150 = arith.constant 1 : index
    %c9_151 = arith.constant 9 : index
    %c0_152 = arith.constant 0 : index
    %230 = vector.load %arg14[%c1_150, %c9_151, %c0_152] : memref<10x24x16xbf16, #tpu.memory_space<vmem>>, vector<8x8x16xbf16>
    %231 = vector.shape_cast %230 : vector<8x8x16xbf16> to vector<64x16xbf16>
    %c5_153 = arith.constant 5 : index
    %c0_154 = arith.constant 0 : index
    %c0_155 = arith.constant 0 : index
    %232 = vector.load %arg3[%c5_153, %c0_154, %c0_155] : memref<9x16x16xbf16, #tpu.memory_space<vmem>>, vector<1x16x16xbf16>
    %233 = vector.shape_cast %232 : vector<1x16x16xbf16> to vector<16x16xbf16>
    %cst_156 = arith.constant dense<0.000000e+00> : vector<64x16xf32>
    %234 = tpu.matmul %231, %233, %cst_156 {dimension_numbers = #tpu.dot_dimension_numbers<[1], [0], [0], [1], [0, 0, 1, 1], [], []>} : vector<64x16xbf16>, vector<16x16xbf16>, vector<64x16xf32> -> vector<64x16xf32>
    %235 = arith.addf %229, %234 : vector<64x16xf32>
    %c2_157 = arith.constant 2 : index
    %c7_158 = arith.constant 7 : index
    %c0_159 = arith.constant 0 : index
    %236 = vector.load %arg14[%c2_157, %c7_158, %c0_159] : memref<10x24x16xbf16, #tpu.memory_space<vmem>>, vector<8x8x16xbf16>
    %237 = vector.shape_cast %236 : vector<8x8x16xbf16> to vector<64x16xbf16>
    %c6_160 = arith.constant 6 : index
    %c0_161 = arith.constant 0 : index
    %c0_162 = arith.constant 0 : index
    %238 = vector.load %arg3[%c6_160, %c0_161, %c0_162] : memref<9x16x16xbf16, #tpu.memory_space<vmem>>, vector<1x16x16xbf16>
    %239 = vector.shape_cast %238 : vector<1x16x16xbf16> to vector<16x16xbf16>
    %cst_163 = arith.constant dense<0.000000e+00> : vector<64x16xf32>
    %240 = tpu.matmul %237, %239, %cst_163 {dimension_numbers = #tpu.dot_dimension_numbers<[1], [0], [0], [1], [0, 0, 1, 1], [], []>} : vector<64x16xbf16>, vector<16x16xbf16>, vector<64x16xf32> -> vector<64x16xf32>
    %241 = arith.addf %235, %240 : vector<64x16xf32>
    %c2_164 = arith.constant 2 : index
    %c8_165 = arith.constant 8 : index
    %c0_166 = arith.constant 0 : index
    %242 = vector.load %arg14[%c2_164, %c8_165, %c0_166] : memref<10x24x16xbf16, #tpu.memory_space<vmem>>, vector<8x8x16xbf16>
    %243 = vector.shape_cast %242 : vector<8x8x16xbf16> to vector<64x16xbf16>
    %c7_167 = arith.constant 7 : index
    %c0_168 = arith.constant 0 : index
    %c0_169 = arith.constant 0 : index
    %244 = vector.load %arg3[%c7_167, %c0_168, %c0_169] : memref<9x16x16xbf16, #tpu.memory_space<vmem>>, vector<1x16x16xbf16>
    %245 = vector.shape_cast %244 : vector<1x16x16xbf16> to vector<16x16xbf16>
    %cst_170 = arith.constant dense<0.000000e+00> : vector<64x16xf32>
    %246 = tpu.matmul %243, %245, %cst_170 {dimension_numbers = #tpu.dot_dimension_numbers<[1], [0], [0], [1], [0, 0, 1, 1], [], []>} : vector<64x16xbf16>, vector<16x16xbf16>, vector<64x16xf32> -> vector<64x16xf32>
    %247 = arith.addf %241, %246 : vector<64x16xf32>
    %c2_171 = arith.constant 2 : index
    %c9_172 = arith.constant 9 : index
    %c0_173 = arith.constant 0 : index
    %248 = vector.load %arg14[%c2_171, %c9_172, %c0_173] : memref<10x24x16xbf16, #tpu.memory_space<vmem>>, vector<8x8x16xbf16>
    %249 = vector.shape_cast %248 : vector<8x8x16xbf16> to vector<64x16xbf16>
    %c8_174 = arith.constant 8 : index
    %c0_175 = arith.constant 0 : index
    %c0_176 = arith.constant 0 : index
    %250 = vector.load %arg3[%c8_174, %c0_175, %c0_176] : memref<9x16x16xbf16, #tpu.memory_space<vmem>>, vector<1x16x16xbf16>
    %251 = vector.shape_cast %250 : vector<1x16x16xbf16> to vector<16x16xbf16>
    %cst_177 = arith.constant dense<0.000000e+00> : vector<64x16xf32>
    %252 = tpu.matmul %249, %251, %cst_177 {dimension_numbers = #tpu.dot_dimension_numbers<[1], [0], [0], [1], [0, 0, 1, 1], [], []>} : vector<64x16xbf16>, vector<16x16xbf16>, vector<64x16xf32> -> vector<64x16xf32>
    %253 = arith.addf %247, %252 : vector<64x16xf32>
    %254 = arith.addf %253, %8 : vector<64x16xf32>
    %255 = vector.shape_cast %254 : vector<64x16xf32> to vector<1x8x8x16xf32>
    %c0_178 = arith.constant 0 : index
    %c0_179 = arith.constant 0 : index
    %c0_180 = arith.constant 0 : index
    %c0_181 = arith.constant 0 : index
    %256 = vector.load %arg13[%c0_178, %c0_179, %c0_180, %c0_181] : memref<1x8x8x16xf32, #tpu.memory_space<vmem>>, vector<1x8x8x16xf32>
    tpu.vector_store %arg13[%c0_178, %c0_179, %c0_180, %c0_181], %255 {strides = array<i32>} : memref<1x8x8x16xf32, #tpu.memory_space<vmem>>, vector<1x8x8x16xf32>,
    return
  }
  func.func @transform_0(%arg0: i32) -> (i32, i32, i32, i32) {
    %c0_i32 = arith.constant 0 : i32
    %c0_i32_0 = arith.constant 0 : i32
    %c0_i32_1 = arith.constant 0 : i32
    %c0_i32_2 = arith.constant 0 : i32
    return %arg0, %c0_i32, %c0_i32_0, %c0_i32_1 : i32, i32, i32, i32
  }
  func.func @transform_1(%arg0: i32) -> (i32, i32, i32) {
    %c0_i32 = arith.constant 0 : i32
    %c0_i32_0 = arith.constant 0 : i32
    %c0_i32_1 = arith.constant 0 : i32
    %c0_i32_2 = arith.constant 0 : i32
    return %c0_i32, %c0_i32_0, %c0_i32_1 : i32, i32, i32
  }
  func.func @transform_2(%arg0: i32) -> (i32, i32, i32) {
    %c0_i32 = arith.constant 0 : i32
    %c0_i32_0 = arith.constant 0 : i32
    %c0_i32_1 = arith.constant 0 : i32
    %c0_i32_2 = arith.constant 0 : i32
    return %c0_i32, %c0_i32_0, %c0_i32_1 : i32, i32, i32
  }
  func.func @transform_3(%arg0: i32) -> (i32, i32) {
    %c0_i32 = arith.constant 0 : i32
    %c0_i32_0 = arith.constant 0 : i32
    %c0_i32_1 = arith.constant 0 : i32
    return %c0_i32, %c0_i32_0 : i32, i32
  }
  func.func @transform_4(%arg0: i32) -> (i32, i32) {
    %c0_i32 = arith.constant 0 : i32
    %c0_i32_0 = arith.constant 0 : i32
    %c0_i32_1 = arith.constant 0 : i32
    return %c0_i32, %c0_i32_0 : i32, i32
  }
  func.func @transform_5(%arg0: i32) -> (i32, i32) {
    %c0_i32 = arith.constant 0 : i32
    %c0_i32_0 = arith.constant 0 : i32
    %c0_i32_1 = arith.constant 0 : i32
    return %c0_i32, %c0_i32_0 : i32, i32
  }
  func.func @transform_6(%arg0: i32) -> (i32, i32) {
    %c0_i32 = arith.constant 0 : i32
    %c0_i32_0 = arith.constant 0 : i32
    %c0_i32_1 = arith.constant 0 : i32
    return %c0_i32, %c0_i32_0 : i32, i32
  }
  func.func @transform_7(%arg0: i32) -> (i32, i32) {
    %c0_i32 = arith.constant 0 : i32
    %c0_i32_0 = arith.constant 0 : i32
    %c0_i32_1 = arith.constant 0 : i32
    return %c0_i32, %c0_i32_0 : i32, i32
  }
  func.func @transform_8(%arg0: i32) -> (i32, i32, i32) {
    %c0_i32 = arith.constant 0 : i32
    %c0_i32_0 = arith.constant 0 : i32
    %c0_i32_1 = arith.constant 0 : i32
    %c0_i32_2 = arith.constant 0 : i32
    return %c0_i32, %c0_i32_0, %c0_i32_1 : i32, i32, i32
  }
  func.func @transform_9(%arg0: i32) -> (i32, i32, i32) {
    %c0_i32 = arith.constant 0 : i32
    %c0_i32_0 = arith.constant 0 : i32
    %c0_i32_1 = arith.constant 0 : i32
    %c0_i32_2 = arith.constant 0 : i32
    return %c0_i32, %c0_i32_0, %c0_i32_1 : i32, i32, i32
  }
  func.func @transform_10(%arg0: i32) -> (i32, i32, i32) {
    %c0_i32 = arith.constant 0 : i32
    %c0_i32_0 = arith.constant 0 : i32
    %c0_i32_1 = arith.constant 0 : i32
    %c0_i32_2 = arith.constant 0 : i32
    return %c0_i32, %c0_i32_0, %c0_i32_1 : i32, i32, i32
  }
  func.func @transform_11(%arg0: i32) -> (i32, i32, i32) {
    %c0_i32 = arith.constant 0 : i32
    %c0_i32_0 = arith.constant 0 : i32
    %c0_i32_1 = arith.constant 0 : i32
    %c0_i32_2 = arith.constant 0 : i32
    return %c0_i32, %c0_i32_0, %c0_i32_1 : i32, i32, i32
  }
  func.func @transform_12(%arg0: i32) -> (i32, i32, i32, i32) {
    %c0_i32 = arith.constant 0 : i32
    %c0_i32_0 = arith.constant 0 : i32
    %c0_i32_1 = arith.constant 0 : i32
    %c0_i32_2 = arith.constant 0 : i32
    return %arg0, %c0_i32, %c0_i32_0, %c0_i32_1 : i32, i32, i32, i32
  }
}

</mosaic_0001>

<llo_original>
// kernel: basic_block_forward.1
$region0: #{basic_block_forward.1}
  #allocation0 [shape = 'u32[]', space=smem, size = 0x4, offset = 0x4, fixed_abs, tag = 'smem constant byte address 0x4 - core index']
  #allocation1 [shape = 'u32[144,128]{1,0:T(1,128)}', space=vmem, size = 0x12000, scoped, tag = 'internal scratch']
  #allocation2 [shape = 'bf16[10,24,16]{2,1,0:T(8,128)(2,1)}', space=vmem, size = 0xf000, scoped, tag = 'scratch operand']
  %s0 = inlined_call_operand.vmem [shape: f32[2,8,8,16], index: 0, kind: input, shape index: {}]
  %s1 = inlined_call_operand.vmem [shape: bf16[9,16,16], index: 1, kind: input, shape index: {}]
  %s2 = inlined_call_operand.vmem [shape: bf16[9,16,16], index: 2, kind: input, shape index: {}]
  %s3 = inlined_call_operand.vmem [shape: f32[1,16], index: 3, kind: input, shape index: {}]
  %s4 = inlined_call_operand.vmem [shape: f32[1,16], index: 4, kind: input, shape index: {}]
  %s5 = inlined_call_operand.vmem [shape: f32[1,16], index: 5, kind: input, shape index: {}]
  %s6 = inlined_call_operand.vmem [shape: f32[1,16], index: 6, kind: input, shape index: {}]
  %s7 = inlined_call_operand.vmem [shape: f32[16,16], index: 7, kind: input, shape index: {}]
  %s8 = inlined_call_operand.vmem [shape: f32[8,3,16], index: 8, kind: input, shape index: {}]
  %s9 = inlined_call_operand.vmem [shape: f32[3,8,16], index: 9, kind: input, shape index: {}]
  %s10 = inlined_call_operand.vmem [shape: f32[8,3,16], index: 10, kind: input, shape index: {}]
  %s11 = inlined_call_operand.vmem [shape: f32[3,8,16], index: 11, kind: input, shape index: {}]
  %s12 = inlined_call_operand.hbm [shape: f32[2,8,8,16], index: 12, kind: output, shape index: {}]
  %s13 = sld [smem:[#allocation0]]
  $region81: #{basic_block_forward.1} parent=0
    _
  %s15 = ssub.s32 1, %s13
  %s16 = scalar_select 0, %s15, %s13
  $region1: #{basic_block_forward.1} parent=0
    #allocation3 [shape = 'u8[65536]{0}', space=vmem, size = 0x10000, scoped, tag = 'output window, operand 0']
    #allocation4 [shape = 's32[2]{0}', space=sflag, size = 0x8, scoped, tag = 'scoped memory for basic_block_forward.1']
    %17 = vsyncpa [#allocation4], 0
    %s18 = scalar_lea.sflag [#allocation4], 1
    %19 = vsyncpa %s18, 0
    loop: start=0, step=1, limit=4
    $region2: #{basic_block_forward.1} parent=1 // loop_pre_header
      _
    $region3: #{basic_block_forward.1} parent=1 // loop_header
      %s21 = sphi 0, %s25
      %p22 = scmp.ge.s32.totalorder %s21, 4
      %s31 = sphi 0, %s33
      %s34 = sphi 0, %s31
      %s35 = sphi 0, %s34
      %s51 = sphi 0, %s35
      %s55 = sphi 0, %s55
      %s57 = sphi 0, %s55
      %s58 = sphi 0, %s57
      %s72 = sphi 0, %s58
      %s76 = sphi 0, %s76
      %s78 = sphi 0, %s76
      %s79 = sphi 0, %s78
      %s93 = sphi 0, %s79
      %s97 = sphi 0, %s97
      %s99 = sphi 0, %s97
      %s100 = sphi 0, %s99
      %s114 = sphi 0, %s100
      %s118 = sphi 0, %s118
      %s120 = sphi 0, %s118
      %s121 = sphi 0, %s120
      %s135 = sphi 0, %s121
      %s139 = sphi 0, %s139
      %s141 = sphi 0, %s139
      %s142 = sphi 0, %s141
      %s156 = sphi 0, %s142
      %s160 = sphi 0, %s160
      %s162 = sphi 0, %s160
      %s163 = sphi 0, %s162
      %s177 = sphi 0, %s163
      %s181 = sphi 0, %s181
      %s183 = sphi 0, %s181
      %s184 = sphi 0, %s183
      %s198 = sphi 0, %s184
      %s202 = sphi 0, %s202
      %s204 = sphi 0, %s202
      %s205 = sphi 0, %s204
      %s219 = sphi 0, %s205
      %s223 = sphi 0, %s223
      %s225 = sphi 0, %s223
      %s226 = sphi 0, %s225
      %s240 = sphi 0, %s226
      %s244 = sphi 0, %s244
      %s246 = sphi 0, %s244
      %s247 = sphi 0, %s246
      %s261 = sphi 0, %s247
      %s265 = sphi 0, %s265
      %s267 = sphi 0, %s265
      %s268 = sphi 0, %s267
      %s282 = sphi 0, %s268
      %s288 = sphi 0, %s290
      %s291 = sphi 0, %s288
      %s292 = sphi 0, %s291
      %s308 = sphi 0, %s292
    $region4: #{basic_block_forward.1} parent=1 // loop_header_branch
      %24 = sbr.rel (%p22) target = $region8
    $region5: #{basic_block_forward.1} parent=1 // loop_body
      %s26 = ssub.s32 %s21, 1
      %s27 = ssub.s32 %s21, 2
      %s28 = sadd.s32 %s21, 1
      %s29 = ssub.s32 %s21, %s28
      %p30 = scmp.eq.s32.totalorder %s29, 0
      %s32 = sadd.s32 %s31, 1
      %s33 = scalar_select %p30, %s31, %s32
      %p36 = pneg %p30
      %p37 = scmp.eq.s32.totalorder %s21, 1
      %p38 = por %p36, %p37
      %p39 = scmp.ne.s32.totalorder %s31, %s34
      %p40 = scmp.eq.s32.totalorder %s21, 0
      %p41 = por %p39, %p40
      %p42 = scmp.ne.s32.totalorder %s31, %s34
      %p43 = scmp.eq.s32.totalorder %s26, 1
      %p44 = por %p42, %p43
      %p45 = scmp.ne.s32.totalorder %s34, %s35
      %p46 = scmp.eq.s32.totalorder %s26, 0
      %p47 = por %p45, %p46
      %p48 = scmp.ne.s32.totalorder %s34, %s35
      %p49 = scmp.eq.s32.totalorder %s27, 1
      %p50 = por %p48, %p49
      %p52 = scmp.ne.s32.totalorder %s35, %s51
      %p53 = scmp.eq.s32.totalorder %s27, 0
      %p54 = por %p52, %p53
      %s56 = sadd.s32 %s55, 1
      %p59 = scmp.eq.s32.totalorder %s21, 1
      %p60 = scmp.ne.s32.totalorder %s55, %s57
      %p61 = scmp.eq.s32.totalorder %s21, 0
      %p62 = por %p60, %p61
      %p63 = scmp.ne.s32.totalorder %s55, %s57
      %p64 = scmp.eq.s32.totalorder %s26, 1
      %p65 = por %p63, %p64
      %p66 = scmp.ne.s32.totalorder %s57, %s58
      %p67 = scmp.eq.s32.totalorder %s26, 0
      %p68 = por %p66, %p67
      %p69 = scmp.ne.s32.totalorder %s57, %s58
      %p70 = scmp.eq.s32.totalorder %s27, 1
      %p71 = por %p69, %p70
      %p73 = scmp.ne.s32.totalorder %s58, %s72
      %p74 = scmp.eq.s32.totalorder %s27, 0
      %p75 = por %p73, %p74
      %s77 = sadd.s32 %s76, 1
      %p80 = scmp.eq.s32.totalorder %s21, 1
      %p81 = scmp.ne.s32.totalorder %s76, %s78
      %p82 = scmp.eq.s32.totalorder %s21, 0
      %p83 = por %p81, %p82
      %p84 = scmp.ne.s32.totalorder %s76, %s78
      %p85 = scmp.eq.s32.totalorder %s26, 1
      %p86 = por %p84, %p85
      %p87 = scmp.ne.s32.totalorder %s78, %s79
      %p88 = scmp.eq.s32.totalorder %s26, 0
      %p89 = por %p87, %p88
      %p90 = scmp.ne.s32.totalorder %s78, %s79
      %p91 = scmp.eq.s32.totalorder %s27, 1
      %p92 = por %p90, %p91
      %p94 = scmp.ne.s32.totalorder %s79, %s93
      %p95 = scmp.eq.s32.totalorder %s27, 0
      %p96 = por %p94, %p95
      %s98 = sadd.s32 %s97, 1
      %p101 = scmp.eq.s32.totalorder %s21, 1
      %p102 = scmp.ne.s32.totalorder %s97, %s99
      %p103 = scmp.eq.s32.totalorder %s21, 0
      %p104 = por %p102, %p103
      %p105 = scmp.ne.s32.totalorder %s97, %s99
      %p106 = scmp.eq.s32.totalorder %s26, 1
      %p107 = por %p105, %p106
      %p108 = scmp.ne.s32.totalorder %s99, %s100
      %p109 = scmp.eq.s32.totalorder %s26, 0
      %p110 = por %p108, %p109
      %p111 = scmp.ne.s32.totalorder %s99, %s100
      %p112 = scmp.eq.s32.totalorder %s27, 1
      %p113 = por %p111, %p112
      %p115 = scmp.ne.s32.totalorder %s100, %s114
      %p116 = scmp.eq.s32.totalorder %s27, 0
      %p117 = por %p115, %p116
      %s119 = sadd.s32 %s118, 1
      %p122 = scmp.eq.s32.totalorder %s21, 1
      %p123 = scmp.ne.s32.totalorder %s118, %s120
      %p124 = scmp.eq.s32.totalorder %s21, 0
      %p125 = por %p123, %p124
      %p126 = scmp.ne.s32.totalorder %s118, %s120
      %p127 = scmp.eq.s32.totalorder %s26, 1
      %p128 = por %p126, %p127
      %p129 = scmp.ne.s32.totalorder %s120, %s121
      %p130 = scmp.eq.s32.totalorder %s26, 0
      %p131 = por %p129, %p130
      %p132 = scmp.ne.s32.totalorder %s120, %s121
      %p133 = scmp.eq.s32.totalorder %s27, 1
      %p134 = por %p132, %p133
      %p136 = scmp.ne.s32.totalorder %s121, %s135
      %p137 = scmp.eq.s32.totalorder %s27, 0
      %p138 = por %p136, %p137
      %s140 = sadd.s32 %s139, 1
      %p143 = scmp.eq.s32.totalorder %s21, 1
      %p144 = scmp.ne.s32.totalorder %s139, %s141
      %p145 = scmp.eq.s32.totalorder %s21, 0
      %p146 = por %p144, %p145
      %p147 = scmp.ne.s32.totalorder %s139, %s141
      %p148 = scmp.eq.s32.totalorder %s26, 1
      %p149 = por %p147, %p148
      %p150 = scmp.ne.s32.totalorder %s141, %s142
      %p151 = scmp.eq.s32.totalorder %s26, 0
      %p152 = por %p150, %p151
      %p153 = scmp.ne.s32.totalorder %s141, %s142
      %p154 = scmp.eq.s32.totalorder %s27, 1
      %p155 = por %p153, %p154
      %p157 = scmp.ne.s32.totalorder %s142, %s156
      %p158 = scmp.eq.s32.totalorder %s27, 0
      %p159 = por %p157, %p158
      %s161 = sadd.s32 %s160, 1
      %p164 = scmp.eq.s32.totalorder %s21, 1
      %p165 = scmp.ne.s32.totalorder %s160, %s162
      %p166 = scmp.eq.s32.totalorder %s21, 0
      %p167 = por %p165, %p166
      %p168 = scmp.ne.s32.totalorder %s160, %s162
      %p169 = scmp.eq.s32.totalorder %s26, 1
      %p170 = por %p168, %p169
      %p171 = scmp.ne.s32.totalorder %s162, %s163
      %p172 = scmp.eq.s32.totalorder %s26, 0
      %p173 = por %p171, %p172
      %p174 = scmp.ne.s32.totalorder %s162, %s163
      %p175 = scmp.eq.s32.totalorder %s27, 1
      %p176 = por %p174, %p175
      %p178 = scmp.ne.s32.totalorder %s163, %s177
      %p179 = scmp.eq.s32.totalorder %s27, 0
      %p180 = por %p178, %p179
      %s182 = sadd.s32 %s181, 1
      %p185 = scmp.eq.s32.totalorder %s21, 1
      %p186 = scmp.ne.s32.totalorder %s181, %s183
      %p187 = scmp.eq.s32.totalorder %s21, 0
      %p188 = por %p186, %p187
      %p189 = scmp.ne.s32.totalorder %s181, %s183
      %p190 = scmp.eq.s32.totalorder %s26, 1
      %p191 = por %p189, %p190
      %p192 = scmp.ne.s32.totalorder %s183, %s184
      %p193 = scmp.eq.s32.totalorder %s26, 0
      %p194 = por %p192, %p193
      %p195 = scmp.ne.s32.totalorder %s183, %s184
      %p196 = scmp.eq.s32.totalorder %s27, 1
      %p197 = por %p195, %p196
      %p199 = scmp.ne.s32.totalorder %s184, %s198
      %p200 = scmp.eq.s32.totalorder %s27, 0
      %p201 = por %p199, %p200
      %s203 = sadd.s32 %s202, 1
      %p206 = scmp.eq.s32.totalorder %s21, 1
      %p207 = scmp.ne.s32.totalorder %s202, %s204
      %p208 = scmp.eq.s32.totalorder %s21, 0
      %p209 = por %p207, %p208
      %p210 = scmp.ne.s32.totalorder %s202, %s204
      %p211 = scmp.eq.s32.totalorder %s26, 1
      %p212 = por %p210, %p211
      %p213 = scmp.ne.s32.totalorder %s204, %s205
      %p214 = scmp.eq.s32.totalorder %s26, 0
      %p215 = por %p213, %p214
      %p216 = scmp.ne.s32.totalorder %s204, %s205
      %p217 = scmp.eq.s32.totalorder %s27, 1
      %p218 = por %p216, %p217
      %p220 = scmp.ne.s32.totalorder %s205, %s219
      %p221 = scmp.eq.s32.totalorder %s27, 0
      %p222 = por %p220, %p221
      %s224 = sadd.s32 %s223, 1
      %p227 = scmp.eq.s32.totalorder %s21, 1
      %p228 = scmp.ne.s32.totalorder %s223, %s225
      %p229 = scmp.eq.s32.totalorder %s21, 0
      %p230 = por %p228, %p229
      %p231 = scmp.ne.s32.totalorder %s223, %s225
      %p232 = scmp.eq.s32.totalorder %s26, 1
      %p233 = por %p231, %p232
      %p234 = scmp.ne.s32.totalorder %s225, %s226
      %p235 = scmp.eq.s32.totalorder %s26, 0
      %p236 = por %p234, %p235
      %p237 = scmp.ne.s32.totalorder %s225, %s226
      %p238 = scmp.eq.s32.totalorder %s27, 1
      %p239 = por %p237, %p238
      %p241 = scmp.ne.s32.totalorder %s226, %s240
      %p242 = scmp.eq.s32.totalorder %s27, 0
      %p243 = por %p241, %p242
      %s245 = sadd.s32 %s244, 1
      %p248 = scmp.eq.s32.totalorder %s21, 1
      %p249 = scmp.ne.s32.totalorder %s244, %s246
      %p250 = scmp.eq.s32.totalorder %s21, 0
      %p251 = por %p249, %p250
      %p252 = scmp.ne.s32.totalorder %s244, %s246
      %p253 = scmp.eq.s32.totalorder %s26, 1
      %p254 = por %p252, %p253
      %p255 = scmp.ne.s32.totalorder %s246, %s247
      %p256 = scmp.eq.s32.totalorder %s26, 0
      %p257 = por %p255, %p256
      %p258 = scmp.ne.s32.totalorder %s246, %s247
      %p259 = scmp.eq.s32.totalorder %s27, 1
      %p260 = por %p258, %p259
      %p262 = scmp.ne.s32.totalorder %s247, %s261
      %p263 = scmp.eq.s32.totalorder %s27, 0
      %p264 = por %p262, %p263
      %s266 = sadd.s32 %s265, 1
      %p269 = scmp.eq.s32.totalorder %s21, 1
      %p270 = scmp.ne.s32.totalorder %s265, %s267
      %p271 = scmp.eq.s32.totalorder %s21, 0
      %p272 = por %p270, %p271
      %p273 = scmp.ne.s32.totalorder %s265, %s267
      %p274 = scmp.eq.s32.totalorder %s26, 1
      %p275 = por %p273, %p274
      %p276 = scmp.ne.s32.totalorder %s267, %s268
      %p277 = scmp.eq.s32.totalorder %s26, 0
      %p278 = por %p276, %p277
      %p279 = scmp.ne.s32.totalorder %s267, %s268
      %p280 = scmp.eq.s32.totalorder %s27, 1
      %p281 = por %p279, %p280
      %p283 = scmp.ne.s32.totalorder %s268, %s282
      %p284 = scmp.eq.s32.totalorder %s27, 0
      %p285 = por %p283, %p284
      %s286 = ssub.s32 %s21, %s28
      %p287 = scmp.eq.s32.totalorder %s286, 0
      %s289 = sadd.s32 %s288, 1
      %s290 = scalar_select %p287, %s288, %s289
      %p293 = pneg %p287
      %p294 = scmp.eq.s32.totalorder %s21, 1
      %p295 = por %p293, %p294
      %p296 = scmp.ne.s32.totalorder %s288, %s291
      %p297 = scmp.eq.s32.totalorder %s21, 0
      %p298 = por %p296, %p297
      %p299 = scmp.ne.s32.totalorder %s288, %s291
      %p300 = scmp.eq.s32.totalorder %s26, 1
      %p301 = por %p299, %p300
      %p302 = scmp.ne.s32.totalorder %s291, %s292
      %p303 = scmp.eq.s32.totalorder %s26, 0
      %p304 = por %p302, %p303
      %p305 = scmp.ne.s32.totalorder %s291, %s292
      %p306 = scmp.eq.s32.totalorder %s27, 1
      %p307 = por %p305, %p306
      %p309 = scmp.ne.s32.totalorder %s292, %s308
      %p310 = scmp.eq.s32.totalorder %s27, 0
      %p311 = por %p309, %p310
      %p312 = scmp.le.s32.totalorder 1, %s21
      %p313 = scmp.lt.s32.totalorder %s21, 3
      %p314 = pnand %p312, %p313
      %p315 = pneg %p314
      // Predicated region
      $region9: #{basic_block_forward.1} parent=5 // pred_check
        _
      $region10: #{basic_block_forward.1} parent=5 // pred_check_branch
        %317 = sbr.rel (%p314) target = $region12
      $region11: #{basic_block_forward.1} parent=5 // pred_region
        %s318 = ssub.s32 %s21, 1
        // Predicated region
        $region13: #{basic_block_forward.1} parent=11 // pred_check
          %p319 = pneg %p68
        $region14: #{basic_block_forward.1} parent=11 // pred_check_branch
          %321 = sbr.rel (%p319) target = $region16
        $region15: #{basic_block_forward.1} parent=11 // pred_region
          _
        $region16: #{basic_block_forward.1} parent=11 // pred_fallthru
          _
        // Predicated region
        $region17: #{basic_block_forward.1} parent=11 // pred_check
          %p322 = pneg %p89
        $region18: #{basic_block_forward.1} parent=11 // pred_check_branch
          %324 = sbr.rel (%p322) target = $region20
        $region19: #{basic_block_forward.1} parent=11 // pred_region
          _
        $region20: #{basic_block_forward.1} parent=11 // pred_fallthru
          _
        // Predicated region
        $region21: #{basic_block_forward.1} parent=11 // pred_check
          %p325 = pneg %p110
        $region22: #{basic_block_forward.1} parent=11 // pred_check_branch
          %327 = sbr.rel (%p325) target = $region24
        $region23: #{basic_block_forward.1} parent=11 // pred_region
          _
        $region24: #{basic_block_forward.1} parent=11 // pred_fallthru
          _
        // Predicated region
        $region25: #{basic_block_forward.1} parent=11 // pred_check
          %p328 = pneg %p131
        $region26: #{basic_block_forward.1} parent=11 // pred_check_branch
          %330 = sbr.rel (%p328) target = $region28
        $region27: #{basic_block_forward.1} parent=11 // pred_region
          _
        $region28: #{basic_block_forward.1} parent=11 // pred_fallthru
          _
        // Predicated region
        $region29: #{basic_block_forward.1} parent=11 // pred_check
          %p331 = pneg %p152
        $region30: #{basic_block_forward.1} parent=11 // pred_check_branch
          %333 = sbr.rel (%p331) target = $region32
        $region31: #{basic_block_forward.1} parent=11 // pred_region
          _
        $region32: #{basic_block_forward.1} parent=11 // pred_fallthru
          _
        // Predicated region
        $region33: #{basic_block_forward.1} parent=11 // pred_check
          %p334 = pneg %p173
        $region34: #{basic_block_forward.1} parent=11 // pred_check_branch
          %336 = sbr.rel (%p334) target = $region36
        $region35: #{basic_block_forward.1} parent=11 // pred_region
          _
        $region36: #{basic_block_forward.1} parent=11 // pred_fallthru
          _
        // Predicated region
        $region37: #{basic_block_forward.1} parent=11 // pred_check
          %p337 = pneg %p194
        $region38: #{basic_block_forward.1} parent=11 // pred_check_branch
          %339 = sbr.rel (%p337) target = $region40
        $region39: #{basic_block_forward.1} parent=11 // pred_region
          _
        $region40: #{basic_block_forward.1} parent=11 // pred_fallthru
          _
        // Predicated region
        $region41: #{basic_block_forward.1} parent=11 // pred_check
          %p340 = pneg %p215
        $region42: #{basic_block_forward.1} parent=11 // pred_check_branch
          %342 = sbr.rel (%p340) target = $region44
        $region43: #{basic_block_forward.1} parent=11 // pred_region
          _
        $region44: #{basic_block_forward.1} parent=11 // pred_fallthru
          _
        // Predicated region
        $region45: #{basic_block_forward.1} parent=11 // pred_check
          %p343 = pneg %p236
        $region46: #{basic_block_forward.1} parent=11 // pred_check_branch
          %345 = sbr.rel (%p343) target = $region48
        $region47: #{basic_block_forward.1} parent=11 // pred_region
          _
        $region48: #{basic_block_forward.1} parent=11 // pred_fallthru
          _
        // Predicated region
        $region49: #{basic_block_forward.1} parent=11 // pred_check
          %p346 = pneg %p257
        $region50: #{basic_block_forward.1} parent=11 // pred_check_branch
          %348 = sbr.rel (%p346) target = $region52
        $region51: #{basic_block_forward.1} parent=11 // pred_region
          _
        $region52: #{basic_block_forward.1} parent=11 // pred_fallthru
          _
        // Predicated region
        $region53: #{basic_block_forward.1} parent=11 // pred_check
          %p349 = pneg %p278
        $region54: #{basic_block_forward.1} parent=11 // pred_check_branch
          %351 = sbr.rel (%p349) target = $region56
        $region55: #{basic_block_forward.1} parent=11 // pred_region
          _
        $region56: #{basic_block_forward.1} parent=11 // pred_fallthru
          _
      $region12: #{basic_block_forward.1} parent=5 // pred_fallthru
        _
      %p352 = scmp.lt.s32.totalorder %s21, 2
      // Predicated region
      $region57: #{basic_block_forward.1} parent=5 // pred_check
        %p353 = pneg %p352
      $region58: #{basic_block_forward.1} parent=5 // pred_check_branch
        %355 = sbr.rel (%p353) target = $region60
      $region59: #{basic_block_forward.1} parent=5 // pred_region
        // Predicated region
        $region61: #{basic_block_forward.1} parent=59 // pred_check
          %p356 = pneg %p41
        $region62: #{basic_block_forward.1} parent=59 // pred_check_branch
          %358 = sbr.rel (%p356) target = $region64
        $region63: #{basic_block_forward.1} parent=59 // pred_region
          %p359 = scmp.lt.s32.totalorder %s21, 1
          %s360 = scalar_select %p359, %s21, 1
          %s361 = smul.addr %s360, 8
          %s362 = smul.addr %s361, 8
          %s363 = scalar_lea.vmem %s0, %s362
        $region64: #{basic_block_forward.1} parent=59 // pred_fallthru
          _
      $region60: #{basic_block_forward.1} parent=5 // pred_fallthru
        _
      %p364 = scmp.le.s32.totalorder 1, %s21
      %p365 = scmp.lt.s32.totalorder %s21, 3
      %p366 = pnand %p364, %p365
      %p367 = pneg %p366
      // Predicated region
      $region65: #{basic_block_forward.1} parent=5 // pred_check
        _
      $region66: #{basic_block_forward.1} parent=5 // pred_check_branch
        %369 = sbr.rel (%p366) target = $region68
      $region67: #{basic_block_forward.1} parent=5 // pred_region
        %s370 = ssub.s32 %s21, 1
        %p371 = scmp.lt.s32.totalorder %s26, 1
        %s372 = scalar_select %p371, %s26, 1
        %s373 = smul.addr %s372, 8
        %s374 = smul.addr %s373, 8
        %s375 = scalar_lea.vmem %s0, %s374
        %p376 = pneg %p47
        %p377 = pneg %p44
        %p378 = pneg %p68
        %p379 = pneg %p65
        %p380 = pneg %p89
        %p381 = pneg %p86
        %p382 = pneg %p110
        %p383 = pneg %p107
        %p384 = pneg %p131
        %p385 = pneg %p128
        %p386 = pneg %p152
        %p387 = pneg %p149
        %p388 = pneg %p173
        %p389 = pneg %p170
        %p390 = pneg %p194
        %p391 = pneg %p191
        %p392 = pneg %p215
        %p393 = pneg %p212
        %p394 = pneg %p236
        %p395 = pneg %p233
        %p396 = pneg %p257
        %p397 = pneg %p254
        %p398 = pneg %p278
        %p399 = pneg %p275
        %p400 = pneg %p304
        %p401 = pneg %p301
        %s402 = sand.u32 %s291, 1
        %s403 = scalar_lea.sflag [#allocation4], %s402
        %s404 = sand.u32 %s291, 1
        %s405 = smul.addr %s404, 64
        %s406 = scalar_lea.vmem [#allocation3], %s405
        %p407 = scmp.lt.s32.totalorder %s26, 1
        %s408 = scalar_select %p407, %s26, 1
        %s409 = smul.addr %s408, 8
        %s410 = smul.addr %s409, 8
        %s411 = scalar_lea.vmem %s0, %s410
        %vm413 = vcmask 125952
        %414 = vst.msk [vmem:[#allocation2] sm:$0xf] %vm413, 0
        %415 = vst.msk [vmem:[#allocation2 + $0x4] sm:$0xf] %vm413, 0
        %416 = vst.msk [vmem:[#allocation2 + $0x8] sm:$0xf] %vm413, 0
        %s417 = scalar_lea.vmem [#allocation2], 108
        %418 = vst.msk [vmem:[%s417] sm:$0xf] %vm413, 0
        %419 = vst.msk [vmem:[%s417 + $0x4] sm:$0xf] %vm413, 0
        %420 = vst.msk [vmem:[%s417 + $0x8] sm:$0xf] %vm413, 0
        %vm421 = vcmask 125955
        %vm422 = vsmask.f32 7950
        %vm423 = vmand %vm421, %vm422
        %v424 = vld [vmem:[#allocation2] sm:$0x8]
        %v425 = vsel %vm423, 0, %v424
        %426 = vst [vmem:[#allocation2] sm:$0x8] %v425
        %v427 = vld [vmem:[#allocation2 + $0xc] sm:$0x8]
        %v428 = vsel %vm423, 0, %v427
        %429 = vst [vmem:[#allocation2 + $0xc] sm:$0x8] %v428
        %v430 = vld [vmem:[#allocation2 + $0x18] sm:$0x8]
        %v431 = vsel %vm423, 0, %v430
        %432 = vst [vmem:[#allocation2 + $0x18] sm:$0x8] %v431
        %v433 = vld [vmem:[#allocation2 + $0x24] sm:$0x8]
        %v434 = vsel %vm423, 0, %v433
        %435 = vst [vmem:[#allocation2 + $0x24] sm:$0x8] %v434
        %v436 = vld [vmem:[#allocation2 + $0x30] sm:$0x8]
        %v437 = vsel %vm423, 0, %v436
        %438 = vst [vmem:[#allocation2 + $0x30] sm:$0x8] %v437
        %v439 = vld [vmem:[#allocation2 + $0x3c] sm:$0x8]
        %v440 = vsel %vm423, 0, %v439
        %441 = vst [vmem:[#allocation2 + $0x3c] sm:$0x8] %v440
        %v442 = vld [vmem:[#allocation2 + $0x48] sm:$0x8]
        %v443 = vsel %vm423, 0, %v442
        %444 = vst [vmem:[#allocation2 + $0x48] sm:$0x8] %v443
        %v445 = vld [vmem:[#allocation2 + $0x54] sm:$0x8]
        %v446 = vsel %vm423, 0, %v445
        %447 = vst [vmem:[#allocation2 + $0x54] sm:$0x8] %v446
        %v448 = vld [vmem:[#allocation2 + $0x60] sm:$0x8]
        %v449 = vsel %vm423, 0, %v448
        %450 = vst [vmem:[#allocation2 + $0x60] sm:$0x8] %v449
        %v451 = vld [vmem:[#allocation2 + $0x6c] sm:$0x8]
        %v452 = vsel %vm423, 0, %v451
        %453 = vst [vmem:[#allocation2 + $0x6c] sm:$0x8] %v452
        %vm454 = vcmask 122880
        %vm455 = vsmask.f32 256
        %vm456 = vmand %vm454, %vm455
        %v457 = vld [vmem:[#allocation2 + $0x8] sm:$0x1]
        %v458 = vsel %vm456, 0, %v457
        %459 = vst [vmem:[#allocation2 + $0x8] sm:$0x1] %v458
        %v460 = vld [vmem:[#allocation2 + $0x14] sm:$0x1]
        %v461 = vsel %vm456, 0, %v460
        %462 = vst [vmem:[#allocation2 + $0x14] sm:$0x1] %v461
        %v463 = vld [vmem:[#allocation2 + $0x20] sm:$0x1]
        %v464 = vsel %vm456, 0, %v463
        %465 = vst [vmem:[#allocation2 + $0x20] sm:$0x1] %v464
        %v466 = vld [vmem:[#allocation2 + $0x2c] sm:$0x1]
        %v467 = vsel %vm456, 0, %v466
        %468 = vst [vmem:[#allocation2 + $0x2c] sm:$0x1] %v467
        %v469 = vld [vmem:[#allocation2 + $0x38] sm:$0x1]
        %v470 = vsel %vm456, 0, %v469
        %471 = vst [vmem:[#allocation2 + $0x38] sm:$0x1] %v470
        %v472 = vld [vmem:[#allocation2 + $0x44] sm:$0x1]
        %v473 = vsel %vm456, 0, %v472
        %474 = vst [vmem:[#allocation2 + $0x44] sm:$0x1] %v473
        %v475 = vld [vmem:[#allocation2 + $0x50] sm:$0x1]
        %v476 = vsel %vm456, 0, %v475
        %477 = vst [vmem:[#allocation2 + $0x50] sm:$0x1] %v476
        %v478 = vld [vmem:[#allocation2 + $0x5c] sm:$0x1]
        %v479 = vsel %vm456, 0, %v478
        %480 = vst [vmem:[#allocation2 + $0x5c] sm:$0x1] %v479
        %v481 = vld [vmem:[#allocation2 + $0x68] sm:$0x1]
        %v482 = vsel %vm456, 0, %v481
        %483 = vst [vmem:[#allocation2 + $0x68] sm:$0x1] %v482
        %v484 = vld [vmem:[#allocation2 + $0x74] sm:$0x1]
        %v485 = vsel %vm456, 0, %v484
        %486 = vst [vmem:[#allocation2 + $0x74] sm:$0x1] %v485
        %v487 = vld [vmem:[%s411] sm:$0xff]
        %v488 = vld [vmem:[%s411 + $0x8] sm:$0xff]
        %v489 = vld [vmem:[%s411 + $0x10] sm:$0xff]
        %v490 = vld [vmem:[%s411 + $0x18] sm:$0xff]
        %v491 = vld [vmem:[%s411 + $0x20] sm:$0xff]
        %v492 = vld [vmem:[%s411 + $0x28] sm:$0xff]
        %v493 = vld [vmem:[%s411 + $0x30] sm:$0xff]
        %v494 = vld [vmem:[%s411 + $0x38] sm:$0xff]
        %v495 = vld [vmem:[%s7] sm:$0xff]
        %v496 = vld [vmem:[%s7 + $0x8] sm:$0xff]
        %v497 = vld [vmem:[%s3] sm:$0x1]
        %v498 = vld [vmem:[%s4] sm:$0x1]
        %vm499 = vcmask 130048
        %v500 = vsel %vm499, %v487, 0.0
        %v501 = vsel %vm499, %v488, 0.0
        %v502 = vadd.f32 %v500, %v501
        %v503 = vsel %vm499, %v489, 0.0
        %v504 = vadd.f32 %v502, %v503
        %v505 = vsel %vm499, %v490, 0.0
        %v506 = vadd.f32 %v504, %v505
        %v507 = vsel %vm499, %v491, 0.0
        %v508 = vadd.f32 %v506, %v507
        %v509 = vsel %vm499, %v492, 0.0
        %v510 = vadd.f32 %v508, %v509
        %v511 = vsel %vm499, %v493, 0.0
        %v512 = vadd.f32 %v510, %v511
        %v513 = vsel %vm499, %v494, 0.0
        %v514 = vadd.f32 %v512, %v513
        %v515 = vrot.slane %v514, 4
        %v516 = vadd.f32 %v514, %v515
        %v517 = vrot.slane %v516, 2
        %v518 = vadd.f32 %v516, %v517
        %v519 = vrot.slane %v518, 1
        %v520 = vadd.f32 %v518, %v519
        %v522 = vsel %vm499, %v520, 0
        %524 = vmatprep.subr.mxu0 0.0
        %525 = vmatpush1.msra.mxu0 0.0
        %526 = vmatprep.subr.mxu0 0.0
        %527 = vmatpush1.msra.mxu0 0.0
        %528 = vmatprep.subr.mxu0 0.0
        %529 = vmatpush1.msra.mxu0 0.0
        %530 = vmatprep.subr.mxu0 0.0
        %531 = vmatpush1.msra.mxu0 0.0
        %532 = vmatprep.subr.mxu0 0.0
        %533 = vmatpush1.msra.mxu0 0.0
        %534 = vmatprep.subr.mxu0 0.0
        %535 = vmatpush1.msra.mxu0 0.0
        %536 = vmatprep.subr.mxu0 0.0
        %537 = vmatpush1.msra.mxu0 0.0
        %538 = vmatprep.subr.mxu0 0.0
        %539 = vmatpush1.msra.mxu0 0.0
        %540 = vmatprep.subr.mxu0 0.0
        %541 = vmatpush1.msra.mxu0 0.0
        %542 = vmatprep.subr.mxu0 0.0
        %543 = vmatpush1.msra.mxu0 0.0
        %544 = vmatprep.subr.mxu0 0.0
        %545 = vmatpush1.msra.mxu0 0.0
        %546 = vmatprep.subr.mxu0 0.0
        %547 = vmatpush1.msra.mxu0 0.0
        %548 = vmatprep.subr.mxu0 0.0
        %549 = vmatpush1.msra.mxu0 0.0
        %550 = vmatprep.subr.mxu0 0.0
        %551 = vmatpush1.msra.mxu0 0.0
        %552 = vmatprep.subr.mxu0 0.0
        %553 = vmatpush1.msra.mxu0 %v496
        %554 = vmatprep.subr.mxu0 0.0
        %555 = vmatpush1.msra.mxu0 %v495
        %556 = vmatprep.subr.mxu0 0.0
        %557 = vmatpush2.msra.mxu0 0.0
        %558 = vmatprep.subr.mxu0 0.0
        %559 = vmatpush2.msra.mxu0 0.0
        %560 = vmatprep.subr.mxu0 0.0
        %561 = vmatpush2.msra.mxu0 0.0
        %562 = vmatprep.subr.mxu0 0.0
        %563 = vmatpush2.msra.mxu0 0.0
        %564 = vmatprep.subr.mxu0 0.0
        %565 = vmatpush2.msra.mxu0 0.0
        %566 = vmatprep.subr.mxu0 0.0
        %567 = vmatpush2.msra.mxu0 0.0
        %568 = vmatprep.subr.mxu0 0.0
        %569 = vmatpush2.msra.mxu0 0.0
        %570 = vmatprep.subr.mxu0 0.0
        %571 = vmatpush2.msra.mxu0 0.0
        %572 = vmatprep.subr.mxu0 0.0
        %573 = vmatpush2.msra.mxu0 0.0
        %574 = vmatprep.subr.mxu0 0.0
        %575 = vmatpush2.msra.mxu0 0.0
        %576 = vmatprep.subr.mxu0 0.0
        %577 = vmatpush2.msra.mxu0 0.0
        %578 = vmatprep.subr.mxu0 0.0
        %579 = vmatpush2.msra.mxu0 0.0
        %580 = vmatprep.subr.mxu0 0.0
        %581 = vmatpush2.msra.mxu0 0.0
        %582 = vmatprep.subr.mxu0 0.0
        %583 = vmatpush2.msra.mxu0 0.0
        %584 = vmatprep.subr.mxu0 0.0
        %585 = vmatpush2.msra.mxu0 0.0
        %586 = vmatprep.subr.mxu0 0.0
        %587 = vmatpush2.msra.mxu0 0.0
        %588 = vmatprep.mubr.f32.mxu0 0.0
        %589 = vmatmul.mubr.f32.gmra.mxu0 %v522
        %v590 = vpop.f32.mrf.mxu0
        %v591 = vadd.f32 0.0, %v590
        %v592 = vpop.f32.mrf.mxu0
        %593 = vdwg.mxu0
        %v594 = vlaneseq
        %v595 = vshrl.u32 %v594, 7
        %v596 = vsub.s32 0, %v595
        %v597 = vrot.slane %v591, %v596
        %v598 = vsub.f32 %v487, %v597
        %v599 = vsub.f32 %v488, %v597
        %v600 = vsub.f32 %v489, %v597
        %v601 = vsub.f32 %v490, %v597
        %v602 = vsub.f32 %v491, %v597
        %v603 = vsub.f32 %v492, %v597
        %v604 = vsub.f32 %v493, %v597
        %v605 = vsub.f32 %v494, %v597
        %v606 = vmul.f32 %v598, %v598
        %v607 = vmul.f32 %v599, %v599
        %v608 = vmul.f32 %v600, %v600
        %v609 = vmul.f32 %v601, %v601
        %v610 = vmul.f32 %v602, %v602
        %v611 = vmul.f32 %v603, %v603
        %v612 = vmul.f32 %v604, %v604
        %v613 = vmul.f32 %v605, %v605
        %v614 = vsel %vm499, %v606, 0.0
        %v615 = vsel %vm499, %v607, 0.0
        %v616 = vadd.f32 %v614, %v615
        %v617 = vsel %vm499, %v608, 0.0
        %v618 = vadd.f32 %v616, %v617
        %v619 = vsel %vm499, %v609, 0.0
        %v620 = vadd.f32 %v618, %v619
        %v621 = vsel %vm499, %v610, 0.0
        %v622 = vadd.f32 %v620, %v621
        %v623 = vsel %vm499, %v611, 0.0
        %v624 = vadd.f32 %v622, %v623
        %v625 = vsel %vm499, %v612, 0.0
        %v626 = vadd.f32 %v624, %v625
        %v627 = vsel %vm499, %v613, 0.0
        %v628 = vadd.f32 %v626, %v627
        %v629 = vrot.slane %v628, 4
        %v630 = vadd.f32 %v628, %v629
        %v631 = vrot.slane %v630, 2
        %v632 = vadd.f32 %v630, %v631
        %v633 = vrot.slane %v632, 1
        %v634 = vadd.f32 %v632, %v633
        %v636 = vsel %vm499, %v634, 0
        %638 = vmatprep.subr.mxu0 0.0
        %639 = vmatpush1.msra.mxu0 0.0
        %640 = vmatprep.subr.mxu0 0.0
        %641 = vmatpush1.msra.mxu0 0.0
        %642 = vmatprep.subr.mxu0 0.0
        %643 = vmatpush1.msra.mxu0 0.0
        %644 = vmatprep.subr.mxu0 0.0
        %645 = vmatpush1.msra.mxu0 0.0
        %646 = vmatprep.subr.mxu0 0.0
        %647 = vmatpush1.msra.mxu0 0.0
        %648 = vmatprep.subr.mxu0 0.0
        %649 = vmatpush1.msra.mxu0 0.0
        %650 = vmatprep.subr.mxu0 0.0
        %651 = vmatpush1.msra.mxu0 0.0
        %652 = vmatprep.subr.mxu0 0.0
        %653 = vmatpush1.msra.mxu0 0.0
        %654 = vmatprep.subr.mxu0 0.0
        %655 = vmatpush1.msra.mxu0 0.0
        %656 = vmatprep.subr.mxu0 0.0
        %657 = vmatpush1.msra.mxu0 0.0
        %658 = vmatprep.subr.mxu0 0.0
        %659 = vmatpush1.msra.mxu0 0.0
        %660 = vmatprep.subr.mxu0 0.0
        %661 = vmatpush1.msra.mxu0 0.0
        %662 = vmatprep.subr.mxu0 0.0
        %663 = vmatpush1.msra.mxu0 0.0
        %664 = vmatprep.subr.mxu0 0.0
        %665 = vmatpush1.msra.mxu0 0.0
        %666 = vmatprep.subr.mxu0 0.0
        %667 = vmatpush1.msra.mxu0 %v496
        %668 = vmatprep.subr.mxu0 0.0
        %669 = vmatpush1.msra.mxu0 %v495
        %670 = vmatprep.subr.mxu0 0.0
        %671 = vmatpush2.msra.mxu0 0.0
        %672 = vmatprep.subr.mxu0 0.0
        %673 = vmatpush2.msra.mxu0 0.0
        %674 = vmatprep.subr.mxu0 0.0
        %675 = vmatpush2.msra.mxu0 0.0
        %676 = vmatprep.subr.mxu0 0.0
        %677 = vmatpush2.msra.mxu0 0.0
        %678 = vmatprep.subr.mxu0 0.0
        %679 = vmatpush2.msra.mxu0 0.0
        %680 = vmatprep.subr.mxu0 0.0
        %681 = vmatpush2.msra.mxu0 0.0
        %682 = vmatprep.subr.mxu0 0.0
        %683 = vmatpush2.msra.mxu0 0.0
        %684 = vmatprep.subr.mxu0 0.0
        %685 = vmatpush2.msra.mxu0 0.0
        %686 = vmatprep.subr.mxu0 0.0
        %687 = vmatpush2.msra.mxu0 0.0
        %688 = vmatprep.subr.mxu0 0.0
        %689 = vmatpush2.msra.mxu0 0.0
        %690 = vmatprep.subr.mxu0 0.0
        %691 = vmatpush2.msra.mxu0 0.0
        %692 = vmatprep.subr.mxu0 0.0
        %693 = vmatpush2.msra.mxu0 0.0
        %694 = vmatprep.subr.mxu0 0.0
        %695 = vmatpush2.msra.mxu0 0.0
        %696 = vmatprep.subr.mxu0 0.0
        %697 = vmatpush2.msra.mxu0 0.0
        %698 = vmatprep.subr.mxu0 0.0
        %699 = vmatpush2.msra.mxu0 0.0
        %700 = vmatprep.subr.mxu0 0.0
        %701 = vmatpush2.msra.mxu0 0.0
        %702 = vmatprep.mubr.f32.mxu0 0.0
        %703 = vmatmul.mubr.f32.gmra.mxu0 %v636
        %v704 = vpop.f32.mrf.mxu0
        %v705 = vadd.f32 0.0001, %v704
        %v706 = vpop.f32.mrf.mxu0
        %707 = vdwg.mxu0
        %v708 = vrsqrt.pop %v705
        %v709 = vmul.f32 %v708, %v497
        %v710 = vlaneseq
        %v711 = vshrl.u32 %v710, 7
        %v712 = vsub.s32 0, %v711
        %v713 = vrot.slane %v709, %v712
        %v714 = vmul.f32 %v598, %v713
        %v715 = vmul.f32 %v599, %v713
        %v716 = vmul.f32 %v600, %v713
        %v717 = vmul.f32 %v601, %v713
        %v718 = vmul.f32 %v602, %v713
        %v719 = vmul.f32 %v603, %v713
        %v720 = vmul.f32 %v604, %v713
        %v721 = vmul.f32 %v605, %v713
        %v723 = vlaneseq
        %v724 = vshrl.u32 %v723, 7
        %v725 = vsub.s32 0, %v724
        %v726 = vrot.slane %v498, %v725
        %v728 = vadd.f32 %v714, %v726
        %v729 = vadd.f32 %v715, %v726
        %v730 = vadd.f32 %v716, %v726
        %v731 = vadd.f32 %v717, %v726
        %v732 = vadd.f32 %v718, %v726
        %v733 = vadd.f32 %v719, %v726
        %v734 = vadd.f32 %v720, %v726
        %v735 = vadd.f32 %v721, %v726
        %v736 = vmax.f32 %v728, 0.0
        %v737 = vmax.f32 %v729, 0.0
        %v738 = vmax.f32 %v730, 0.0
        %v739 = vmax.f32 %v731, 0.0
        %v740 = vmax.f32 %v732, 0.0
        %v741 = vmax.f32 %v733, 0.0
        %v742 = vmax.f32 %v734, 0.0
        %v743 = vmax.f32 %v735, 0.0
        %v744 = vpack.c.bf16 %v736, %v736
        %v745 = vpack.c.bf16 %v737, %v737
        %v746 = vpack.c.bf16 %v738, %v738
        %v747 = vpack.c.bf16 %v739, %v739
        %v748 = vpack.c.bf16 %v740, %v740
        %v749 = vpack.c.bf16 %v741, %v741
        %v750 = vpack.c.bf16 %v742, %v742
        %v751 = vpack.c.bf16 %v743, %v743
        %s752 = scalar_lea.vmem [#allocation2], 12
        %753 = vst.msk [vmem:[%s752 + $0x4] sm:$0xf] %vm413, %v744
        %754 = vst.msk [vmem:[%s752 + $0x10] sm:$0xf] %vm413, %v745
        %755 = vst.msk [vmem:[%s752 + $0x1c] sm:$0xf] %vm413, %v746
        %756 = vst.msk [vmem:[%s752 + $0x28] sm:$0xf] %vm413, %v747
        %757 = vst.msk [vmem:[%s752 + $0x34] sm:$0xf] %vm413, %v748
        %758 = vst.msk [vmem:[%s752 + $0x40] sm:$0xf] %vm413, %v749
        %759 = vst.msk [vmem:[%s752 + $0x4c] sm:$0xf] %vm413, %v750
        %760 = vst.msk [vmem:[%s752 + $0x58] sm:$0xf] %vm413, %v751
        %v761 = vld [vmem:[%s8] sm:$0x7]
        %v762 = vld [vmem:[%s8 + $0x4] sm:$0x7]
        %v763 = vld [vmem:[%s8 + $0x8] sm:$0x7]
        %v764 = vld [vmem:[%s8 + $0xc] sm:$0x7]
        %v765 = vld [vmem:[%s8 + $0x10] sm:$0x7]
        %v766 = vld [vmem:[%s8 + $0x14] sm:$0x7]
        %v767 = vld [vmem:[%s8 + $0x18] sm:$0x7]
        %v768 = vld [vmem:[%s8 + $0x1c] sm:$0x7]
        %v769 = vld [vmem:[%s9] sm:$0xff]
        %v770 = vld [vmem:[%s9 + $0x8] sm:$0xff]
        %v771 = vld [vmem:[%s9 + $0x10] sm:$0xff]
        %v772 = vlaneseq
        %v773 = vshrl.u32 %v772, 7
        %vm774 = vcmp.eq.s32.totalorder %v773, 0
        %vm775 = vcmp.eq.s32.totalorder %v773, 7
        %v776 = vsel %vm775, 1, 0
        %vm777 = vcmp.eq.s32.totalorder %v776, 1
        %v778 = vlaneseq
        %v779 = vshrl.u32 %v778, 7
        %v780 = vsub.s32 2, %v779
        %v781 = vrot.slane %v761, %v780
        %v782 = vlaneseq
        %v783 = vshrl.u32 %v782, 7
        %v784 = vsub.s32 2, %v783
        %v785 = vrot.slane %v762, %v784
        %v786 = vlaneseq
        %v787 = vshrl.u32 %v786, 7
        %v788 = vsub.s32 2, %v787
        %v789 = vrot.slane %v763, %v788
        %v790 = vlaneseq
        %v791 = vshrl.u32 %v790, 7
        %v792 = vsub.s32 2, %v791
        %v793 = vrot.slane %v764, %v792
        %v794 = vlaneseq
        %v795 = vshrl.u32 %v794, 7
        %v796 = vsub.s32 2, %v795
        %v797 = vrot.slane %v765, %v796
        %v798 = vlaneseq
        %v799 = vshrl.u32 %v798, 7
        %v800 = vsub.s32 2, %v799
        %v801 = vrot.slane %v766, %v800
        %v802 = vlaneseq
        %v803 = vshrl.u32 %v802, 7
        %v804 = vsub.s32 2, %v803
        %v805 = vrot.slane %v767, %v804
        %v806 = vlaneseq
        %v807 = vshrl.u32 %v806, 7
        %v808 = vsub.s32 2, %v807
        %v809 = vrot.slane %v768, %v808
        %v810 = vlaneseq
        %v811 = vshrl.u32 %v810, 7
        %v812 = vsub.s32 1, %v811
        %v813 = vrot.slane %v761, %v812
        %v814 = vlaneseq
        %v815 = vshrl.u32 %v814, 7
        %v816 = vsub.s32 1, %v815
        %v817 = vrot.slane %v762, %v816
        %v818 = vlaneseq
        %v819 = vshrl.u32 %v818, 7
        %v820 = vsub.s32 1, %v819
        %v821 = vrot.slane %v763, %v820
        %v822 = vlaneseq
        %v823 = vshrl.u32 %v822, 7
        %v824 = vsub.s32 1, %v823
        %v825 = vrot.slane %v764, %v824
        %v826 = vlaneseq
        %v827 = vshrl.u32 %v826, 7
        %v828 = vsub.s32 1, %v827
        %v829 = vrot.slane %v765, %v828
        %v830 = vlaneseq
        %v831 = vshrl.u32 %v830, 7
        %v832 = vsub.s32 1, %v831
        %v833 = vrot.slane %v766, %v832
        %v834 = vlaneseq
        %v835 = vshrl.u32 %v834, 7
        %v836 = vsub.s32 1, %v835
        %v837 = vrot.slane %v767, %v836
        %v838 = vlaneseq
        %v839 = vshrl.u32 %v838, 7
        %v840 = vsub.s32 1, %v839
        %v841 = vrot.slane %v768, %v840
        %v842 = vsel %vm777, %v781, %v813
        %v843 = vsel %vm777, %v785, %v817
        %v844 = vsel %vm777, %v789, %v821
        %v845 = vsel %vm777, %v793, %v825
        %v846 = vsel %vm777, %v797, %v829
        %v847 = vsel %vm777, %v801, %v833
        %v848 = vsel %vm777, %v805, %v837
        %v849 = vsel %vm777, %v809, %v841
        %v850 = vsel %vm774, 1, 0
        %vm851 = vcmp.eq.s32.totalorder %v850, 1
        %v852 = vlaneseq
        %v853 = vshrl.u32 %v852, 7
        %v854 = vsub.s32 0, %v853
        %v855 = vrot.slane %v761, %v854
        %v856 = vlaneseq
        %v857 = vshrl.u32 %v856, 7
        %v858 = vsub.s32 0, %v857
        %v859 = vrot.slane %v762, %v858
        %v860 = vlaneseq
        %v861 = vshrl.u32 %v860, 7
        %v862 = vsub.s32 0, %v861
        %v863 = vrot.slane %v763, %v862
        %v864 = vlaneseq
        %v865 = vshrl.u32 %v864, 7
        %v866 = vsub.s32 0, %v865
        %v867 = vrot.slane %v764, %v866
        %v868 = vlaneseq
        %v869 = vshrl.u32 %v868, 7
        %v870 = vsub.s32 0, %v869
        %v871 = vrot.slane %v765, %v870
        %v872 = vlaneseq
        %v873 = vshrl.u32 %v872, 7
        %v874 = vsub.s32 0, %v873
        %v875 = vrot.slane %v766, %v874
        %v876 = vlaneseq
        %v877 = vshrl.u32 %v876, 7
        %v878 = vsub.s32 0, %v877
        %v879 = vrot.slane %v767, %v878
        %v880 = vlaneseq
        %v881 = vshrl.u32 %v880, 7
        %v882 = vsub.s32 0, %v881
        %v883 = vrot.slane %v768, %v882
        %v884 = vsel %vm851, %v855, %v842
        %v885 = vsel %vm851, %v859, %v843
        %v886 = vsel %vm851, %v863, %v844
        %v887 = vsel %vm851, %v867, %v845
        %v888 = vsel %vm851, %v871, %v846
        %v889 = vsel %vm851, %v875, %v847
        %v890 = vsel %vm851, %v879, %v848
        %v891 = vsel %vm851, %v883, %v849
        %v892 = vsel 0, %v771, %v770
        %v893 = vsel 1, %v771, %v770
        %v894 = vsel 1, %v769, %v892
        %v895 = vsel 0, %v769, %v892
        %v896 = vsel 0, %v769, %v893
        %v897 = vadd.f32 %v884, %v894
        %v898 = vadd.f32 %v885, %v895
        %v899 = vadd.f32 %v886, %v895
        %v900 = vadd.f32 %v887, %v895
        %v901 = vadd.f32 %v888, %v895
        %v902 = vadd.f32 %v889, %v895
        %v903 = vadd.f32 %v890, %v895
        %v904 = vadd.f32 %v891, %v896
        %v905 = vld [vmem:[#allocation2] sm:$0x8]
        %v906 = vld [vmem:[#allocation2 + $0x4] sm:$0xf]
        %v907 = vld [vmem:[#allocation2 + $0xc] sm:$0x8]
        %v908 = vld [vmem:[#allocation2 + $0x10] sm:$0xf]
        %v909 = vld [vmem:[#allocation2 + $0x18] sm:$0x8]
        %v910 = vld [vmem:[#allocation2 + $0x1c] sm:$0xf]
        %v911 = vld [vmem:[#allocation2 + $0x24] sm:$0x8]
        %v912 = vld [vmem:[#allocation2 + $0x28] sm:$0xf]
        %v913 = vld [vmem:[#allocation2 + $0x30] sm:$0x8]
        %v914 = vld [vmem:[#allocation2 + $0x34] sm:$0xf]
        %v915 = vld [vmem:[#allocation2 + $0x3c] sm:$0x8]
        %v916 = vld [vmem:[#allocation2 + $0x40] sm:$0xf]
        %v917 = vld [vmem:[#allocation2 + $0x48] sm:$0x8]
        %v918 = vld [vmem:[#allocation2 + $0x4c] sm:$0xf]
        %v919 = vld [vmem:[#allocation2 + $0x54] sm:$0x8]
        %v920 = vld [vmem:[#allocation2 + $0x58] sm:$0xf]
        %vm921 = vsmask.f32 4368
        %vm922 = vmor %vm455, %vm921
        %v924 = vshrl.u32 %v905, 16
        %v926 = vrot.slane %v924, 7
        %v927 = vrot.slane %v926, 4
        %v929 = vshrl.u32 %v906, 16
        %v931 = vrot.slane %v929, 7
        %v932 = vshll.u32 %v906, 16
        %v934 = vor.u32 %v931, %v932
        %v935 = vsel %vm922, %v927, %v934
        %v937 = vshrl.u32 %v907, 16
        %v939 = vrot.slane %v937, 7
        %v940 = vrot.slane %v939, 4
        %v942 = vshrl.u32 %v908, 16
        %v944 = vrot.slane %v942, 7
        %v945 = vshll.u32 %v908, 16
        %v947 = vor.u32 %v944, %v945
        %v948 = vsel %vm922, %v940, %v947
        %v950 = vshrl.u32 %v909, 16
        %v952 = vrot.slane %v950, 7
        %v953 = vrot.slane %v952, 4
        %v955 = vshrl.u32 %v910, 16
        %v957 = vrot.slane %v955, 7
        %v958 = vshll.u32 %v910, 16
        %v960 = vor.u32 %v957, %v958
        %v961 = vsel %vm922, %v953, %v960
        %v963 = vshrl.u32 %v911, 16
        %v965 = vrot.slane %v963, 7
        %v966 = vrot.slane %v965, 4
        %v968 = vshrl.u32 %v912, 16
        %v970 = vrot.slane %v968, 7
        %v971 = vshll.u32 %v912, 16
        %v973 = vor.u32 %v970, %v971
        %v974 = vsel %vm922, %v966, %v973
        %v976 = vshrl.u32 %v913, 16
        %v978 = vrot.slane %v976, 7
        %v979 = vrot.slane %v978, 4
        %v981 = vshrl.u32 %v914, 16
        %v983 = vrot.slane %v981, 7
        %v984 = vshll.u32 %v914, 16
        %v986 = vor.u32 %v983, %v984
        %v987 = vsel %vm922, %v979, %v986
        %v989 = vshrl.u32 %v915, 16
        %v991 = vrot.slane %v989, 7
        %v992 = vrot.slane %v991, 4
        %v994 = vshrl.u32 %v916, 16
        %v996 = vrot.slane %v994, 7
        %v997 = vshll.u32 %v916, 16
        %v999 = vor.u32 %v996, %v997
        %v1000 = vsel %vm922, %v992, %v999
        %v1002 = vshrl.u32 %v917, 16
        %v1004 = vrot.slane %v1002, 7
        %v1005 = vrot.slane %v1004, 4
        %v1007 = vshrl.u32 %v918, 16
        %v1009 = vrot.slane %v1007, 7
        %v1010 = vshll.u32 %v918, 16
        %v1012 = vor.u32 %v1009, %v1010
        %v1013 = vsel %vm922, %v1005, %v1012
        %v1015 = vshrl.u32 %v919, 16
        %v1017 = vrot.slane %v1015, 7
        %v1018 = vrot.slane %v1017, 4
        %v1020 = vshrl.u32 %v920, 16
        %v1022 = vrot.slane %v1020, 7
        %v1023 = vshll.u32 %v920, 16
        %v1025 = vor.u32 %v1022, %v1023
        %v1026 = vsel %vm922, %v1018, %v1025
        %v1027 = vld [vmem:[%s1] sm:$0xf]
        %v1028 = vld [vmem:[%s1 + $0x4] sm:$0xf]
        %v1029 = vunpack.c.l.b16 %v935
        %v1030 = vunpack.c.l.b16 %v948
        %v1031 = vunpack.c.l.b16 %v961
        %v1032 = vunpack.c.l.b16 %v974
        %v1033 = vunpack.c.l.b16 %v987
        %v1034 = vunpack.c.l.b16 %v1000
        %v1035 = vunpack.c.l.b16 %v1013
        %v1036 = vunpack.c.l.b16 %v1026
        %v1037 = vpack.c.b16 %v1030, %v1029
        %v1038 = vpack.c.b16 %v1032, %v1031
        %v1039 = vpack.c.b16 %v1034, %v1033
        %v1040 = vpack.c.b16 %v1036, %v1035
        %v1043 = vunpack.c.l.b16 %v1027
        %v1044 = vunpack.c.l.b16 %v1028
        %v1045 = vpack.c.b16 %v1044, %v1043
        %v1048 = vsel %vm499, %v1037, 0
        %v1051 = vsel %vm499, %v1038, 0
        %v1054 = vsel %vm499, %v1039, 0
        %v1057 = vsel %vm499, %v1040, 0
        %1059 = vmatprep.subr.bf16.mxu0 0
        %1060 = vmatpush1.bf16.msra.mxu0 0
        %1061 = vmatprep.subr.bf16.mxu0 0
        %1062 = vmatpush1.bf16.msra.mxu0 0
        %1063 = vmatprep.subr.bf16.mxu0 0
        %1064 = vmatpush1.bf16.msra.mxu0 0
        %1065 = vmatprep.subr.bf16.mxu0 0
        %1066 = vmatpush1.bf16.msra.mxu0 0
        %1067 = vmatprep.subr.bf16.mxu0 0
        %1068 = vmatpush1.bf16.msra.mxu0 0
        %1069 = vmatprep.subr.bf16.mxu0 0
        %1070 = vmatpush1.bf16.msra.mxu0 0
        %1071 = vmatprep.subr.bf16.mxu0 0
        %1072 = vmatpush1.bf16.msra.mxu0 0
        %1073 = vmatprep.subr.bf16.mxu0 0
        %1074 = vmatpush1.bf16.msra.mxu0 %v1045
        %1075 = vmatprep.subr.bf16.mxu0 0
        %1076 = vmatpush2.bf16.msra.mxu0 0
        %1077 = vmatprep.subr.bf16.mxu0 0
        %1078 = vmatpush2.bf16.msra.mxu0 0
        %1079 = vmatprep.subr.bf16.mxu0 0
        %1080 = vmatpush2.bf16.msra.mxu0 0
        %1081 = vmatprep.subr.bf16.mxu0 0
        %1082 = vmatpush2.bf16.msra.mxu0 0
        %1083 = vmatprep.subr.bf16.mxu0 0
        %1084 = vmatpush2.bf16.msra.mxu0 0
        %1085 = vmatprep.subr.bf16.mxu0 0
        %1086 = vmatpush2.bf16.msra.mxu0 0
        %1087 = vmatprep.subr.bf16.mxu0 0
        %1088 = vmatpush2.bf16.msra.mxu0 0
        %1089 = vmatprep.subr.bf16.mxu0 0
        %1090 = vmatpush2.bf16.msra.mxu0 0
        %1091 = vmatprep.mubr.bf16.mxu0 0
        %1092 = vmatmul.mubr.bf16.gmra.mxu0 %v1048
        %v1093 = vpop.f32.mrf.mxu0
        %v1094 = vadd.f32 0.0, %v1093
        %v1095 = vpop.f32.mrf.mxu0
        %v1096 = vpop.f32.mrf.mxu0
        %v1097 = vadd.f32 0.0, %v1096
        %v1098 = vpop.f32.mrf.mxu0
        %1099 = vmatprep.mubr.bf16.mxu0 0
        %1100 = vmatmul.mubr.bf16.gmra.mxu0 %v1051
        %v1101 = vpop.f32.mrf.mxu0
        %v1102 = vadd.f32 0.0, %v1101
        %v1103 = vpop.f32.mrf.mxu0
        %v1104 = vpop.f32.mrf.mxu0
        %v1105 = vadd.f32 0.0, %v1104
        %v1106 = vpop.f32.mrf.mxu0
        %1107 = vmatprep.mubr.bf16.mxu0 0
        %1108 = vmatmul.mubr.bf16.gmra.mxu0 %v1054
        %v1109 = vpop.f32.mrf.mxu0
        %v1110 = vadd.f32 0.0, %v1109
        %v1111 = vpop.f32.mrf.mxu0
        %v1112 = vpop.f32.mrf.mxu0
        %v1113 = vadd.f32 0.0, %v1112
        %v1114 = vpop.f32.mrf.mxu0
        %1115 = vmatprep.mubr.bf16.mxu0 0
        %1116 = vmatmul.mubr.bf16.gmra.mxu0 %v1057
        %v1117 = vpop.f32.mrf.mxu0
        %v1118 = vadd.f32 0.0, %v1117
        %v1119 = vpop.f32.mrf.mxu0
        %v1120 = vpop.f32.mrf.mxu0
        %v1121 = vadd.f32 0.0, %v1120
        %v1122 = vpop.f32.mrf.mxu0
        %1123 = vdwg.mxu0
        %v1124 = vadd.f32 %v897, %v1094
        %v1125 = vadd.f32 %v898, %v1097
        %v1126 = vadd.f32 %v899, %v1102
        %v1127 = vadd.f32 %v900, %v1105
        %v1128 = vadd.f32 %v901, %v1110
        %v1129 = vadd.f32 %v902, %v1113
        %v1130 = vadd.f32 %v903, %v1118
        %v1131 = vadd.f32 %v904, %v1121
        %s1132 = scalar_lea.vmem %s1, 8
        %v1133 = vld [vmem:[%s1132] sm:$0xf]
        %v1134 = vld [vmem:[%s1132 + $0x4] sm:$0xf]
        %v1143 = vunpack.c.l.b16 %v906
        %v1144 = vunpack.c.l.b16 %v908
        %v1145 = vunpack.c.l.b16 %v910
        %v1146 = vunpack.c.l.b16 %v912
        %v1147 = vunpack.c.l.b16 %v914
        %v1148 = vunpack.c.l.b16 %v916
        %v1149 = vunpack.c.l.b16 %v918
        %v1150 = vunpack.c.l.b16 %v920
        %v1151 = vpack.c.b16 %v1144, %v1143
        %v1152 = vpack.c.b16 %v1146, %v1145
        %v1153 = vpack.c.b16 %v1148, %v1147
        %v1154 = vpack.c.b16 %v1150, %v1149
        %v1157 = vunpack.c.l.b16 %v1133
        %v1158 = vunpack.c.l.b16 %v1134
        %v1159 = vpack.c.b16 %v1158, %v1157
        %v1162 = vsel %vm499, %v1151, 0
        %v1165 = vsel %vm499, %v1152, 0
        %v1168 = vsel %vm499, %v1153, 0
        %v1171 = vsel %vm499, %v1154, 0
        %1173 = vmatprep.subr.bf16.mxu0 0
        %1174 = vmatpush1.bf16.msra.mxu0 0
        %1175 = vmatprep.subr.bf16.mxu0 0
        %1176 = vmatpush1.bf16.msra.mxu0 0
        %1177 = vmatprep.subr.bf16.mxu0 0
        %1178 = vmatpush1.bf16.msra.mxu0 0
        %1179 = vmatprep.subr.bf16.mxu0 0
        %1180 = vmatpush1.bf16.msra.mxu0 0
        %1181 = vmatprep.subr.bf16.mxu0 0
        %1182 = vmatpush1.bf16.msra.mxu0 0
        %1183 = vmatprep.subr.bf16.mxu0 0
        %1184 = vmatpush1.bf16.msra.mxu0 0
        %1185 = vmatprep.subr.bf16.mxu0 0
        %1186 = vmatpush1.bf16.msra.mxu0 0
        %1187 = vmatprep.subr.bf16.mxu0 0
        %1188 = vmatpush1.bf16.msra.mxu0 %v1159
        %1189 = vmatprep.subr.bf16.mxu0 0
        %1190 = vmatpush2.bf16.msra.mxu0 0
        %1191 = vmatprep.subr.bf16.mxu0 0
        %1192 = vmatpush2.bf16.msra.mxu0 0
        %1193 = vmatprep.subr.bf16.mxu0 0
        %1194 = vmatpush2.bf16.msra.mxu0 0
        %1195 = vmatprep.subr.bf16.mxu0 0
        %1196 = vmatpush2.bf16.msra.mxu0 0
        %1197 = vmatprep.subr.bf16.mxu0 0
        %1198 = vmatpush2.bf16.msra.mxu0 0
        %1199 = vmatprep.subr.bf16.mxu0 0
        %1200 = vmatpush2.bf16.msra.mxu0 0
        %1201 = vmatprep.subr.bf16.mxu0 0
        %1202 = vmatpush2.bf16.msra.mxu0 0
        %1203 = vmatprep.subr.bf16.mxu0 0
        %1204 = vmatpush2.bf16.msra.mxu0 0
        %1205 = vmatprep.mubr.bf16.mxu0 0
        %1206 = vmatmul.mubr.bf16.gmra.mxu0 %v1162
        %v1207 = vpop.f32.mrf.mxu0
        %v1208 = vadd.f32 0.0, %v1207
        %v1209 = vpop.f32.mrf.mxu0
        %v1210 = vpop.f32.mrf.mxu0
        %v1211 = vadd.f32 0.0, %v1210
        %v1212 = vpop.f32.mrf.mxu0
        %1213 = vmatprep.mubr.bf16.mxu0 0
        %1214 = vmatmul.mubr.bf16.gmra.mxu0 %v1165
        %v1215 = vpop.f32.mrf.mxu0
        %v1216 = vadd.f32 0.0, %v1215
        %v1217 = vpop.f32.mrf.mxu0
        %v1218 = vpop.f32.mrf.mxu0
        %v1219 = vadd.f32 0.0, %v1218
        %v1220 = vpop.f32.mrf.mxu0
        %1221 = vmatprep.mubr.bf16.mxu0 0
        %1222 = vmatmul.mubr.bf16.gmra.mxu0 %v1168
        %v1223 = vpop.f32.mrf.mxu0
        %v1224 = vadd.f32 0.0, %v1223
        %v1225 = vpop.f32.mrf.mxu0
        %v1226 = vpop.f32.mrf.mxu0
        %v1227 = vadd.f32 0.0, %v1226
        %v1228 = vpop.f32.mrf.mxu0
        %1229 = vmatprep.mubr.bf16.mxu0 0
        %1230 = vmatmul.mubr.bf16.gmra.mxu0 %v1171
        %v1231 = vpop.f32.mrf.mxu0
        %v1232 = vadd.f32 0.0, %v1231
        %v1233 = vpop.f32.mrf.mxu0
        %v1234 = vpop.f32.mrf.mxu0
        %v1235 = vadd.f32 0.0, %v1234
        %v1236 = vpop.f32.mrf.mxu0
        %1237 = vdwg.mxu0
        %v1238 = vadd.f32 %v1124, %v1208
        %v1239 = vadd.f32 %v1125, %v1211
        %v1240 = vadd.f32 %v1126, %v1216
        %v1241 = vadd.f32 %v1127, %v1219
        %v1242 = vadd.f32 %v1128, %v1224
        %v1243 = vadd.f32 %v1129, %v1227
        %v1244 = vadd.f32 %v1130, %v1232
        %v1245 = vadd.f32 %v1131, %v1235
        %v1246 = vld [vmem:[#allocation2 + $0x4] sm:$0xf]
        %v1247 = vld [vmem:[#allocation2 + $0x8] sm:$0x1]
        %v1248 = vld [vmem:[#allocation2 + $0x10] sm:$0xf]
        %v1249 = vld [vmem:[#allocation2 + $0x14] sm:$0x1]
        %v1250 = vld [vmem:[#allocation2 + $0x1c] sm:$0xf]
        %v1251 = vld [vmem:[#allocation2 + $0x20] sm:$0x1]
        %v1252 = vld [vmem:[#allocation2 + $0x28] sm:$0xf]
        %v1253 = vld [vmem:[#allocation2 + $0x2c] sm:$0x1]
        %v1254 = vld [vmem:[#allocation2 + $0x34] sm:$0xf]
        %v1255 = vld [vmem:[#allocation2 + $0x38] sm:$0x1]
        %v1256 = vld [vmem:[#allocation2 + $0x40] sm:$0xf]
        %v1257 = vld [vmem:[#allocation2 + $0x44] sm:$0x1]
        %v1258 = vld [vmem:[#allocation2 + $0x4c] sm:$0xf]
        %v1259 = vld [vmem:[#allocation2 + $0x50] sm:$0x1]
        %v1260 = vld [vmem:[#allocation2 + $0x58] sm:$0xf]
        %v1261 = vld [vmem:[#allocation2 + $0x5c] sm:$0x1]
        %vm1262 = vsmask.f32 3328
        %vm1263 = vsmask.f32 7440
        %vm1264 = vmor %vm1262, %vm1263
        %v1266 = vshrl.u32 %v1246, 16
        %v1268 = vrot.slane %v1266, 4
        %v1269 = vshll.u32 %v1246, 16
        %v1271 = vrot.slane %v1269, 5
        %v1272 = vor.u32 %v1268, %v1271
        %v1273 = vrot.slane %v1272, 4
        %v1275 = vshll.u32 %v1247, 16
        %v1277 = vrot.slane %v1275, 5
        %v1278 = vsel %vm1264, %v1273, %v1277
        %v1280 = vshrl.u32 %v1248, 16
        %v1282 = vrot.slane %v1280, 4
        %v1283 = vshll.u32 %v1248, 16
        %v1285 = vrot.slane %v1283, 5
        %v1286 = vor.u32 %v1282, %v1285
        %v1287 = vrot.slane %v1286, 4
        %v1289 = vshll.u32 %v1249, 16
        %v1291 = vrot.slane %v1289, 5
        %v1292 = vsel %vm1264, %v1287, %v1291
        %v1294 = vshrl.u32 %v1250, 16
        %v1296 = vrot.slane %v1294, 4
        %v1297 = vshll.u32 %v1250, 16
        %v1299 = vrot.slane %v1297, 5
        %v1300 = vor.u32 %v1296, %v1299
        %v1301 = vrot.slane %v1300, 4
        %v1303 = vshll.u32 %v1251, 16
        %v1305 = vrot.slane %v1303, 5
        %v1306 = vsel %vm1264, %v1301, %v1305
        %v1308 = vshrl.u32 %v1252, 16
        %v1310 = vrot.slane %v1308, 4
        %v1311 = vshll.u32 %v1252, 16
        %v1313 = vrot.slane %v1311, 5
        %v1314 = vor.u32 %v1310, %v1313
        %v1315 = vrot.slane %v1314, 4
        %v1317 = vshll.u32 %v1253, 16
        %v1319 = vrot.slane %v1317, 5
        %v1320 = vsel %vm1264, %v1315, %v1319
        %v1322 = vshrl.u32 %v1254, 16
        %v1324 = vrot.slane %v1322, 4
        %v1325 = vshll.u32 %v1254, 16
        %v1327 = vrot.slane %v1325, 5
        %v1328 = vor.u32 %v1324, %v1327
        %v1329 = vrot.slane %v1328, 4
        %v1331 = vshll.u32 %v1255, 16
        %v1333 = vrot.slane %v1331, 5
        %v1334 = vsel %vm1264, %v1329, %v1333
        %v1336 = vshrl.u32 %v1256, 16
        %v1338 = vrot.slane %v1336, 4
        %v1339 = vshll.u32 %v1256, 16
        %v1341 = vrot.slane %v1339, 5
        %v1342 = vor.u32 %v1338, %v1341
        %v1343 = vrot.slane %v1342, 4
        %v1345 = vshll.u32 %v1257, 16
        %v1347 = vrot.slane %v1345, 5
        %v1348 = vsel %vm1264, %v1343, %v1347
        %v1350 = vshrl.u32 %v1258, 16
        %v1352 = vrot.slane %v1350, 4
        %v1353 = vshll.u32 %v1258, 16
        %v1355 = vrot.slane %v1353, 5
        %v1356 = vor.u32 %v1352, %v1355
        %v1357 = vrot.slane %v1356, 4
        %v1359 = vshll.u32 %v1259, 16
        %v1361 = vrot.slane %v1359, 5
        %v1362 = vsel %vm1264, %v1357, %v1361
        %v1364 = vshrl.u32 %v1260, 16
        %v1366 = vrot.slane %v1364, 4
        %v1367 = vshll.u32 %v1260, 16
        %v1369 = vrot.slane %v1367, 5
        %v1370 = vor.u32 %v1366, %v1369
        %v1371 = vrot.slane %v1370, 4
        %v1373 = vshll.u32 %v1261, 16
        %v1375 = vrot.slane %v1373, 5
        %v1376 = vsel %vm1264, %v1371, %v1375
        %s1377 = scalar_lea.vmem %s1, 16
        %v1378 = vld [vmem:[%s1377] sm:$0xf]
        %v1379 = vld [vmem:[%s1377 + $0x4] sm:$0xf]
        %v1380 = vunpack.c.l.b16 %v1278
        %v1381 = vunpack.c.l.b16 %v1292
        %v1382 = vunpack.c.l.b16 %v1306
        %v1383 = vunpack.c.l.b16 %v1320
        %v1384 = vunpack.c.l.b16 %v1334
        %v1385 = vunpack.c.l.b16 %v1348
        %v1386 = vunpack.c.l.b16 %v1362
        %v1387 = vunpack.c.l.b16 %v1376
        %v1388 = vpack.c.b16 %v1381, %v1380
        %v1389 = vpack.c.b16 %v1383, %v1382
        %v1390 = vpack.c.b16 %v1385, %v1384
        %v1391 = vpack.c.b16 %v1387, %v1386
        %v1394 = vunpack.c.l.b16 %v1378
        %v1395 = vunpack.c.l.b16 %v1379
        %v1396 = vpack.c.b16 %v1395, %v1394
        %v1399 = vsel %vm499, %v1388, 0
        %v1402 = vsel %vm499, %v1389, 0
        %v1405 = vsel %vm499, %v1390, 0
        %v1408 = vsel %vm499, %v1391, 0
        %1410 = vmatprep.subr.bf16.mxu0 0
        %1411 = vmatpush1.bf16.msra.mxu0 0
        %1412 = vmatprep.subr.bf16.mxu0 0
        %1413 = vmatpush1.bf16.msra.mxu0 0
        %1414 = vmatprep.subr.bf16.mxu0 0
        %1415 = vmatpush1.bf16.msra.mxu0 0
        %1416 = vmatprep.subr.bf16.mxu0 0
        %1417 = vmatpush1.bf16.msra.mxu0 0
        %1418 = vmatprep.subr.bf16.mxu0 0
        %1419 = vmatpush1.bf16.msra.mxu0 0
        %1420 = vmatprep.subr.bf16.mxu0 0
        %1421 = vmatpush1.bf16.msra.mxu0 0
        %1422 = vmatprep.subr.bf16.mxu0 0
        %1423 = vmatpush1.bf16.msra.mxu0 0
        %1424 = vmatprep.subr.bf16.mxu0 0
        %1425 = vmatpush1.bf16.msra.mxu0 %v1396
        %1426 = vmatprep.subr.bf16.mxu0 0
        %1427 = vmatpush2.bf16.msra.mxu0 0
        %1428 = vmatprep.subr.bf16.mxu0 0
        %1429 = vmatpush2.bf16.msra.mxu0 0
        %1430 = vmatprep.subr.bf16.mxu0 0
        %1431 = vmatpush2.bf16.msra.mxu0 0
        %1432 = vmatprep.subr.bf16.mxu0 0
        %1433 = vmatpush2.bf16.msra.mxu0 0
        %1434 = vmatprep.subr.bf16.mxu0 0
        %1435 = vmatpush2.bf16.msra.mxu0 0
        %1436 = vmatprep.subr.bf16.mxu0 0
        %1437 = vmatpush2.bf16.msra.mxu0 0
        %1438 = vmatprep.subr.bf16.mxu0 0
        %1439 = vmatpush2.bf16.msra.mxu0 0
        %1440 = vmatprep.subr.bf16.mxu0 0
        %1441 = vmatpush2.bf16.msra.mxu0 0
        %1442 = vmatprep.mubr.bf16.mxu0 0
        %1443 = vmatmul.mubr.bf16.gmra.mxu0 %v1399
        %v1444 = vpop.f32.mrf.mxu0
        %v1445 = vadd.f32 0.0, %v1444
        %v1446 = vpop.f32.mrf.mxu0
        %v1447 = vpop.f32.mrf.mxu0
        %v1448 = vadd.f32 0.0, %v1447
        %v1449 = vpop.f32.mrf.mxu0
        %1450 = vmatprep.mubr.bf16.mxu0 0
        %1451 = vmatmul.mubr.bf16.gmra.mxu0 %v1402
        %v1452 = vpop.f32.mrf.mxu0
        %v1453 = vadd.f32 0.0, %v1452
        %v1454 = vpop.f32.mrf.mxu0
        %v1455 = vpop.f32.mrf.mxu0
        %v1456 = vadd.f32 0.0, %v1455
        %v1457 = vpop.f32.mrf.mxu0
        %1458 = vmatprep.mubr.bf16.mxu0 0
        %1459 = vmatmul.mubr.bf16.gmra.mxu0 %v1405
        %v1460 = vpop.f32.mrf.mxu0
        %v1461 = vadd.f32 0.0, %v1460
        %v1462 = vpop.f32.mrf.mxu0
        %v1463 = vpop.f32.mrf.mxu0
        %v1464 = vadd.f32 0.0, %v1463
        %v1465 = vpop.f32.mrf.mxu0
        %1466 = vmatprep.mubr.bf16.mxu0 0
        %1467 = vmatmul.mubr.bf16.gmra.mxu0 %v1408
        %v1468 = vpop.f32.mrf.mxu0
        %v1469 = vadd.f32 0.0, %v1468
        %v1470 = vpop.f32.mrf.mxu0
        %v1471 = vpop.f32.mrf.mxu0
        %v1472 = vadd.f32 0.0, %v1471
        %v1473 = vpop.f32.mrf.mxu0
        %1474 = vdwg.mxu0
        %v1475 = vadd.f32 %v1238, %v1445
        %v1476 = vadd.f32 %v1239, %v1448
        %v1477 = vadd.f32 %v1240, %v1453
        %v1478 = vadd.f32 %v1241, %v1456
        %v1479 = vadd.f32 %v1242, %v1461
        %v1480 = vadd.f32 %v1243, %v1464
        %v1481 = vadd.f32 %v1244, %v1469
        %v1482 = vadd.f32 %v1245, %v1472
        %v1483 = vld [vmem:[%s752] sm:$0x8]
        %v1484 = vld [vmem:[%s752 + $0x4] sm:$0xf]
        %v1485 = vld [vmem:[%s752 + $0xc] sm:$0x8]
        %v1486 = vld [vmem:[%s752 + $0x10] sm:$0xf]
        %v1487 = vld [vmem:[%s752 + $0x18] sm:$0x8]
        %v1488 = vld [vmem:[%s752 + $0x1c] sm:$0xf]
        %v1489 = vld [vmem:[%s752 + $0x24] sm:$0x8]
        %v1490 = vld [vmem:[%s752 + $0x28] sm:$0xf]
        %v1491 = vld [vmem:[%s752 + $0x30] sm:$0x8]
        %v1492 = vld [vmem:[%s752 + $0x34] sm:$0xf]
        %v1493 = vld [vmem:[%s752 + $0x3c] sm:$0x8]
        %v1494 = vld [vmem:[%s752 + $0x40] sm:$0xf]
        %v1495 = vld [vmem:[%s752 + $0x48] sm:$0x8]
        %v1496 = vld [vmem:[%s752 + $0x4c] sm:$0xf]
        %v1497 = vld [vmem:[%s752 + $0x54] sm:$0x8]
        %v1498 = vld [vmem:[%s752 + $0x58] sm:$0xf]
        %v1500 = vshrl.u32 %v1483, 16
        %v1502 = vrot.slane %v1500, 7
        %v1503 = vrot.slane %v1502, 4
        %v1505 = vshrl.u32 %v1484, 16
        %v1507 = vrot.slane %v1505, 7
        %v1508 = vshll.u32 %v1484, 16
        %v1510 = vor.u32 %v1507, %v1508
        %v1511 = vsel %vm922, %v1503, %v1510
        %v1513 = vshrl.u32 %v1485, 16
        %v1515 = vrot.slane %v1513, 7
        %v1516 = vrot.slane %v1515, 4
        %v1518 = vshrl.u32 %v1486, 16
        %v1520 = vrot.slane %v1518, 7
        %v1521 = vshll.u32 %v1486, 16
        %v1523 = vor.u32 %v1520, %v1521
        %v1524 = vsel %vm922, %v1516, %v1523
        %v1526 = vshrl.u32 %v1487, 16
        %v1528 = vrot.slane %v1526, 7
        %v1529 = vrot.slane %v1528, 4
        %v1531 = vshrl.u32 %v1488, 16
        %v1533 = vrot.slane %v1531, 7
        %v1534 = vshll.u32 %v1488, 16
        %v1536 = vor.u32 %v1533, %v1534
        %v1537 = vsel %vm922, %v1529, %v1536
        %v1539 = vshrl.u32 %v1489, 16
        %v1541 = vrot.slane %v1539, 7
        %v1542 = vrot.slane %v1541, 4
        %v1544 = vshrl.u32 %v1490, 16
        %v1546 = vrot.slane %v1544, 7
        %v1547 = vshll.u32 %v1490, 16
        %v1549 = vor.u32 %v1546, %v1547
        %v1550 = vsel %vm922, %v1542, %v1549
        %v1552 = vshrl.u32 %v1491, 16
        %v1554 = vrot.slane %v1552, 7
        %v1555 = vrot.slane %v1554, 4
        %v1557 = vshrl.u32 %v1492, 16
        %v1559 = vrot.slane %v1557, 7
        %v1560 = vshll.u32 %v1492, 16
        %v1562 = vor.u32 %v1559, %v1560
        %v1563 = vsel %vm922, %v1555, %v1562
        %v1565 = vshrl.u32 %v1493, 16
        %v1567 = vrot.slane %v1565, 7
        %v1568 = vrot.slane %v1567, 4
        %v1570 = vshrl.u32 %v1494, 16
        %v1572 = vrot.slane %v1570, 7
        %v1573 = vshll.u32 %v1494, 16
        %v1575 = vor.u32 %v1572, %v1573
        %v1576 = vsel %vm922, %v1568, %v1575
        %v1578 = vshrl.u32 %v1495, 16
        %v1580 = vrot.slane %v1578, 7
        %v1581 = vrot.slane %v1580, 4
        %v1583 = vshrl.u32 %v1496, 16
        %v1585 = vrot.slane %v1583, 7
        %v1586 = vshll.u32 %v1496, 16
        %v1588 = vor.u32 %v1585, %v1586
        %v1589 = vsel %vm922, %v1581, %v1588
        %v1591 = vshrl.u32 %v1497, 16
        %v1593 = vrot.slane %v1591, 7
        %v1594 = vrot.slane %v1593, 4
        %v1596 = vshrl.u32 %v1498, 16
        %v1598 = vrot.slane %v1596, 7
        %v1599 = vshll.u32 %v1498, 16
        %v1601 = vor.u32 %v1598, %v1599
        %v1602 = vsel %vm922, %v1594, %v1601
        %s1603 = scalar_lea.vmem %s1, 24
        %v1604 = vld [vmem:[%s1603] sm:$0xf]
        %v1605 = vld [vmem:[%s1603 + $0x4] sm:$0xf]
        %v1606 = vunpack.c.l.b16 %v1511
        %v1607 = vunpack.c.l.b16 %v1524
        %v1608 = vunpack.c.l.b16 %v1537
        %v1609 = vunpack.c.l.b16 %v1550
        %v1610 = vunpack.c.l.b16 %v1563
        %v1611 = vunpack.c.l.b16 %v1576
        %v1612 = vunpack.c.l.b16 %v1589
        %v1613 = vunpack.c.l.b16 %v1602
        %v1614 = vpack.c.b16 %v1607, %v1606
        %v1615 = vpack.c.b16 %v1609, %v1608
        %v1616 = vpack.c.b16 %v1611, %v1610
        %v1617 = vpack.c.b16 %v1613, %v1612
        %v1620 = vunpack.c.l.b16 %v1604
        %v1621 = vunpack.c.l.b16 %v1605
        %v1622 = vpack.c.b16 %v1621, %v1620
        %v1625 = vsel %vm499, %v1614, 0
        %v1628 = vsel %vm499, %v1615, 0
        %v1631 = vsel %vm499, %v1616, 0
        %v1634 = vsel %vm499, %v1617, 0
        %1636 = vmatprep.subr.bf16.mxu0 0
        %1637 = vmatpush1.bf16.msra.mxu0 0
        %1638 = vmatprep.subr.bf16.mxu0 0
        %1639 = vmatpush1.bf16.msra.mxu0 0
        %1640 = vmatprep.subr.bf16.mxu0 0
        %1641 = vmatpush1.bf16.msra.mxu0 0
        %1642 = vmatprep.subr.bf16.mxu0 0
        %1643 = vmatpush1.bf16.msra.mxu0 0
        %1644 = vmatprep.subr.bf16.mxu0 0
        %1645 = vmatpush1.bf16.msra.mxu0 0
        %1646 = vmatprep.subr.bf16.mxu0 0
        %1647 = vmatpush1.bf16.msra.mxu0 0
        %1648 = vmatprep.subr.bf16.mxu0 0
        %1649 = vmatpush1.bf16.msra.mxu0 0
        %1650 = vmatprep.subr.bf16.mxu0 0
        %1651 = vmatpush1.bf16.msra.mxu0 %v1622
        %1652 = vmatprep.subr.bf16.mxu0 0
        %1653 = vmatpush2.bf16.msra.mxu0 0
        %1654 = vmatprep.subr.bf16.mxu0 0
        %1655 = vmatpush2.bf16.msra.mxu0 0
        %1656 = vmatprep.subr.bf16.mxu0 0
        %1657 = vmatpush2.bf16.msra.mxu0 0
        %1658 = vmatprep.subr.bf16.mxu0 0
        %1659 = vmatpush2.bf16.msra.mxu0 0
        %1660 = vmatprep.subr.bf16.mxu0 0
        %1661 = vmatpush2.bf16.msra.mxu0 0
        %1662 = vmatprep.subr.bf16.mxu0 0
        %1663 = vmatpush2.bf16.msra.mxu0 0
        %1664 = vmatprep.subr.bf16.mxu0 0
        %1665 = vmatpush2.bf16.msra.mxu0 0
        %1666 = vmatprep.subr.bf16.mxu0 0
        %1667 = vmatpush2.bf16.msra.mxu0 0
        %1668 = vmatprep.mubr.bf16.mxu0 0
        %1669 = vmatmul.mubr.bf16.gmra.mxu0 %v1625
        %v1670 = vpop.f32.mrf.mxu0
        %v1671 = vadd.f32 0.0, %v1670
        %v1672 = vpop.f32.mrf.mxu0
        %v1673 = vpop.f32.mrf.mxu0
        %v1674 = vadd.f32 0.0, %v1673
        %v1675 = vpop.f32.mrf.mxu0
        %1676 = vmatprep.mubr.bf16.mxu0 0
        %1677 = vmatmul.mubr.bf16.gmra.mxu0 %v1628
        %v1678 = vpop.f32.mrf.mxu0
        %v1679 = vadd.f32 0.0, %v1678
        %v1680 = vpop.f32.mrf.mxu0
        %v1681 = vpop.f32.mrf.mxu0
        %v1682 = vadd.f32 0.0, %v1681
        %v1683 = vpop.f32.mrf.mxu0
        %1684 = vmatprep.mubr.bf16.mxu0 0
        %1685 = vmatmul.mubr.bf16.gmra.mxu0 %v1631
        %v1686 = vpop.f32.mrf.mxu0
        %v1687 = vadd.f32 0.0, %v1686
        %v1688 = vpop.f32.mrf.mxu0
        %v1689 = vpop.f32.mrf.mxu0
        %v1690 = vadd.f32 0.0, %v1689
        %v1691 = vpop.f32.mrf.mxu0
        %1692 = vmatprep.mubr.bf16.mxu0 0
        %1693 = vmatmul.mubr.bf16.gmra.mxu0 %v1634
        %v1694 = vpop.f32.mrf.mxu0
        %v1695 = vadd.f32 0.0, %v1694
        %v1696 = vpop.f32.mrf.mxu0
        %v1697 = vpop.f32.mrf.mxu0
        %v1698 = vadd.f32 0.0, %v1697
        %v1699 = vpop.f32.mrf.mxu0
        %1700 = vdwg.mxu0
        %v1701 = vadd.f32 %v1475, %v1671
        %v1702 = vadd.f32 %v1476, %v1674
        %v1703 = vadd.f32 %v1477, %v1679
        %v1704 = vadd.f32 %v1478, %v1682
        %v1705 = vadd.f32 %v1479, %v1687
        %v1706 = vadd.f32 %v1480, %v1690
        %v1707 = vadd.f32 %v1481, %v1695
        %v1708 = vadd.f32 %v1482, %v1698
        %s1709 = scalar_lea.vmem %s1, 32
        %v1710 = vld [vmem:[%s1709] sm:$0xf]
        %v1711 = vld [vmem:[%s1709 + $0x4] sm:$0xf]
        %v1720 = vunpack.c.l.b16 %v1484
        %v1721 = vunpack.c.l.b16 %v1486
        %v1722 = vunpack.c.l.b16 %v1488
        %v1723 = vunpack.c.l.b16 %v1490
        %v1724 = vunpack.c.l.b16 %v1492
        %v1725 = vunpack.c.l.b16 %v1494
        %v1726 = vunpack.c.l.b16 %v1496
        %v1727 = vunpack.c.l.b16 %v1498
        %v1728 = vpack.c.b16 %v1721, %v1720
        %v1729 = vpack.c.b16 %v1723, %v1722
        %v1730 = vpack.c.b16 %v1725, %v1724
        %v1731 = vpack.c.b16 %v1727, %v1726
        %v1734 = vunpack.c.l.b16 %v1710
        %v1735 = vunpack.c.l.b16 %v1711
        %v1736 = vpack.c.b16 %v1735, %v1734
        %v1739 = vsel %vm499, %v1728, 0
        %v1742 = vsel %vm499, %v1729, 0
        %v1745 = vsel %vm499, %v1730, 0
        %v1748 = vsel %vm499, %v1731, 0
        %1750 = vmatprep.subr.bf16.mxu0 0
        %1751 = vmatpush1.bf16.msra.mxu0 0
        %1752 = vmatprep.subr.bf16.mxu0 0
        %1753 = vmatpush1.bf16.msra.mxu0 0
        %1754 = vmatprep.subr.bf16.mxu0 0
        %1755 = vmatpush1.bf16.msra.mxu0 0
        %1756 = vmatprep.subr.bf16.mxu0 0
        %1757 = vmatpush1.bf16.msra.mxu0 0
        %1758 = vmatprep.subr.bf16.mxu0 0
        %1759 = vmatpush1.bf16.msra.mxu0 0
        %1760 = vmatprep.subr.bf16.mxu0 0
        %1761 = vmatpush1.bf16.msra.mxu0 0
        %1762 = vmatprep.subr.bf16.mxu0 0
        %1763 = vmatpush1.bf16.msra.mxu0 0
        %1764 = vmatprep.subr.bf16.mxu0 0
        %1765 = vmatpush1.bf16.msra.mxu0 %v1736
        %1766 = vmatprep.subr.bf16.mxu0 0
        %1767 = vmatpush2.bf16.msra.mxu0 0
        %1768 = vmatprep.subr.bf16.mxu0 0
        %1769 = vmatpush2.bf16.msra.mxu0 0
        %1770 = vmatprep.subr.bf16.mxu0 0
        %1771 = vmatpush2.bf16.msra.mxu0 0
        %1772 = vmatprep.subr.bf16.mxu0 0
        %1773 = vmatpush2.bf16.msra.mxu0 0
        %1774 = vmatprep.subr.bf16.mxu0 0
        %1775 = vmatpush2.bf16.msra.mxu0 0
        %1776 = vmatprep.subr.bf16.mxu0 0
        %1777 = vmatpush2.bf16.msra.mxu0 0
        %1778 = vmatprep.subr.bf16.mxu0 0
        %1779 = vmatpush2.bf16.msra.mxu0 0
        %1780 = vmatprep.subr.bf16.mxu0 0
        %1781 = vmatpush2.bf16.msra.mxu0 0
        %1782 = vmatprep.mubr.bf16.mxu0 0
        %1783 = vmatmul.mubr.bf16.gmra.mxu0 %v1739
        %v1784 = vpop.f32.mrf.mxu0
        %v1785 = vadd.f32 0.0, %v1784
        %v1786 = vpop.f32.mrf.mxu0
        %v1787 = vpop.f32.mrf.mxu0
        %v1788 = vadd.f32 0.0, %v1787
        %v1789 = vpop.f32.mrf.mxu0
        %1790 = vmatprep.mubr.bf16.mxu0 0
        %1791 = vmatmul.mubr.bf16.gmra.mxu0 %v1742
        %v1792 = vpop.f32.mrf.mxu0
        %v1793 = vadd.f32 0.0, %v1792
        %v1794 = vpop.f32.mrf.mxu0
        %v1795 = vpop.f32.mrf.mxu0
        %v1796 = vadd.f32 0.0, %v1795
        %v1797 = vpop.f32.mrf.mxu0
        %1798 = vmatprep.mubr.bf16.mxu0 0
        %1799 = vmatmul.mubr.bf16.gmra.mxu0 %v1745
        %v1800 = vpop.f32.mrf.mxu0
        %v1801 = vadd.f32 0.0, %v1800
        %v1802 = vpop.f32.mrf.mxu0
        %v1803 = vpop.f32.mrf.mxu0
        %v1804 = vadd.f32 0.0, %v1803
        %v1805 = vpop.f32.mrf.mxu0
        %1806 = vmatprep.mubr.bf16.mxu0 0
        %1807 = vmatmul.mubr.bf16.gmra.mxu0 %v1748
        %v1808 = vpop.f32.mrf.mxu0
        %v1809 = vadd.f32 0.0, %v1808
        %v1810 = vpop.f32.mrf.mxu0
        %v1811 = vpop.f32.mrf.mxu0
        %v1812 = vadd.f32 0.0, %v1811
        %v1813 = vpop.f32.mrf.mxu0
        %1814 = vdwg.mxu0
        %v1815 = vadd.f32 %v1701, %v1785
        %v1816 = vadd.f32 %v1702, %v1788
        %v1817 = vadd.f32 %v1703, %v1793
        %v1818 = vadd.f32 %v1704, %v1796
        %v1819 = vadd.f32 %v1705, %v1801
        %v1820 = vadd.f32 %v1706, %v1804
        %v1821 = vadd.f32 %v1707, %v1809
        %v1822 = vadd.f32 %v1708, %v1812
        %v1823 = vld [vmem:[%s752 + $0x4] sm:$0xf]
        %v1824 = vld [vmem:[%s752 + $0x8] sm:$0x1]
        %v1825 = vld [vmem:[%s752 + $0x10] sm:$0xf]
        %v1826 = vld [vmem:[%s752 + $0x14] sm:$0x1]
        %v1827 = vld [vmem:[%s752 + $0x1c] sm:$0xf]
        %v1828 = vld [vmem:[%s752 + $0x20] sm:$0x1]
        %v1829 = vld [vmem:[%s752 + $0x28] sm:$0xf]
        %v1830 = vld [vmem:[%s752 + $0x2c] sm:$0x1]
        %v1831 = vld [vmem:[%s752 + $0x34] sm:$0xf]
        %v1832 = vld [vmem:[%s752 + $0x38] sm:$0x1]
        %v1833 = vld [vmem:[%s752 + $0x40] sm:$0xf]
        %v1834 = vld [vmem:[%s752 + $0x44] sm:$0x1]
        %v1835 = vld [vmem:[%s752 + $0x4c] sm:$0xf]
        %v1836 = vld [vmem:[%s752 + $0x50] sm:$0x1]
        %v1837 = vld [vmem:[%s752 + $0x58] sm:$0xf]
        %v1838 = vld [vmem:[%s752 + $0x5c] sm:$0x1]
        %v1840 = vshrl.u32 %v1823, 16
        %v1842 = vrot.slane %v1840, 4
        %v1843 = vshll.u32 %v1823, 16
        %v1845 = vrot.slane %v1843, 5
        %v1846 = vor.u32 %v1842, %v1845
        %v1847 = vrot.slane %v1846, 4
        %v1849 = vshll.u32 %v1824, 16
        %v1851 = vrot.slane %v1849, 5
        %v1852 = vsel %vm1264, %v1847, %v1851
        %v1854 = vshrl.u32 %v1825, 16
        %v1856 = vrot.slane %v1854, 4
        %v1857 = vshll.u32 %v1825, 16
        %v1859 = vrot.slane %v1857, 5
        %v1860 = vor.u32 %v1856, %v1859
        %v1861 = vrot.slane %v1860, 4
        %v1863 = vshll.u32 %v1826, 16
        %v1865 = vrot.slane %v1863, 5
        %v1866 = vsel %vm1264, %v1861, %v1865
        %v1868 = vshrl.u32 %v1827, 16
        %v1870 = vrot.slane %v1868, 4
        %v1871 = vshll.u32 %v1827, 16
        %v1873 = vrot.slane %v1871, 5
        %v1874 = vor.u32 %v1870, %v1873
        %v1875 = vrot.slane %v1874, 4
        %v1877 = vshll.u32 %v1828, 16
        %v1879 = vrot.slane %v1877, 5
        %v1880 = vsel %vm1264, %v1875, %v1879
        %v1882 = vshrl.u32 %v1829, 16
        %v1884 = vrot.slane %v1882, 4
        %v1885 = vshll.u32 %v1829, 16
        %v1887 = vrot.slane %v1885, 5
        %v1888 = vor.u32 %v1884, %v1887
        %v1889 = vrot.slane %v1888, 4
        %v1891 = vshll.u32 %v1830, 16
        %v1893 = vrot.slane %v1891, 5
        %v1894 = vsel %vm1264, %v1889, %v1893
        %v1896 = vshrl.u32 %v1831, 16
        %v1898 = vrot.slane %v1896, 4
        %v1899 = vshll.u32 %v1831, 16
        %v1901 = vrot.slane %v1899, 5
        %v1902 = vor.u32 %v1898, %v1901
        %v1903 = vrot.slane %v1902, 4
        %v1905 = vshll.u32 %v1832, 16
        %v1907 = vrot.slane %v1905, 5
        %v1908 = vsel %vm1264, %v1903, %v1907
        %v1910 = vshrl.u32 %v1833, 16
        %v1912 = vrot.slane %v1910, 4
        %v1913 = vshll.u32 %v1833, 16
        %v1915 = vrot.slane %v1913, 5
        %v1916 = vor.u32 %v1912, %v1915
        %v1917 = vrot.slane %v1916, 4
        %v1919 = vshll.u32 %v1834, 16
        %v1921 = vrot.slane %v1919, 5
        %v1922 = vsel %vm1264, %v1917, %v1921
        %v1924 = vshrl.u32 %v1835, 16
        %v1926 = vrot.slane %v1924, 4
        %v1927 = vshll.u32 %v1835, 16
        %v1929 = vrot.slane %v1927, 5
        %v1930 = vor.u32 %v1926, %v1929
        %v1931 = vrot.slane %v1930, 4
        %v1933 = vshll.u32 %v1836, 16
        %v1935 = vrot.slane %v1933, 5
        %v1936 = vsel %vm1264, %v1931, %v1935
        %v1938 = vshrl.u32 %v1837, 16
        %v1940 = vrot.slane %v1938, 4
        %v1941 = vshll.u32 %v1837, 16
        %v1943 = vrot.slane %v1941, 5
        %v1944 = vor.u32 %v1940, %v1943
        %v1945 = vrot.slane %v1944, 4
        %v1947 = vshll.u32 %v1838, 16
        %v1949 = vrot.slane %v1947, 5
        %v1950 = vsel %vm1264, %v1945, %v1949
        %s1951 = scalar_lea.vmem %s1, 40
        %v1952 = vld [vmem:[%s1951] sm:$0xf]
        %v1953 = vld [vmem:[%s1951 + $0x4] sm:$0xf]
        %v1954 = vunpack.c.l.b16 %v1852
        %v1955 = vunpack.c.l.b16 %v1866
        %v1956 = vunpack.c.l.b16 %v1880
        %v1957 = vunpack.c.l.b16 %v1894
        %v1958 = vunpack.c.l.b16 %v1908
        %v1959 = vunpack.c.l.b16 %v1922
        %v1960 = vunpack.c.l.b16 %v1936
        %v1961 = vunpack.c.l.b16 %v1950
        %v1962 = vpack.c.b16 %v1955, %v1954
        %v1963 = vpack.c.b16 %v1957, %v1956
        %v1964 = vpack.c.b16 %v1959, %v1958
        %v1965 = vpack.c.b16 %v1961, %v1960
        %v1968 = vunpack.c.l.b16 %v1952
        %v1969 = vunpack.c.l.b16 %v1953
        %v1970 = vpack.c.b16 %v1969, %v1968
        %v1973 = vsel %vm499, %v1962, 0
        %v1976 = vsel %vm499, %v1963, 0
        %v1979 = vsel %vm499, %v1964, 0
        %v1982 = vsel %vm499, %v1965, 0
        %1984 = vmatprep.subr.bf16.mxu0 0
        %1985 = vmatpush1.bf16.msra.mxu0 0
        %1986 = vmatprep.subr.bf16.mxu0 0
        %1987 = vmatpush1.bf16.msra.mxu0 0
        %1988 = vmatprep.subr.bf16.mxu0 0
        %1989 = vmatpush1.bf16.msra.mxu0 0
        %1990 = vmatprep.subr.bf16.mxu0 0
        %1991 = vmatpush1.bf16.msra.mxu0 0
        %1992 = vmatprep.subr.bf16.mxu0 0
        %1993 = vmatpush1.bf16.msra.mxu0 0
        %1994 = vmatprep.subr.bf16.mxu0 0
        %1995 = vmatpush1.bf16.msra.mxu0 0
        %1996 = vmatprep.subr.bf16.mxu0 0
        %1997 = vmatpush1.bf16.msra.mxu0 0
        %1998 = vmatprep.subr.bf16.mxu0 0
        %1999 = vmatpush1.bf16.msra.mxu0 %v1970
        %2000 = vmatprep.subr.bf16.mxu0 0
        %2001 = vmatpush2.bf16.msra.mxu0 0
        %2002 = vmatprep.subr.bf16.mxu0 0
        %2003 = vmatpush2.bf16.msra.mxu0 0
        %2004 = vmatprep.subr.bf16.mxu0 0
        %2005 = vmatpush2.bf16.msra.mxu0 0
        %2006 = vmatprep.subr.bf16.mxu0 0
        %2007 = vmatpush2.bf16.msra.mxu0 0
        %2008 = vmatprep.subr.bf16.mxu0 0
        %2009 = vmatpush2.bf16.msra.mxu0 0
        %2010 = vmatprep.subr.bf16.mxu0 0
        %2011 = vmatpush2.bf16.msra.mxu0 0
        %2012 = vmatprep.subr.bf16.mxu0 0
        %2013 = vmatpush2.bf16.msra.mxu0 0
        %2014 = vmatprep.subr.bf16.mxu0 0
        %2015 = vmatpush2.bf16.msra.mxu0 0
        %2016 = vmatprep.mubr.bf16.mxu0 0
        %2017 = vmatmul.mubr.bf16.gmra.mxu0 %v1973
        %v2018 = vpop.f32.mrf.mxu0
        %v2019 = vadd.f32 0.0, %v2018
        %v2020 = vpop.f32.mrf.mxu0
        %v2021 = vpop.f32.mrf.mxu0
        %v2022 = vadd.f32 0.0, %v2021
        %v2023 = vpop.f32.mrf.mxu0
        %2024 = vmatprep.mubr.bf16.mxu0 0
        %2025 = vmatmul.mubr.bf16.gmra.mxu0 %v1976
        %v2026 = vpop.f32.mrf.mxu0
        %v2027 = vadd.f32 0.0, %v2026
        %v2028 = vpop.f32.mrf.mxu0
        %v2029 = vpop.f32.mrf.mxu0
        %v2030 = vadd.f32 0.0, %v2029
        %v2031 = vpop.f32.mrf.mxu0
        %2032 = vmatprep.mubr.bf16.mxu0 0
        %2033 = vmatmul.mubr.bf16.gmra.mxu0 %v1979
        %v2034 = vpop.f32.mrf.mxu0
        %v2035 = vadd.f32 0.0, %v2034
        %v2036 = vpop.f32.mrf.mxu0
        %v2037 = vpop.f32.mrf.mxu0
        %v2038 = vadd.f32 0.0, %v2037
        %v2039 = vpop.f32.mrf.mxu0
        %2040 = vmatprep.mubr.bf16.mxu0 0
        %2041 = vmatmul.mubr.bf16.gmra.mxu0 %v1982
        %v2042 = vpop.f32.mrf.mxu0
        %v2043 = vadd.f32 0.0, %v2042
        %v2044 = vpop.f32.mrf.mxu0
        %v2045 = vpop.f32.mrf.mxu0
        %v2046 = vadd.f32 0.0, %v2045
        %v2047 = vpop.f32.mrf.mxu0
        %2048 = vdwg.mxu0
        %v2049 = vadd.f32 %v1815, %v2019
        %v2050 = vadd.f32 %v1816, %v2022
        %v2051 = vadd.f32 %v1817, %v2027
        %v2052 = vadd.f32 %v1818, %v2030
        %v2053 = vadd.f32 %v1819, %v2035
        %v2054 = vadd.f32 %v1820, %v2038
        %v2055 = vadd.f32 %v1821, %v2043
        %v2056 = vadd.f32 %v1822, %v2046
        %s2057 = scalar_lea.vmem [#allocation2], 24
        %v2058 = vld [vmem:[%s2057] sm:$0x8]
        %v2059 = vld [vmem:[%s2057 + $0x4] sm:$0xf]
        %v2060 = vld [vmem:[%s2057 + $0xc] sm:$0x8]
        %v2061 = vld [vmem:[%s2057 + $0x10] sm:$0xf]
        %v2062 = vld [vmem:[%s2057 + $0x18] sm:$0x8]
        %v2063 = vld [vmem:[%s2057 + $0x1c] sm:$0xf]
        %v2064 = vld [vmem:[%s2057 + $0x24] sm:$0x8]
        %v2065 = vld [vmem:[%s2057 + $0x28] sm:$0xf]
        %v2066 = vld [vmem:[%s2057 + $0x30] sm:$0x8]
        %v2067 = vld [vmem:[%s2057 + $0x34] sm:$0xf]
        %v2068 = vld [vmem:[%s2057 + $0x3c] sm:$0x8]
        %v2069 = vld [vmem:[%s2057 + $0x40] sm:$0xf]
        %v2070 = vld [vmem:[%s2057 + $0x48] sm:$0x8]
        %v2071 = vld [vmem:[%s2057 + $0x4c] sm:$0xf]
        %v2072 = vld [vmem:[%s2057 + $0x54] sm:$0x8]
        %v2073 = vld [vmem:[%s2057 + $0x58] sm:$0xf]
        %v2075 = vshrl.u32 %v2058, 16
        %v2077 = vrot.slane %v2075, 7
        %v2078 = vrot.slane %v2077, 4
        %v2080 = vshrl.u32 %v2059, 16
        %v2082 = vrot.slane %v2080, 7
        %v2083 = vshll.u32 %v2059, 16
        %v2085 = vor.u32 %v2082, %v2083
        %v2086 = vsel %vm922, %v2078, %v2085
        %v2088 = vshrl.u32 %v2060, 16
        %v2090 = vrot.slane %v2088, 7
        %v2091 = vrot.slane %v2090, 4
        %v2093 = vshrl.u32 %v2061, 16
        %v2095 = vrot.slane %v2093, 7
        %v2096 = vshll.u32 %v2061, 16
        %v2098 = vor.u32 %v2095, %v2096
        %v2099 = vsel %vm922, %v2091, %v2098
        %v2101 = vshrl.u32 %v2062, 16
        %v2103 = vrot.slane %v2101, 7
        %v2104 = vrot.slane %v2103, 4
        %v2106 = vshrl.u32 %v2063, 16
        %v2108 = vrot.slane %v2106, 7
        %v2109 = vshll.u32 %v2063, 16
        %v2111 = vor.u32 %v2108, %v2109
        %v2112 = vsel %vm922, %v2104, %v2111
        %v2114 = vshrl.u32 %v2064, 16
        %v2116 = vrot.slane %v2114, 7
        %v2117 = vrot.slane %v2116, 4
        %v2119 = vshrl.u32 %v2065, 16
        %v2121 = vrot.slane %v2119, 7
        %v2122 = vshll.u32 %v2065, 16
        %v2124 = vor.u32 %v2121, %v2122
        %v2125 = vsel %vm922, %v2117, %v2124
        %v2127 = vshrl.u32 %v2066, 16
        %v2129 = vrot.slane %v2127, 7
        %v2130 = vrot.slane %v2129, 4
        %v2132 = vshrl.u32 %v2067, 16
        %v2134 = vrot.slane %v2132, 7
        %v2135 = vshll.u32 %v2067, 16
        %v2137 = vor.u32 %v2134, %v2135
        %v2138 = vsel %vm922, %v2130, %v2137
        %v2140 = vshrl.u32 %v2068, 16
        %v2142 = vrot.slane %v2140, 7
        %v2143 = vrot.slane %v2142, 4
        %v2145 = vshrl.u32 %v2069, 16
        %v2147 = vrot.slane %v2145, 7
        %v2148 = vshll.u32 %v2069, 16
        %v2150 = vor.u32 %v2147, %v2148
        %v2151 = vsel %vm922, %v2143, %v2150
        %v2153 = vshrl.u32 %v2070, 16
        %v2155 = vrot.slane %v2153, 7
        %v2156 = vrot.slane %v2155, 4
        %v2158 = vshrl.u32 %v2071, 16
        %v2160 = vrot.slane %v2158, 7
        %v2161 = vshll.u32 %v2071, 16
        %v2163 = vor.u32 %v2160, %v2161
        %v2164 = vsel %vm922, %v2156, %v2163
        %v2166 = vshrl.u32 %v2072, 16
        %v2168 = vrot.slane %v2166, 7
        %v2169 = vrot.slane %v2168, 4
        %v2171 = vshrl.u32 %v2073, 16
        %v2173 = vrot.slane %v2171, 7
        %v2174 = vshll.u32 %v2073, 16
        %v2176 = vor.u32 %v2173, %v2174
        %v2177 = vsel %vm922, %v2169, %v2176
        %s2178 = scalar_lea.vmem %s1, 48
        %v2179 = vld [vmem:[%s2178] sm:$0xf]
        %v2180 = vld [vmem:[%s2178 + $0x4] sm:$0xf]
        %v2181 = vunpack.c.l.b16 %v2086
        %v2182 = vunpack.c.l.b16 %v2099
        %v2183 = vunpack.c.l.b16 %v2112
        %v2184 = vunpack.c.l.b16 %v2125
        %v2185 = vunpack.c.l.b16 %v2138
        %v2186 = vunpack.c.l.b16 %v2151
        %v2187 = vunpack.c.l.b16 %v2164
        %v2188 = vunpack.c.l.b16 %v2177
        %v2189 = vpack.c.b16 %v2182, %v2181
        %v2190 = vpack.c.b16 %v2184, %v2183
        %v2191 = vpack.c.b16 %v2186, %v2185
        %v2192 = vpack.c.b16 %v2188, %v2187
        %v2195 = vunpack.c.l.b16 %v2179
        %v2196 = vunpack.c.l.b16 %v2180
        %v2197 = vpack.c.b16 %v2196, %v2195
        %v2200 = vsel %vm499, %v2189, 0
        %v2203 = vsel %vm499, %v2190, 0
        %v2206 = vsel %vm499, %v2191, 0
        %v2209 = vsel %vm499, %v2192, 0
        %2211 = vmatprep.subr.bf16.mxu0 0
        %2212 = vmatpush1.bf16.msra.mxu0 0
        %2213 = vmatprep.subr.bf16.mxu0 0
        %2214 = vmatpush1.bf16.msra.mxu0 0
        %2215 = vmatprep.subr.bf16.mxu0 0
        %2216 = vmatpush1.bf16.msra.mxu0 0
        %2217 = vmatprep.subr.bf16.mxu0 0
        %2218 = vmatpush1.bf16.msra.mxu0 0
        %2219 = vmatprep.subr.bf16.mxu0 0
        %2220 = vmatpush1.bf16.msra.mxu0 0
        %2221 = vmatprep.subr.bf16.mxu0 0
        %2222 = vmatpush1.bf16.msra.mxu0 0
        %2223 = vmatprep.subr.bf16.mxu0 0
        %2224 = vmatpush1.bf16.msra.mxu0 0
        %2225 = vmatprep.subr.bf16.mxu0 0
        %2226 = vmatpush1.bf16.msra.mxu0 %v2197
        %2227 = vmatprep.subr.bf16.mxu0 0
        %2228 = vmatpush2.bf16.msra.mxu0 0
        %2229 = vmatprep.subr.bf16.mxu0 0
        %2230 = vmatpush2.bf16.msra.mxu0 0
        %2231 = vmatprep.subr.bf16.mxu0 0
        %2232 = vmatpush2.bf16.msra.mxu0 0
        %2233 = vmatprep.subr.bf16.mxu0 0
        %2234 = vmatpush2.bf16.msra.mxu0 0
        %2235 = vmatprep.subr.bf16.mxu0 0
        %2236 = vmatpush2.bf16.msra.mxu0 0
        %2237 = vmatprep.subr.bf16.mxu0 0
        %2238 = vmatpush2.bf16.msra.mxu0 0
        %2239 = vmatprep.subr.bf16.mxu0 0
        %2240 = vmatpush2.bf16.msra.mxu0 0
        %2241 = vmatprep.subr.bf16.mxu0 0
        %2242 = vmatpush2.bf16.msra.mxu0 0
        %2243 = vmatprep.mubr.bf16.mxu0 0
        %2244 = vmatmul.mubr.bf16.gmra.mxu0 %v2200
        %v2245 = vpop.f32.mrf.mxu0
        %v2246 = vadd.f32 0.0, %v2245
        %v2247 = vpop.f32.mrf.mxu0
        %v2248 = vpop.f32.mrf.mxu0
        %v2249 = vadd.f32 0.0, %v2248
        %v2250 = vpop.f32.mrf.mxu0
        %2251 = vmatprep.mubr.bf16.mxu0 0
        %2252 = vmatmul.mubr.bf16.gmra.mxu0 %v2203
        %v2253 = vpop.f32.mrf.mxu0
        %v2254 = vadd.f32 0.0, %v2253
        %v2255 = vpop.f32.mrf.mxu0
        %v2256 = vpop.f32.mrf.mxu0
        %v2257 = vadd.f32 0.0, %v2256
        %v2258 = vpop.f32.mrf.mxu0
        %2259 = vmatprep.mubr.bf16.mxu0 0
        %2260 = vmatmul.mubr.bf16.gmra.mxu0 %v2206
        %v2261 = vpop.f32.mrf.mxu0
        %v2262 = vadd.f32 0.0, %v2261
        %v2263 = vpop.f32.mrf.mxu0
        %v2264 = vpop.f32.mrf.mxu0
        %v2265 = vadd.f32 0.0, %v2264
        %v2266 = vpop.f32.mrf.mxu0
        %2267 = vmatprep.mubr.bf16.mxu0 0
        %2268 = vmatmul.mubr.bf16.gmra.mxu0 %v2209
        %v2269 = vpop.f32.mrf.mxu0
        %v2270 = vadd.f32 0.0, %v2269
        %v2271 = vpop.f32.mrf.mxu0
        %v2272 = vpop.f32.mrf.mxu0
        %v2273 = vadd.f32 0.0, %v2272
        %v2274 = vpop.f32.mrf.mxu0
        %2275 = vdwg.mxu0
        %v2276 = vadd.f32 %v2049, %v2246
        %v2277 = vadd.f32 %v2050, %v2249
        %v2278 = vadd.f32 %v2051, %v2254
        %v2279 = vadd.f32 %v2052, %v2257
        %v2280 = vadd.f32 %v2053, %v2262
        %v2281 = vadd.f32 %v2054, %v2265
        %v2282 = vadd.f32 %v2055, %v2270
        %v2283 = vadd.f32 %v2056, %v2273
        %s2284 = scalar_lea.vmem %s1, 56
        %v2285 = vld [vmem:[%s2284] sm:$0xf]
        %v2286 = vld [vmem:[%s2284 + $0x4] sm:$0xf]
        %v2295 = vunpack.c.l.b16 %v2059
        %v2296 = vunpack.c.l.b16 %v2061
        %v2297 = vunpack.c.l.b16 %v2063
        %v2298 = vunpack.c.l.b16 %v2065
        %v2299 = vunpack.c.l.b16 %v2067
        %v2300 = vunpack.c.l.b16 %v2069
        %v2301 = vunpack.c.l.b16 %v2071
        %v2302 = vunpack.c.l.b16 %v2073
        %v2303 = vpack.c.b16 %v2296, %v2295
        %v2304 = vpack.c.b16 %v2298, %v2297
        %v2305 = vpack.c.b16 %v2300, %v2299
        %v2306 = vpack.c.b16 %v2302, %v2301
        %v2309 = vunpack.c.l.b16 %v2285
        %v2310 = vunpack.c.l.b16 %v2286
        %v2311 = vpack.c.b16 %v2310, %v2309
        %v2314 = vsel %vm499, %v2303, 0
        %v2317 = vsel %vm499, %v2304, 0
        %v2320 = vsel %vm499, %v2305, 0
        %v2323 = vsel %vm499, %v2306, 0
        %2325 = vmatprep.subr.bf16.mxu0 0
        %2326 = vmatpush1.bf16.msra.mxu0 0
        %2327 = vmatprep.subr.bf16.mxu0 0
        %2328 = vmatpush1.bf16.msra.mxu0 0
        %2329 = vmatprep.subr.bf16.mxu0 0
        %2330 = vmatpush1.bf16.msra.mxu0 0
        %2331 = vmatprep.subr.bf16.mxu0 0
        %2332 = vmatpush1.bf16.msra.mxu0 0
        %2333 = vmatprep.subr.bf16.mxu0 0
        %2334 = vmatpush1.bf16.msra.mxu0 0
        %2335 = vmatprep.subr.bf16.mxu0 0
        %2336 = vmatpush1.bf16.msra.mxu0 0
        %2337 = vmatprep.subr.bf16.mxu0 0
        %2338 = vmatpush1.bf16.msra.mxu0 0
        %2339 = vmatprep.subr.bf16.mxu0 0
        %2340 = vmatpush1.bf16.msra.mxu0 %v2311
        %2341 = vmatprep.subr.bf16.mxu0 0
        %2342 = vmatpush2.bf16.msra.mxu0 0
        %2343 = vmatprep.subr.bf16.mxu0 0
        %2344 = vmatpush2.bf16.msra.mxu0 0
        %2345 = vmatprep.subr.bf16.mxu0 0
        %2346 = vmatpush2.bf16.msra.mxu0 0
        %2347 = vmatprep.subr.bf16.mxu0 0
        %2348 = vmatpush2.bf16.msra.mxu0 0
        %2349 = vmatprep.subr.bf16.mxu0 0
        %2350 = vmatpush2.bf16.msra.mxu0 0
        %2351 = vmatprep.subr.bf16.mxu0 0
        %2352 = vmatpush2.bf16.msra.mxu0 0
        %2353 = vmatprep.subr.bf16.mxu0 0
        %2354 = vmatpush2.bf16.msra.mxu0 0
        %2355 = vmatprep.subr.bf16.mxu0 0
        %2356 = vmatpush2.bf16.msra.mxu0 0
        %2357 = vmatprep.mubr.bf16.mxu0 0
        %2358 = vmatmul.mubr.bf16.gmra.mxu0 %v2314
        %v2359 = vpop.f32.mrf.mxu0
        %v2360 = vadd.f32 0.0, %v2359
        %v2361 = vpop.f32.mrf.mxu0
        %v2362 = vpop.f32.mrf.mxu0
        %v2363 = vadd.f32 0.0, %v2362
        %v2364 = vpop.f32.mrf.mxu0
        %2365 = vmatprep.mubr.bf16.mxu0 0
        %2366 = vmatmul.mubr.bf16.gmra.mxu0 %v2317
        %v2367 = vpop.f32.mrf.mxu0
        %v2368 = vadd.f32 0.0, %v2367
        %v2369 = vpop.f32.mrf.mxu0
        %v2370 = vpop.f32.mrf.mxu0
        %v2371 = vadd.f32 0.0, %v2370
        %v2372 = vpop.f32.mrf.mxu0
        %2373 = vmatprep.mubr.bf16.mxu0 0
        %2374 = vmatmul.mubr.bf16.gmra.mxu0 %v2320
        %v2375 = vpop.f32.mrf.mxu0
        %v2376 = vadd.f32 0.0, %v2375
        %v2377 = vpop.f32.mrf.mxu0
        %v2378 = vpop.f32.mrf.mxu0
        %v2379 = vadd.f32 0.0, %v2378
        %v2380 = vpop.f32.mrf.mxu0
        %2381 = vmatprep.mubr.bf16.mxu0 0
        %2382 = vmatmul.mubr.bf16.gmra.mxu0 %v2323
        %v2383 = vpop.f32.mrf.mxu0
        %v2384 = vadd.f32 0.0, %v2383
        %v2385 = vpop.f32.mrf.mxu0
        %v2386 = vpop.f32.mrf.mxu0
        %v2387 = vadd.f32 0.0, %v2386
        %v2388 = vpop.f32.mrf.mxu0
        %2389 = vdwg.mxu0
        %v2390 = vadd.f32 %v2276, %v2360
        %v2391 = vadd.f32 %v2277, %v2363
        %v2392 = vadd.f32 %v2278, %v2368
        %v2393 = vadd.f32 %v2279, %v2371
        %v2394 = vadd.f32 %v2280, %v2376
        %v2395 = vadd.f32 %v2281, %v2379
        %v2396 = vadd.f32 %v2282, %v2384
        %v2397 = vadd.f32 %v2283, %v2387
        %v2398 = vld [vmem:[%s2057 + $0x4] sm:$0xf]
        %v2399 = vld [vmem:[%s2057 + $0x8] sm:$0x1]
        %v2400 = vld [vmem:[%s2057 + $0x10] sm:$0xf]
        %v2401 = vld [vmem:[%s2057 + $0x14] sm:$0x1]
        %v2402 = vld [vmem:[%s2057 + $0x1c] sm:$0xf]
        %v2403 = vld [vmem:[%s2057 + $0x20] sm:$0x1]
        %v2404 = vld [vmem:[%s2057 + $0x28] sm:$0xf]
        %v2405 = vld [vmem:[%s2057 + $0x2c] sm:$0x1]
        %v2406 = vld [vmem:[%s2057 + $0x34] sm:$0xf]
        %v2407 = vld [vmem:[%s2057 + $0x38] sm:$0x1]
        %v2408 = vld [vmem:[%s2057 + $0x40] sm:$0xf]
        %v2409 = vld [vmem:[%s2057 + $0x44] sm:$0x1]
        %v2410 = vld [vmem:[%s2057 + $0x4c] sm:$0xf]
        %v2411 = vld [vmem:[%s2057 + $0x50] sm:$0x1]
        %v2412 = vld [vmem:[%s2057 + $0x58] sm:$0xf]
        %v2413 = vld [vmem:[%s2057 + $0x5c] sm:$0x1]
        %v2415 = vshrl.u32 %v2398, 16
        %v2417 = vrot.slane %v2415, 4
        %v2418 = vshll.u32 %v2398, 16
        %v2420 = vrot.slane %v2418, 5
        %v2421 = vor.u32 %v2417, %v2420
        %v2422 = vrot.slane %v2421, 4
        %v2424 = vshll.u32 %v2399, 16
        %v2426 = vrot.slane %v2424, 5
        %v2427 = vsel %vm1264, %v2422, %v2426
        %v2429 = vshrl.u32 %v2400, 16
        %v2431 = vrot.slane %v2429, 4
        %v2432 = vshll.u32 %v2400, 16
        %v2434 = vrot.slane %v2432, 5
        %v2435 = vor.u32 %v2431, %v2434
        %v2436 = vrot.slane %v2435, 4
        %v2438 = vshll.u32 %v2401, 16
        %v2440 = vrot.slane %v2438, 5
        %v2441 = vsel %vm1264, %v2436, %v2440
        %v2443 = vshrl.u32 %v2402, 16
        %v2445 = vrot.slane %v2443, 4
        %v2446 = vshll.u32 %v2402, 16
        %v2448 = vrot.slane %v2446, 5
        %v2449 = vor.u32 %v2445, %v2448
        %v2450 = vrot.slane %v2449, 4
        %v2452 = vshll.u32 %v2403, 16
        %v2454 = vrot.slane %v2452, 5
        %v2455 = vsel %vm1264, %v2450, %v2454
        %v2457 = vshrl.u32 %v2404, 16
        %v2459 = vrot.slane %v2457, 4
        %v2460 = vshll.u32 %v2404, 16
        %v2462 = vrot.slane %v2460, 5
        %v2463 = vor.u32 %v2459, %v2462
        %v2464 = vrot.slane %v2463, 4
        %v2466 = vshll.u32 %v2405, 16
        %v2468 = vrot.slane %v2466, 5
        %v2469 = vsel %vm1264, %v2464, %v2468
        %v2471 = vshrl.u32 %v2406, 16
        %v2473 = vrot.slane %v2471, 4
        %v2474 = vshll.u32 %v2406, 16
        %v2476 = vrot.slane %v2474, 5
        %v2477 = vor.u32 %v2473, %v2476
        %v2478 = vrot.slane %v2477, 4
        %v2480 = vshll.u32 %v2407, 16
        %v2482 = vrot.slane %v2480, 5
        %v2483 = vsel %vm1264, %v2478, %v2482
        %v2485 = vshrl.u32 %v2408, 16
        %v2487 = vrot.slane %v2485, 4
        %v2488 = vshll.u32 %v2408, 16
        %v2490 = vrot.slane %v2488, 5
        %v2491 = vor.u32 %v2487, %v2490
        %v2492 = vrot.slane %v2491, 4
        %v2494 = vshll.u32 %v2409, 16
        %v2496 = vrot.slane %v2494, 5
        %v2497 = vsel %vm1264, %v2492, %v2496
        %v2499 = vshrl.u32 %v2410, 16
        %v2501 = vrot.slane %v2499, 4
        %v2502 = vshll.u32 %v2410, 16
        %v2504 = vrot.slane %v2502, 5
        %v2505 = vor.u32 %v2501, %v2504
        %v2506 = vrot.slane %v2505, 4
        %v2508 = vshll.u32 %v2411, 16
        %v2510 = vrot.slane %v2508, 5
        %v2511 = vsel %vm1264, %v2506, %v2510
        %v2513 = vshrl.u32 %v2412, 16
        %v2515 = vrot.slane %v2513, 4
        %v2516 = vshll.u32 %v2412, 16
        %v2518 = vrot.slane %v2516, 5
        %v2519 = vor.u32 %v2515, %v2518
        %v2520 = vrot.slane %v2519, 4
        %v2522 = vshll.u32 %v2413, 16
        %v2524 = vrot.slane %v2522, 5
        %v2525 = vsel %vm1264, %v2520, %v2524
        %s2526 = scalar_lea.vmem %s1, 64
        %v2527 = vld [vmem:[%s2526] sm:$0xf]
        %v2528 = vld [vmem:[%s2526 + $0x4] sm:$0xf]
        %v2529 = vunpack.c.l.b16 %v2427
        %v2530 = vunpack.c.l.b16 %v2441
        %v2531 = vunpack.c.l.b16 %v2455
        %v2532 = vunpack.c.l.b16 %v2469
        %v2533 = vunpack.c.l.b16 %v2483
        %v2534 = vunpack.c.l.b16 %v2497
        %v2535 = vunpack.c.l.b16 %v2511
        %v2536 = vunpack.c.l.b16 %v2525
        %v2537 = vpack.c.b16 %v2530, %v2529
        %v2538 = vpack.c.b16 %v2532, %v2531
        %v2539 = vpack.c.b16 %v2534, %v2533
        %v2540 = vpack.c.b16 %v2536, %v2535
        %v2543 = vunpack.c.l.b16 %v2527
        %v2544 = vunpack.c.l.b16 %v2528
        %v2545 = vpack.c.b16 %v2544, %v2543
        %v2548 = vsel %vm499, %v2537, 0
        %v2551 = vsel %vm499, %v2538, 0
        %v2554 = vsel %vm499, %v2539, 0
        %v2557 = vsel %vm499, %v2540, 0
        %2559 = vmatprep.subr.bf16.mxu0 0
        %2560 = vmatpush1.bf16.msra.mxu0 0
        %2561 = vmatprep.subr.bf16.mxu0 0
        %2562 = vmatpush1.bf16.msra.mxu0 0
        %2563 = vmatprep.subr.bf16.mxu0 0
        %2564 = vmatpush1.bf16.msra.mxu0 0
        %2565 = vmatprep.subr.bf16.mxu0 0
        %2566 = vmatpush1.bf16.msra.mxu0 0
        %2567 = vmatprep.subr.bf16.mxu0 0
        %2568 = vmatpush1.bf16.msra.mxu0 0
        %2569 = vmatprep.subr.bf16.mxu0 0
        %2570 = vmatpush1.bf16.msra.mxu0 0
        %2571 = vmatprep.subr.bf16.mxu0 0
        %2572 = vmatpush1.bf16.msra.mxu0 0
        %2573 = vmatprep.subr.bf16.mxu0 0
        %2574 = vmatpush1.bf16.msra.mxu0 %v2545
        %2575 = vmatprep.subr.bf16.mxu0 0
        %2576 = vmatpush2.bf16.msra.mxu0 0
        %2577 = vmatprep.subr.bf16.mxu0 0
        %2578 = vmatpush2.bf16.msra.mxu0 0
        %2579 = vmatprep.subr.bf16.mxu0 0
        %2580 = vmatpush2.bf16.msra.mxu0 0
        %2581 = vmatprep.subr.bf16.mxu0 0
        %2582 = vmatpush2.bf16.msra.mxu0 0
        %2583 = vmatprep.subr.bf16.mxu0 0
        %2584 = vmatpush2.bf16.msra.mxu0 0
        %2585 = vmatprep.subr.bf16.mxu0 0
        %2586 = vmatpush2.bf16.msra.mxu0 0
        %2587 = vmatprep.subr.bf16.mxu0 0
        %2588 = vmatpush2.bf16.msra.mxu0 0
        %2589 = vmatprep.subr.bf16.mxu0 0
        %2590 = vmatpush2.bf16.msra.mxu0 0
        %2591 = vmatprep.mubr.bf16.mxu0 0
        %2592 = vmatmul.mubr.bf16.gmra.mxu0 %v2548
        %v2593 = vpop.f32.mrf.mxu0
        %v2594 = vadd.f32 0.0, %v2593
        %v2595 = vpop.f32.mrf.mxu0
        %v2596 = vpop.f32.mrf.mxu0
        %v2597 = vadd.f32 0.0, %v2596
        %v2598 = vpop.f32.mrf.mxu0
        %2599 = vmatprep.mubr.bf16.mxu0 0
        %2600 = vmatmul.mubr.bf16.gmra.mxu0 %v2551
        %v2601 = vpop.f32.mrf.mxu0
        %v2602 = vadd.f32 0.0, %v2601
        %v2603 = vpop.f32.mrf.mxu0
        %v2604 = vpop.f32.mrf.mxu0
        %v2605 = vadd.f32 0.0, %v2604
        %v2606 = vpop.f32.mrf.mxu0
        %2607 = vmatprep.mubr.bf16.mxu0 0
        %2608 = vmatmul.mubr.bf16.gmra.mxu0 %v2554
        %v2609 = vpop.f32.mrf.mxu0
        %v2610 = vadd.f32 0.0, %v2609
        %v2611 = vpop.f32.mrf.mxu0
        %v2612 = vpop.f32.mrf.mxu0
        %v2613 = vadd.f32 0.0, %v2612
        %v2614 = vpop.f32.mrf.mxu0
        %2615 = vmatprep.mubr.bf16.mxu0 0
        %2616 = vmatmul.mubr.bf16.gmra.mxu0 %v2557
        %v2617 = vpop.f32.mrf.mxu0
        %v2618 = vadd.f32 0.0, %v2617
        %v2619 = vpop.f32.mrf.mxu0
        %v2620 = vpop.f32.mrf.mxu0
        %v2621 = vadd.f32 0.0, %v2620
        %v2622 = vpop.f32.mrf.mxu0
        %2623 = vdwg.mxu0
        %v2624 = vadd.f32 %v2390, %v2594
        %v2625 = vadd.f32 %v2391, %v2597
        %v2626 = vadd.f32 %v2392, %v2602
        %v2627 = vadd.f32 %v2393, %v2605
        %v2628 = vadd.f32 %v2394, %v2610
        %v2629 = vadd.f32 %v2395, %v2613
        %v2630 = vadd.f32 %v2396, %v2618
        %v2631 = vadd.f32 %v2397, %v2621
        %v2632 = vld [vmem:[%s5] sm:$0x1]
        %v2633 = vld [vmem:[%s6] sm:$0x1]
        %v2634 = vsel %vm499, %v2624, 0.0
        %v2635 = vsel %vm499, %v2625, 0.0
        %v2636 = vadd.f32 %v2634, %v2635
        %v2637 = vsel %vm499, %v2626, 0.0
        %v2638 = vadd.f32 %v2636, %v2637
        %v2639 = vsel %vm499, %v2627, 0.0
        %v2640 = vadd.f32 %v2638, %v2639
        %v2641 = vsel %vm499, %v2628, 0.0
        %v2642 = vadd.f32 %v2640, %v2641
        %v2643 = vsel %vm499, %v2629, 0.0
        %v2644 = vadd.f32 %v2642, %v2643
        %v2645 = vsel %vm499, %v2630, 0.0
        %v2646 = vadd.f32 %v2644, %v2645
        %v2647 = vsel %vm499, %v2631, 0.0
        %v2648 = vadd.f32 %v2646, %v2647
        %v2649 = vrot.slane %v2648, 4
        %v2650 = vadd.f32 %v2648, %v2649
        %v2651 = vrot.slane %v2650, 2
        %v2652 = vadd.f32 %v2650, %v2651
        %v2653 = vrot.slane %v2652, 1
        %v2654 = vadd.f32 %v2652, %v2653
        %v2656 = vsel %vm499, %v2654, 0
        %2658 = vmatprep.subr.mxu0 0.0
        %2659 = vmatpush1.msra.mxu0 0.0
        %2660 = vmatprep.subr.mxu0 0.0
        %2661 = vmatpush1.msra.mxu0 0.0
        %2662 = vmatprep.subr.mxu0 0.0
        %2663 = vmatpush1.msra.mxu0 0.0
        %2664 = vmatprep.subr.mxu0 0.0
        %2665 = vmatpush1.msra.mxu0 0.0
        %2666 = vmatprep.subr.mxu0 0.0
        %2667 = vmatpush1.msra.mxu0 0.0
        %2668 = vmatprep.subr.mxu0 0.0
        %2669 = vmatpush1.msra.mxu0 0.0
        %2670 = vmatprep.subr.mxu0 0.0
        %2671 = vmatpush1.msra.mxu0 0.0
        %2672 = vmatprep.subr.mxu0 0.0
        %2673 = vmatpush1.msra.mxu0 0.0
        %2674 = vmatprep.subr.mxu0 0.0
        %2675 = vmatpush1.msra.mxu0 0.0
        %2676 = vmatprep.subr.mxu0 0.0
        %2677 = vmatpush1.msra.mxu0 0.0
        %2678 = vmatprep.subr.mxu0 0.0
        %2679 = vmatpush1.msra.mxu0 0.0
        %2680 = vmatprep.subr.mxu0 0.0
        %2681 = vmatpush1.msra.mxu0 0.0
        %2682 = vmatprep.subr.mxu0 0.0
        %2683 = vmatpush1.msra.mxu0 0.0
        %2684 = vmatprep.subr.mxu0 0.0
        %2685 = vmatpush1.msra.mxu0 0.0
        %2686 = vmatprep.subr.mxu0 0.0
        %2687 = vmatpush1.msra.mxu0 %v496
        %2688 = vmatprep.subr.mxu0 0.0
        %2689 = vmatpush1.msra.mxu0 %v495
        %2690 = vmatprep.subr.mxu0 0.0
        %2691 = vmatpush2.msra.mxu0 0.0
        %2692 = vmatprep.subr.mxu0 0.0
        %2693 = vmatpush2.msra.mxu0 0.0
        %2694 = vmatprep.subr.mxu0 0.0
        %2695 = vmatpush2.msra.mxu0 0.0
        %2696 = vmatprep.subr.mxu0 0.0
        %2697 = vmatpush2.msra.mxu0 0.0
        %2698 = vmatprep.subr.mxu0 0.0
        %2699 = vmatpush2.msra.mxu0 0.0
        %2700 = vmatprep.subr.mxu0 0.0
        %2701 = vmatpush2.msra.mxu0 0.0
        %2702 = vmatprep.subr.mxu0 0.0
        %2703 = vmatpush2.msra.mxu0 0.0
        %2704 = vmatprep.subr.mxu0 0.0
        %2705 = vmatpush2.msra.mxu0 0.0
        %2706 = vmatprep.subr.mxu0 0.0
        %2707 = vmatpush2.msra.mxu0 0.0
        %2708 = vmatprep.subr.mxu0 0.0
        %2709 = vmatpush2.msra.mxu0 0.0
        %2710 = vmatprep.subr.mxu0 0.0
        %2711 = vmatpush2.msra.mxu0 0.0
        %2712 = vmatprep.subr.mxu0 0.0
        %2713 = vmatpush2.msra.mxu0 0.0
        %2714 = vmatprep.subr.mxu0 0.0
        %2715 = vmatpush2.msra.mxu0 0.0
        %2716 = vmatprep.subr.mxu0 0.0
        %2717 = vmatpush2.msra.mxu0 0.0
        %2718 = vmatprep.subr.mxu0 0.0
        %2719 = vmatpush2.msra.mxu0 0.0
        %2720 = vmatprep.subr.mxu0 0.0
        %2721 = vmatpush2.msra.mxu0 0.0
        %2722 = vmatprep.mubr.f32.mxu0 0.0
        %2723 = vmatmul.mubr.f32.gmra.mxu0 %v2656
        %v2724 = vpop.f32.mrf.mxu0
        %v2725 = vadd.f32 0.0, %v2724
        %v2726 = vpop.f32.mrf.mxu0
        %2727 = vdwg.mxu0
        %v2728 = vlaneseq
        %v2729 = vshrl.u32 %v2728, 7
        %v2730 = vsub.s32 0, %v2729
        %v2731 = vrot.slane %v2725, %v2730
        %v2732 = vsub.f32 %v2624, %v2731
        %v2733 = vsub.f32 %v2625, %v2731
        %v2734 = vsub.f32 %v2626, %v2731
        %v2735 = vsub.f32 %v2627, %v2731
        %v2736 = vsub.f32 %v2628, %v2731
        %v2737 = vsub.f32 %v2629, %v2731
        %v2738 = vsub.f32 %v2630, %v2731
        %v2739 = vsub.f32 %v2631, %v2731
        %v2740 = vmul.f32 %v2732, %v2732
        %v2741 = vmul.f32 %v2733, %v2733
        %v2742 = vmul.f32 %v2734, %v2734
        %v2743 = vmul.f32 %v2735, %v2735
        %v2744 = vmul.f32 %v2736, %v2736
        %v2745 = vmul.f32 %v2737, %v2737
        %v2746 = vmul.f32 %v2738, %v2738
        %v2747 = vmul.f32 %v2739, %v2739
        %v2748 = vsel %vm499, %v2740, 0.0
        %v2749 = vsel %vm499, %v2741, 0.0
        %v2750 = vadd.f32 %v2748, %v2749
        %v2751 = vsel %vm499, %v2742, 0.0
        %v2752 = vadd.f32 %v2750, %v2751
        %v2753 = vsel %vm499, %v2743, 0.0
        %v2754 = vadd.f32 %v2752, %v2753
        %v2755 = vsel %vm499, %v2744, 0.0
        %v2756 = vadd.f32 %v2754, %v2755
        %v2757 = vsel %vm499, %v2745, 0.0
        %v2758 = vadd.f32 %v2756, %v2757
        %v2759 = vsel %vm499, %v2746, 0.0
        %v2760 = vadd.f32 %v2758, %v2759
        %v2761 = vsel %vm499, %v2747, 0.0
        %v2762 = vadd.f32 %v2760, %v2761
        %v2763 = vrot.slane %v2762, 4
        %v2764 = vadd.f32 %v2762, %v2763
        %v2765 = vrot.slane %v2764, 2
        %v2766 = vadd.f32 %v2764, %v2765
        %v2767 = vrot.slane %v2766, 1
        %v2768 = vadd.f32 %v2766, %v2767
        %v2770 = vsel %vm499, %v2768, 0
        %2772 = vmatprep.subr.mxu0 0.0
        %2773 = vmatpush1.msra.mxu0 0.0
        %2774 = vmatprep.subr.mxu0 0.0
        %2775 = vmatpush1.msra.mxu0 0.0
        %2776 = vmatprep.subr.mxu0 0.0
        %2777 = vmatpush1.msra.mxu0 0.0
        %2778 = vmatprep.subr.mxu0 0.0
        %2779 = vmatpush1.msra.mxu0 0.0
        %2780 = vmatprep.subr.mxu0 0.0
        %2781 = vmatpush1.msra.mxu0 0.0
        %2782 = vmatprep.subr.mxu0 0.0
        %2783 = vmatpush1.msra.mxu0 0.0
        %2784 = vmatprep.subr.mxu0 0.0
        %2785 = vmatpush1.msra.mxu0 0.0
        %2786 = vmatprep.subr.mxu0 0.0
        %2787 = vmatpush1.msra.mxu0 0.0
        %2788 = vmatprep.subr.mxu0 0.0
        %2789 = vmatpush1.msra.mxu0 0.0
        %2790 = vmatprep.subr.mxu0 0.0
        %2791 = vmatpush1.msra.mxu0 0.0
        %2792 = vmatprep.subr.mxu0 0.0
        %2793 = vmatpush1.msra.mxu0 0.0
        %2794 = vmatprep.subr.mxu0 0.0
        %2795 = vmatpush1.msra.mxu0 0.0
        %2796 = vmatprep.subr.mxu0 0.0
        %2797 = vmatpush1.msra.mxu0 0.0
        %2798 = vmatprep.subr.mxu0 0.0
        %2799 = vmatpush1.msra.mxu0 0.0
        %2800 = vmatprep.subr.mxu0 0.0
        %2801 = vmatpush1.msra.mxu0 %v496
        %2802 = vmatprep.subr.mxu0 0.0
        %2803 = vmatpush1.msra.mxu0 %v495
        %2804 = vmatprep.subr.mxu0 0.0
        %2805 = vmatpush2.msra.mxu0 0.0
        %2806 = vmatprep.subr.mxu0 0.0
        %2807 = vmatpush2.msra.mxu0 0.0
        %2808 = vmatprep.subr.mxu0 0.0
        %2809 = vmatpush2.msra.mxu0 0.0
        %2810 = vmatprep.subr.mxu0 0.0
        %2811 = vmatpush2.msra.mxu0 0.0
        %2812 = vmatprep.subr.mxu0 0.0
        %2813 = vmatpush2.msra.mxu0 0.0
        %2814 = vmatprep.subr.mxu0 0.0
        %2815 = vmatpush2.msra.mxu0 0.0
        %2816 = vmatprep.subr.mxu0 0.0
        %2817 = vmatpush2.msra.mxu0 0.0
        %2818 = vmatprep.subr.mxu0 0.0
        %2819 = vmatpush2.msra.mxu0 0.0
        %2820 = vmatprep.subr.mxu0 0.0
        %2821 = vmatpush2.msra.mxu0 0.0
        %2822 = vmatprep.subr.mxu0 0.0
        %2823 = vmatpush2.msra.mxu0 0.0
        %2824 = vmatprep.subr.mxu0 0.0
        %2825 = vmatpush2.msra.mxu0 0.0
        %2826 = vmatprep.subr.mxu0 0.0
        %2827 = vmatpush2.msra.mxu0 0.0
        %2828 = vmatprep.subr.mxu0 0.0
        %2829 = vmatpush2.msra.mxu0 0.0
        %2830 = vmatprep.subr.mxu0 0.0
        %2831 = vmatpush2.msra.mxu0 0.0
        %2832 = vmatprep.subr.mxu0 0.0
        %2833 = vmatpush2.msra.mxu0 0.0
        %2834 = vmatprep.subr.mxu0 0.0
        %2835 = vmatpush2.msra.mxu0 0.0
        %2836 = vmatprep.mubr.f32.mxu0 0.0
        %2837 = vmatmul.mubr.f32.gmra.mxu0 %v2770
        %v2838 = vpop.f32.mrf.mxu0
        %v2839 = vadd.f32 0.0001, %v2838
        %v2840 = vpop.f32.mrf.mxu0
        %2841 = vdwg.mxu0
        %v2842 = vrsqrt.pop %v2839
        %v2843 = vmul.f32 %v2842, %v2632
        %v2844 = vlaneseq
        %v2845 = vshrl.u32 %v2844, 7
        %v2846 = vsub.s32 0, %v2845
        %v2847 = vrot.slane %v2843, %v2846
        %v2848 = vmul.f32 %v2732, %v2847
        %v2849 = vmul.f32 %v2733, %v2847
        %v2850 = vmul.f32 %v2734, %v2847
        %v2851 = vmul.f32 %v2735, %v2847
        %v2852 = vmul.f32 %v2736, %v2847
        %v2853 = vmul.f32 %v2737, %v2847
        %v2854 = vmul.f32 %v2738, %v2847
        %v2855 = vmul.f32 %v2739, %v2847
        %v2857 = vlaneseq
        %v2858 = vshrl.u32 %v2857, 7
        %v2859 = vsub.s32 0, %v2858
        %v2860 = vrot.slane %v2633, %v2859
        %v2862 = vadd.f32 %v2848, %v2860
        %v2863 = vadd.f32 %v2849, %v2860
        %v2864 = vadd.f32 %v2850, %v2860
        %v2865 = vadd.f32 %v2851, %v2860
        %v2866 = vadd.f32 %v2852, %v2860
        %v2867 = vadd.f32 %v2853, %v2860
        %v2868 = vadd.f32 %v2854, %v2860
        %v2869 = vadd.f32 %v2855, %v2860
        %v2870 = vmax.f32 %v2862, 0.0
        %v2871 = vmax.f32 %v2863, 0.0
        %v2872 = vmax.f32 %v2864, 0.0
        %v2873 = vmax.f32 %v2865, 0.0
        %v2874 = vmax.f32 %v2866, 0.0
        %v2875 = vmax.f32 %v2867, 0.0
        %v2876 = vmax.f32 %v2868, 0.0
        %v2877 = vmax.f32 %v2869, 0.0
        %v2878 = vpack.c.bf16 %v2870, %v2870
        %v2879 = vpack.c.bf16 %v2871, %v2871
        %v2880 = vpack.c.bf16 %v2872, %v2872
        %v2881 = vpack.c.bf16 %v2873, %v2873
        %v2882 = vpack.c.bf16 %v2874, %v2874
        %v2883 = vpack.c.bf16 %v2875, %v2875
        %v2884 = vpack.c.bf16 %v2876, %v2876
        %v2885 = vpack.c.bf16 %v2877, %v2877
        %2886 = vst.msk [vmem:[%s752 + $0x4] sm:$0xf] %vm413, %v2878
        %2887 = vst.msk [vmem:[%s752 + $0x10] sm:$0xf] %vm413, %v2879
        %2888 = vst.msk [vmem:[%s752 + $0x1c] sm:$0xf] %vm413, %v2880
        %2889 = vst.msk [vmem:[%s752 + $0x28] sm:$0xf] %vm413, %v2881
        %2890 = vst.msk [vmem:[%s752 + $0x34] sm:$0xf] %vm413, %v2882
        %2891 = vst.msk [vmem:[%s752 + $0x40] sm:$0xf] %vm413, %v2883
        %2892 = vst.msk [vmem:[%s752 + $0x4c] sm:$0xf] %vm413, %v2884
        %2893 = vst.msk [vmem:[%s752 + $0x58] sm:$0xf] %vm413, %v2885
        %v2894 = vld [vmem:[%s10] sm:$0x7]
        %v2895 = vld [vmem:[%s10 + $0x4] sm:$0x7]
        %v2896 = vld [vmem:[%s10 + $0x8] sm:$0x7]
        %v2897 = vld [vmem:[%s10 + $0xc] sm:$0x7]
        %v2898 = vld [vmem:[%s10 + $0x10] sm:$0x7]
        %v2899 = vld [vmem:[%s10 + $0x14] sm:$0x7]
        %v2900 = vld [vmem:[%s10 + $0x18] sm:$0x7]
        %v2901 = vld [vmem:[%s10 + $0x1c] sm:$0x7]
        %v2902 = vld [vmem:[%s11] sm:$0xff]
        %v2903 = vld [vmem:[%s11 + $0x8] sm:$0xff]
        %v2904 = vld [vmem:[%s11 + $0x10] sm:$0xff]
        %v2905 = vlaneseq
        %v2906 = vshrl.u32 %v2905, 7
        %v2907 = vsub.s32 2, %v2906
        %v2908 = vrot.slane %v2894, %v2907
        %v2909 = vlaneseq
        %v2910 = vshrl.u32 %v2909, 7
        %v2911 = vsub.s32 2, %v2910
        %v2912 = vrot.slane %v2895, %v2911
        %v2913 = vlaneseq
        %v2914 = vshrl.u32 %v2913, 7
        %v2915 = vsub.s32 2, %v2914
        %v2916 = vrot.slane %v2896, %v2915
        %v2917 = vlaneseq
        %v2918 = vshrl.u32 %v2917, 7
        %v2919 = vsub.s32 2, %v2918
        %v2920 = vrot.slane %v2897, %v2919
        %v2921 = vlaneseq
        %v2922 = vshrl.u32 %v2921, 7
        %v2923 = vsub.s32 2, %v2922
        %v2924 = vrot.slane %v2898, %v2923
        %v2925 = vlaneseq
        %v2926 = vshrl.u32 %v2925, 7
        %v2927 = vsub.s32 2, %v2926
        %v2928 = vrot.slane %v2899, %v2927
        %v2929 = vlaneseq
        %v2930 = vshrl.u32 %v2929, 7
        %v2931 = vsub.s32 2, %v2930
        %v2932 = vrot.slane %v2900, %v2931
        %v2933 = vlaneseq
        %v2934 = vshrl.u32 %v2933, 7
        %v2935 = vsub.s32 2, %v2934
        %v2936 = vrot.slane %v2901, %v2935
        %v2937 = vlaneseq
        %v2938 = vshrl.u32 %v2937, 7
        %v2939 = vsub.s32 1, %v2938
        %v2940 = vrot.slane %v2894, %v2939
        %v2941 = vlaneseq
        %v2942 = vshrl.u32 %v2941, 7
        %v2943 = vsub.s32 1, %v2942
        %v2944 = vrot.slane %v2895, %v2943
        %v2945 = vlaneseq
        %v2946 = vshrl.u32 %v2945, 7
        %v2947 = vsub.s32 1, %v2946
        %v2948 = vrot.slane %v2896, %v2947
        %v2949 = vlaneseq
        %v2950 = vshrl.u32 %v2949, 7
        %v2951 = vsub.s32 1, %v2950
        %v2952 = vrot.slane %v2897, %v2951
        %v2953 = vlaneseq
        %v2954 = vshrl.u32 %v2953, 7
        %v2955 = vsub.s32 1, %v2954
        %v2956 = vrot.slane %v2898, %v2955
        %v2957 = vlaneseq
        %v2958 = vshrl.u32 %v2957, 7
        %v2959 = vsub.s32 1, %v2958
        %v2960 = vrot.slane %v2899, %v2959
        %v2961 = vlaneseq
        %v2962 = vshrl.u32 %v2961, 7
        %v2963 = vsub.s32 1, %v2962
        %v2964 = vrot.slane %v2900, %v2963
        %v2965 = vlaneseq
        %v2966 = vshrl.u32 %v2965, 7
        %v2967 = vsub.s32 1, %v2966
        %v2968 = vrot.slane %v2901, %v2967
        %v2969 = vsel %vm777, %v2908, %v2940
        %v2970 = vsel %vm777, %v2912, %v2944
        %v2971 = vsel %vm777, %v2916, %v2948
        %v2972 = vsel %vm777, %v2920, %v2952
        %v2973 = vsel %vm777, %v2924, %v2956
        %v2974 = vsel %vm777, %v2928, %v2960
        %v2975 = vsel %vm777, %v2932, %v2964
        %v2976 = vsel %vm777, %v2936, %v2968
        %v2977 = vlaneseq
        %v2978 = vshrl.u32 %v2977, 7
        %v2979 = vsub.s32 0, %v2978
        %v2980 = vrot.slane %v2894, %v2979
        %v2981 = vlaneseq
        %v2982 = vshrl.u32 %v2981, 7
        %v2983 = vsub.s32 0, %v2982
        %v2984 = vrot.slane %v2895, %v2983
        %v2985 = vlaneseq
        %v2986 = vshrl.u32 %v2985, 7
        %v2987 = vsub.s32 0, %v2986
        %v2988 = vrot.slane %v2896, %v2987
        %v2989 = vlaneseq
        %v2990 = vshrl.u32 %v2989, 7
        %v2991 = vsub.s32 0, %v2990
        %v2992 = vrot.slane %v2897, %v2991
        %v2993 = vlaneseq
        %v2994 = vshrl.u32 %v2993, 7
        %v2995 = vsub.s32 0, %v2994
        %v2996 = vrot.slane %v2898, %v2995
        %v2997 = vlaneseq
        %v2998 = vshrl.u32 %v2997, 7
        %v2999 = vsub.s32 0, %v2998
        %v3000 = vrot.slane %v2899, %v2999
        %v3001 = vlaneseq
        %v3002 = vshrl.u32 %v3001, 7
        %v3003 = vsub.s32 0, %v3002
        %v3004 = vrot.slane %v2900, %v3003
        %v3005 = vlaneseq
        %v3006 = vshrl.u32 %v3005, 7
        %v3007 = vsub.s32 0, %v3006
        %v3008 = vrot.slane %v2901, %v3007
        %v3009 = vsel %vm851, %v2980, %v2969
        %v3010 = vsel %vm851, %v2984, %v2970
        %v3011 = vsel %vm851, %v2988, %v2971
        %v3012 = vsel %vm851, %v2992, %v2972
        %v3013 = vsel %vm851, %v2996, %v2973
        %v3014 = vsel %vm851, %v3000, %v2974
        %v3015 = vsel %vm851, %v3004, %v2975
        %v3016 = vsel %vm851, %v3008, %v2976
        %v3017 = vsel 0, %v2904, %v2903
        %v3018 = vsel 1, %v2904, %v2903
        %v3019 = vsel 1, %v2902, %v3017
        %v3020 = vsel 0, %v2902, %v3017
        %v3021 = vsel 0, %v2902, %v3018
        %v3022 = vadd.f32 %v3009, %v3019
        %v3023 = vadd.f32 %v3010, %v3020
        %v3024 = vadd.f32 %v3011, %v3020
        %v3025 = vadd.f32 %v3012, %v3020
        %v3026 = vadd.f32 %v3013, %v3020
        %v3027 = vadd.f32 %v3014, %v3020
        %v3028 = vadd.f32 %v3015, %v3020
        %v3029 = vadd.f32 %v3016, %v3021
        %v3030 = vld [vmem:[#allocation2] sm:$0x8]
        %v3031 = vld [vmem:[#allocation2 + $0x4] sm:$0xf]
        %v3032 = vld [vmem:[#allocation2 + $0xc] sm:$0x8]
        %v3033 = vld [vmem:[#allocation2 + $0x10] sm:$0xf]
        %v3034 = vld [vmem:[#allocation2 + $0x18] sm:$0x8]
        %v3035 = vld [vmem:[#allocation2 + $0x1c] sm:$0xf]
        %v3036 = vld [vmem:[#allocation2 + $0x24] sm:$0x8]
        %v3037 = vld [vmem:[#allocation2 + $0x28] sm:$0xf]
        %v3038 = vld [vmem:[#allocation2 + $0x30] sm:$0x8]
        %v3039 = vld [vmem:[#allocation2 + $0x34] sm:$0xf]
        %v3040 = vld [vmem:[#allocation2 + $0x3c] sm:$0x8]
        %v3041 = vld [vmem:[#allocation2 + $0x40] sm:$0xf]
        %v3042 = vld [vmem:[#allocation2 + $0x48] sm:$0x8]
        %v3043 = vld [vmem:[#allocation2 + $0x4c] sm:$0xf]
        %v3044 = vld [vmem:[#allocation2 + $0x54] sm:$0x8]
        %v3045 = vld [vmem:[#allocation2 + $0x58] sm:$0xf]
        %v3047 = vshrl.u32 %v3030, 16
        %v3049 = vrot.slane %v3047, 7
        %v3050 = vrot.slane %v3049, 4
        %v3052 = vshrl.u32 %v3031, 16
        %v3054 = vrot.slane %v3052, 7
        %v3055 = vshll.u32 %v3031, 16
        %v3057 = vor.u32 %v3054, %v3055
        %v3058 = vsel %vm922, %v3050, %v3057
        %v3060 = vshrl.u32 %v3032, 16
        %v3062 = vrot.slane %v3060, 7
        %v3063 = vrot.slane %v3062, 4
        %v3065 = vshrl.u32 %v3033, 16
        %v3067 = vrot.slane %v3065, 7
        %v3068 = vshll.u32 %v3033, 16
        %v3070 = vor.u32 %v3067, %v3068
        %v3071 = vsel %vm922, %v3063, %v3070
        %v3073 = vshrl.u32 %v3034, 16
        %v3075 = vrot.slane %v3073, 7
        %v3076 = vrot.slane %v3075, 4
        %v3078 = vshrl.u32 %v3035, 16
        %v3080 = vrot.slane %v3078, 7
        %v3081 = vshll.u32 %v3035, 16
        %v3083 = vor.u32 %v3080, %v3081
        %v3084 = vsel %vm922, %v3076, %v3083
        %v3086 = vshrl.u32 %v3036, 16
        %v3088 = vrot.slane %v3086, 7
        %v3089 = vrot.slane %v3088, 4
        %v3091 = vshrl.u32 %v3037, 16
        %v3093 = vrot.slane %v3091, 7
        %v3094 = vshll.u32 %v3037, 16
        %v3096 = vor.u32 %v3093, %v3094
        %v3097 = vsel %vm922, %v3089, %v3096
        %v3099 = vshrl.u32 %v3038, 16
        %v3101 = vrot.slane %v3099, 7
        %v3102 = vrot.slane %v3101, 4
        %v3104 = vshrl.u32 %v3039, 16
        %v3106 = vrot.slane %v3104, 7
        %v3107 = vshll.u32 %v3039, 16
        %v3109 = vor.u32 %v3106, %v3107
        %v3110 = vsel %vm922, %v3102, %v3109
        %v3112 = vshrl.u32 %v3040, 16
        %v3114 = vrot.slane %v3112, 7
        %v3115 = vrot.slane %v3114, 4
        %v3117 = vshrl.u32 %v3041, 16
        %v3119 = vrot.slane %v3117, 7
        %v3120 = vshll.u32 %v3041, 16
        %v3122 = vor.u32 %v3119, %v3120
        %v3123 = vsel %vm922, %v3115, %v3122
        %v3125 = vshrl.u32 %v3042, 16
        %v3127 = vrot.slane %v3125, 7
        %v3128 = vrot.slane %v3127, 4
        %v3130 = vshrl.u32 %v3043, 16
        %v3132 = vrot.slane %v3130, 7
        %v3133 = vshll.u32 %v3043, 16
        %v3135 = vor.u32 %v3132, %v3133
        %v3136 = vsel %vm922, %v3128, %v3135
        %v3138 = vshrl.u32 %v3044, 16
        %v3140 = vrot.slane %v3138, 7
        %v3141 = vrot.slane %v3140, 4
        %v3143 = vshrl.u32 %v3045, 16
        %v3145 = vrot.slane %v3143, 7
        %v3146 = vshll.u32 %v3045, 16
        %v3148 = vor.u32 %v3145, %v3146
        %v3149 = vsel %vm922, %v3141, %v3148
        %v3150 = vld [vmem:[%s2] sm:$0xf]
        %v3151 = vld [vmem:[%s2 + $0x4] sm:$0xf]
        %v3152 = vunpack.c.l.b16 %v3058
        %v3153 = vunpack.c.l.b16 %v3071
        %v3154 = vunpack.c.l.b16 %v3084
        %v3155 = vunpack.c.l.b16 %v3097
        %v3156 = vunpack.c.l.b16 %v3110
        %v3157 = vunpack.c.l.b16 %v3123
        %v3158 = vunpack.c.l.b16 %v3136
        %v3159 = vunpack.c.l.b16 %v3149
        %v3160 = vpack.c.b16 %v3153, %v3152
        %v3161 = vpack.c.b16 %v3155, %v3154
        %v3162 = vpack.c.b16 %v3157, %v3156
        %v3163 = vpack.c.b16 %v3159, %v3158
        %v3166 = vunpack.c.l.b16 %v3150
        %v3167 = vunpack.c.l.b16 %v3151
        %v3168 = vpack.c.b16 %v3167, %v3166
        %v3171 = vsel %vm499, %v3160, 0
        %v3174 = vsel %vm499, %v3161, 0
        %v3177 = vsel %vm499, %v3162, 0
        %v3180 = vsel %vm499, %v3163, 0
        %3182 = vmatprep.subr.bf16.mxu0 0
        %3183 = vmatpush1.bf16.msra.mxu0 0
        %3184 = vmatprep.subr.bf16.mxu0 0
        %3185 = vmatpush1.bf16.msra.mxu0 0
        %3186 = vmatprep.subr.bf16.mxu0 0
        %3187 = vmatpush1.bf16.msra.mxu0 0
        %3188 = vmatprep.subr.bf16.mxu0 0
        %3189 = vmatpush1.bf16.msra.mxu0 0
        %3190 = vmatprep.subr.bf16.mxu0 0
        %3191 = vmatpush1.bf16.msra.mxu0 0
        %3192 = vmatprep.subr.bf16.mxu0 0
        %3193 = vmatpush1.bf16.msra.mxu0 0
        %3194 = vmatprep.subr.bf16.mxu0 0
        %3195 = vmatpush1.bf16.msra.mxu0 0
        %3196 = vmatprep.subr.bf16.mxu0 0
        %3197 = vmatpush1.bf16.msra.mxu0 %v3168
        %3198 = vmatprep.subr.bf16.mxu0 0
        %3199 = vmatpush2.bf16.msra.mxu0 0
        %3200 = vmatprep.subr.bf16.mxu0 0
        %3201 = vmatpush2.bf16.msra.mxu0 0
        %3202 = vmatprep.subr.bf16.mxu0 0
        %3203 = vmatpush2.bf16.msra.mxu0 0
        %3204 = vmatprep.subr.bf16.mxu0 0
        %3205 = vmatpush2.bf16.msra.mxu0 0
        %3206 = vmatprep.subr.bf16.mxu0 0
        %3207 = vmatpush2.bf16.msra.mxu0 0
        %3208 = vmatprep.subr.bf16.mxu0 0
        %3209 = vmatpush2.bf16.msra.mxu0 0
        %3210 = vmatprep.subr.bf16.mxu0 0
        %3211 = vmatpush2.bf16.msra.mxu0 0
        %3212 = vmatprep.subr.bf16.mxu0 0
        %3213 = vmatpush2.bf16.msra.mxu0 0
        %3214 = vmatprep.mubr.bf16.mxu0 0
        %3215 = vmatmul.mubr.bf16.gmra.mxu0 %v3171
        %v3216 = vpop.f32.mrf.mxu0
        %v3217 = vadd.f32 0.0, %v3216
        %v3218 = vpop.f32.mrf.mxu0
        %v3219 = vpop.f32.mrf.mxu0
        %v3220 = vadd.f32 0.0, %v3219
        %v3221 = vpop.f32.mrf.mxu0
        %3222 = vmatprep.mubr.bf16.mxu0 0
        %3223 = vmatmul.mubr.bf16.gmra.mxu0 %v3174
        %v3224 = vpop.f32.mrf.mxu0
        %v3225 = vadd.f32 0.0, %v3224
        %v3226 = vpop.f32.mrf.mxu0
        %v3227 = vpop.f32.mrf.mxu0
        %v3228 = vadd.f32 0.0, %v3227
        %v3229 = vpop.f32.mrf.mxu0
        %3230 = vmatprep.mubr.bf16.mxu0 0
        %3231 = vmatmul.mubr.bf16.gmra.mxu0 %v3177
        %v3232 = vpop.f32.mrf.mxu0
        %v3233 = vadd.f32 0.0, %v3232
        %v3234 = vpop.f32.mrf.mxu0
        %v3235 = vpop.f32.mrf.mxu0
        %v3236 = vadd.f32 0.0, %v3235
        %v3237 = vpop.f32.mrf.mxu0
        %3238 = vmatprep.mubr.bf16.mxu0 0
        %3239 = vmatmul.mubr.bf16.gmra.mxu0 %v3180
        %v3240 = vpop.f32.mrf.mxu0
        %v3241 = vadd.f32 0.0, %v3240
        %v3242 = vpop.f32.mrf.mxu0
        %v3243 = vpop.f32.mrf.mxu0
        %v3244 = vadd.f32 0.0, %v3243
        %v3245 = vpop.f32.mrf.mxu0
        %3246 = vdwg.mxu0
        %v3247 = vadd.f32 %v3022, %v3217
        %v3248 = vadd.f32 %v3023, %v3220
        %v3249 = vadd.f32 %v3024, %v3225
        %v3250 = vadd.f32 %v3025, %v3228
        %v3251 = vadd.f32 %v3026, %v3233
        %v3252 = vadd.f32 %v3027, %v3236
        %v3253 = vadd.f32 %v3028, %v3241
        %v3254 = vadd.f32 %v3029, %v3244
        %s3255 = scalar_lea.vmem %s2, 8
        %v3256 = vld [vmem:[%s3255] sm:$0xf]
        %v3257 = vld [vmem:[%s3255 + $0x4] sm:$0xf]
        %v3266 = vunpack.c.l.b16 %v3031
        %v3267 = vunpack.c.l.b16 %v3033
        %v3268 = vunpack.c.l.b16 %v3035
        %v3269 = vunpack.c.l.b16 %v3037
        %v3270 = vunpack.c.l.b16 %v3039
        %v3271 = vunpack.c.l.b16 %v3041
        %v3272 = vunpack.c.l.b16 %v3043
        %v3273 = vunpack.c.l.b16 %v3045
        %v3274 = vpack.c.b16 %v3267, %v3266
        %v3275 = vpack.c.b16 %v3269, %v3268
        %v3276 = vpack.c.b16 %v3271, %v3270
        %v3277 = vpack.c.b16 %v3273, %v3272
        %v3280 = vunpack.c.l.b16 %v3256
        %v3281 = vunpack.c.l.b16 %v3257
        %v3282 = vpack.c.b16 %v3281, %v3280
        %v3285 = vsel %vm499, %v3274, 0
        %v3288 = vsel %vm499, %v3275, 0
        %v3291 = vsel %vm499, %v3276, 0
        %v3294 = vsel %vm499, %v3277, 0
        %3296 = vmatprep.subr.bf16.mxu0 0
        %3297 = vmatpush1.bf16.msra.mxu0 0
        %3298 = vmatprep.subr.bf16.mxu0 0
        %3299 = vmatpush1.bf16.msra.mxu0 0
        %3300 = vmatprep.subr.bf16.mxu0 0
        %3301 = vmatpush1.bf16.msra.mxu0 0
        %3302 = vmatprep.subr.bf16.mxu0 0
        %3303 = vmatpush1.bf16.msra.mxu0 0
        %3304 = vmatprep.subr.bf16.mxu0 0
        %3305 = vmatpush1.bf16.msra.mxu0 0
        %3306 = vmatprep.subr.bf16.mxu0 0
        %3307 = vmatpush1.bf16.msra.mxu0 0
        %3308 = vmatprep.subr.bf16.mxu0 0
        %3309 = vmatpush1.bf16.msra.mxu0 0
        %3310 = vmatprep.subr.bf16.mxu0 0
        %3311 = vmatpush1.bf16.msra.mxu0 %v3282
        %3312 = vmatprep.subr.bf16.mxu0 0
        %3313 = vmatpush2.bf16.msra.mxu0 0
        %3314 = vmatprep.subr.bf16.mxu0 0
        %3315 = vmatpush2.bf16.msra.mxu0 0
        %3316 = vmatprep.subr.bf16.mxu0 0
        %3317 = vmatpush2.bf16.msra.mxu0 0
        %3318 = vmatprep.subr.bf16.mxu0 0
        %3319 = vmatpush2.bf16.msra.mxu0 0
        %3320 = vmatprep.subr.bf16.mxu0 0
        %3321 = vmatpush2.bf16.msra.mxu0 0
        %3322 = vmatprep.subr.bf16.mxu0 0
        %3323 = vmatpush2.bf16.msra.mxu0 0
        %3324 = vmatprep.subr.bf16.mxu0 0
        %3325 = vmatpush2.bf16.msra.mxu0 0
        %3326 = vmatprep.subr.bf16.mxu0 0
        %3327 = vmatpush2.bf16.msra.mxu0 0
        %3328 = vmatprep.mubr.bf16.mxu0 0
        %3329 = vmatmul.mubr.bf16.gmra.mxu0 %v3285
        %v3330 = vpop.f32.mrf.mxu0
        %v3331 = vadd.f32 0.0, %v3330
        %v3332 = vpop.f32.mrf.mxu0
        %v3333 = vpop.f32.mrf.mxu0
        %v3334 = vadd.f32 0.0, %v3333
        %v3335 = vpop.f32.mrf.mxu0
        %3336 = vmatprep.mubr.bf16.mxu0 0
        %3337 = vmatmul.mubr.bf16.gmra.mxu0 %v3288
        %v3338 = vpop.f32.mrf.mxu0
        %v3339 = vadd.f32 0.0, %v3338
        %v3340 = vpop.f32.mrf.mxu0
        %v3341 = vpop.f32.mrf.mxu0
        %v3342 = vadd.f32 0.0, %v3341
        %v3343 = vpop.f32.mrf.mxu0
        %3344 = vmatprep.mubr.bf16.mxu0 0
        %3345 = vmatmul.mubr.bf16.gmra.mxu0 %v3291
        %v3346 = vpop.f32.mrf.mxu0
        %v3347 = vadd.f32 0.0, %v3346
        %v3348 = vpop.f32.mrf.mxu0
        %v3349 = vpop.f32.mrf.mxu0
        %v3350 = vadd.f32 0.0, %v3349
        %v3351 = vpop.f32.mrf.mxu0
        %3352 = vmatprep.mubr.bf16.mxu0 0
        %3353 = vmatmul.mubr.bf16.gmra.mxu0 %v3294
        %v3354 = vpop.f32.mrf.mxu0
        %v3355 = vadd.f32 0.0, %v3354
        %v3356 = vpop.f32.mrf.mxu0
        %v3357 = vpop.f32.mrf.mxu0
        %v3358 = vadd.f32 0.0, %v3357
        %v3359 = vpop.f32.mrf.mxu0
        %3360 = vdwg.mxu0
        %v3361 = vadd.f32 %v3247, %v3331
        %v3362 = vadd.f32 %v3248, %v3334
        %v3363 = vadd.f32 %v3249, %v3339
        %v3364 = vadd.f32 %v3250, %v3342
        %v3365 = vadd.f32 %v3251, %v3347
        %v3366 = vadd.f32 %v3252, %v3350
        %v3367 = vadd.f32 %v3253, %v3355
        %v3368 = vadd.f32 %v3254, %v3358
        %v3369 = vld [vmem:[#allocation2 + $0x4] sm:$0xf]
        %v3370 = vld [vmem:[#allocation2 + $0x8] sm:$0x1]
        %v3371 = vld [vmem:[#allocation2 + $0x10] sm:$0xf]
        %v3372 = vld [vmem:[#allocation2 + $0x14] sm:$0x1]
        %v3373 = vld [vmem:[#allocation2 + $0x1c] sm:$0xf]
        %v3374 = vld [vmem:[#allocation2 + $0x20] sm:$0x1]
        %v3375 = vld [vmem:[#allocation2 + $0x28] sm:$0xf]
        %v3376 = vld [vmem:[#allocation2 + $0x2c] sm:$0x1]
        %v3377 = vld [vmem:[#allocation2 + $0x34] sm:$0xf]
        %v3378 = vld [vmem:[#allocation2 + $0x38] sm:$0x1]
        %v3379 = vld [vmem:[#allocation2 + $0x40] sm:$0xf]
        %v3380 = vld [vmem:[#allocation2 + $0x44] sm:$0x1]
        %v3381 = vld [vmem:[#allocation2 + $0x4c] sm:$0xf]
        %v3382 = vld [vmem:[#allocation2 + $0x50] sm:$0x1]
        %v3383 = vld [vmem:[#allocation2 + $0x58] sm:$0xf]
        %v3384 = vld [vmem:[#allocation2 + $0x5c] sm:$0x1]
        %v3386 = vshrl.u32 %v3369, 16
        %v3388 = vrot.slane %v3386, 4
        %v3389 = vshll.u32 %v3369, 16
        %v3391 = vrot.slane %v3389, 5
        %v3392 = vor.u32 %v3388, %v3391
        %v3393 = vrot.slane %v3392, 4
        %v3395 = vshll.u32 %v3370, 16
        %v3397 = vrot.slane %v3395, 5
        %v3398 = vsel %vm1264, %v3393, %v3397
        %v3400 = vshrl.u32 %v3371, 16
        %v3402 = vrot.slane %v3400, 4
        %v3403 = vshll.u32 %v3371, 16
        %v3405 = vrot.slane %v3403, 5
        %v3406 = vor.u32 %v3402, %v3405
        %v3407 = vrot.slane %v3406, 4
        %v3409 = vshll.u32 %v3372, 16
        %v3411 = vrot.slane %v3409, 5
        %v3412 = vsel %vm1264, %v3407, %v3411
        %v3414 = vshrl.u32 %v3373, 16
        %v3416 = vrot.slane %v3414, 4
        %v3417 = vshll.u32 %v3373, 16
        %v3419 = vrot.slane %v3417, 5
        %v3420 = vor.u32 %v3416, %v3419
        %v3421 = vrot.slane %v3420, 4
        %v3423 = vshll.u32 %v3374, 16
        %v3425 = vrot.slane %v3423, 5
        %v3426 = vsel %vm1264, %v3421, %v3425
        %v3428 = vshrl.u32 %v3375, 16
        %v3430 = vrot.slane %v3428, 4
        %v3431 = vshll.u32 %v3375, 16
        %v3433 = vrot.slane %v3431, 5
        %v3434 = vor.u32 %v3430, %v3433
        %v3435 = vrot.slane %v3434, 4
        %v3437 = vshll.u32 %v3376, 16
        %v3439 = vrot.slane %v3437, 5
        %v3440 = vsel %vm1264, %v3435, %v3439
        %v3442 = vshrl.u32 %v3377, 16
        %v3444 = vrot.slane %v3442, 4
        %v3445 = vshll.u32 %v3377, 16
        %v3447 = vrot.slane %v3445, 5
        %v3448 = vor.u32 %v3444, %v3447
        %v3449 = vrot.slane %v3448, 4
        %v3451 = vshll.u32 %v3378, 16
        %v3453 = vrot.slane %v3451, 5
        %v3454 = vsel %vm1264, %v3449, %v3453
        %v3456 = vshrl.u32 %v3379, 16
        %v3458 = vrot.slane %v3456, 4
        %v3459 = vshll.u32 %v3379, 16
        %v3461 = vrot.slane %v3459, 5
        %v3462 = vor.u32 %v3458, %v3461
        %v3463 = vrot.slane %v3462, 4
        %v3465 = vshll.u32 %v3380, 16
        %v3467 = vrot.slane %v3465, 5
        %v3468 = vsel %vm1264, %v3463, %v3467
        %v3470 = vshrl.u32 %v3381, 16
        %v3472 = vrot.slane %v3470, 4
        %v3473 = vshll.u32 %v3381, 16
        %v3475 = vrot.slane %v3473, 5
        %v3476 = vor.u32 %v3472, %v3475
        %v3477 = vrot.slane %v3476, 4
        %v3479 = vshll.u32 %v3382, 16
        %v3481 = vrot.slane %v3479, 5
        %v3482 = vsel %vm1264, %v3477, %v3481
        %v3484 = vshrl.u32 %v3383, 16
        %v3486 = vrot.slane %v3484, 4
        %v3487 = vshll.u32 %v3383, 16
        %v3489 = vrot.slane %v3487, 5
        %v3490 = vor.u32 %v3486, %v3489
        %v3491 = vrot.slane %v3490, 4
        %v3493 = vshll.u32 %v3384, 16
        %v3495 = vrot.slane %v3493, 5
        %v3496 = vsel %vm1264, %v3491, %v3495
        %s3497 = scalar_lea.vmem %s2, 16
        %v3498 = vld [vmem:[%s3497] sm:$0xf]
        %v3499 = vld [vmem:[%s3497 + $0x4] sm:$0xf]
        %v3500 = vunpack.c.l.b16 %v3398
        %v3501 = vunpack.c.l.b16 %v3412
        %v3502 = vunpack.c.l.b16 %v3426
        %v3503 = vunpack.c.l.b16 %v3440
        %v3504 = vunpack.c.l.b16 %v3454
        %v3505 = vunpack.c.l.b16 %v3468
        %v3506 = vunpack.c.l.b16 %v3482
        %v3507 = vunpack.c.l.b16 %v3496
        %v3508 = vpack.c.b16 %v3501, %v3500
        %v3509 = vpack.c.b16 %v3503, %v3502
        %v3510 = vpack.c.b16 %v3505, %v3504
        %v3511 = vpack.c.b16 %v3507, %v3506
        %v3514 = vunpack.c.l.b16 %v3498
        %v3515 = vunpack.c.l.b16 %v3499
        %v3516 = vpack.c.b16 %v3515, %v3514
        %v3519 = vsel %vm499, %v3508, 0
        %v3522 = vsel %vm499, %v3509, 0
        %v3525 = vsel %vm499, %v3510, 0
        %v3528 = vsel %vm499, %v3511, 0
        %3530 = vmatprep.subr.bf16.mxu0 0
        %3531 = vmatpush1.bf16.msra.mxu0 0
        %3532 = vmatprep.subr.bf16.mxu0 0
        %3533 = vmatpush1.bf16.msra.mxu0 0
        %3534 = vmatprep.subr.bf16.mxu0 0
        %3535 = vmatpush1.bf16.msra.mxu0 0
        %3536 = vmatprep.subr.bf16.mxu0 0
        %3537 = vmatpush1.bf16.msra.mxu0 0
        %3538 = vmatprep.subr.bf16.mxu0 0
        %3539 = vmatpush1.bf16.msra.mxu0 0
        %3540 = vmatprep.subr.bf16.mxu0 0
        %3541 = vmatpush1.bf16.msra.mxu0 0
        %3542 = vmatprep.subr.bf16.mxu0 0
        %3543 = vmatpush1.bf16.msra.mxu0 0
        %3544 = vmatprep.subr.bf16.mxu0 0
        %3545 = vmatpush1.bf16.msra.mxu0 %v3516
        %3546 = vmatprep.subr.bf16.mxu0 0
        %3547 = vmatpush2.bf16.msra.mxu0 0
        %3548 = vmatprep.subr.bf16.mxu0 0
        %3549 = vmatpush2.bf16.msra.mxu0 0
        %3550 = vmatprep.subr.bf16.mxu0 0
        %3551 = vmatpush2.bf16.msra.mxu0 0
        %3552 = vmatprep.subr.bf16.mxu0 0
        %3553 = vmatpush2.bf16.msra.mxu0 0
        %3554 = vmatprep.subr.bf16.mxu0 0
        %3555 = vmatpush2.bf16.msra.mxu0 0
        %3556 = vmatprep.subr.bf16.mxu0 0
        %3557 = vmatpush2.bf16.msra.mxu0 0
        %3558 = vmatprep.subr.bf16.mxu0 0
        %3559 = vmatpush2.bf16.msra.mxu0 0
        %3560 = vmatprep.subr.bf16.mxu0 0
        %3561 = vmatpush2.bf16.msra.mxu0 0
        %3562 = vmatprep.mubr.bf16.mxu0 0
        %3563 = vmatmul.mubr.bf16.gmra.mxu0 %v3519
        %v3564 = vpop.f32.mrf.mxu0
        %v3565 = vadd.f32 0.0, %v3564
        %v3566 = vpop.f32.mrf.mxu0
        %v3567 = vpop.f32.mrf.mxu0
        %v3568 = vadd.f32 0.0, %v3567
        %v3569 = vpop.f32.mrf.mxu0
        %3570 = vmatprep.mubr.bf16.mxu0 0
        %3571 = vmatmul.mubr.bf16.gmra.mxu0 %v3522
        %v3572 = vpop.f32.mrf.mxu0
        %v3573 = vadd.f32 0.0, %v3572
        %v3574 = vpop.f32.mrf.mxu0
        %v3575 = vpop.f32.mrf.mxu0
        %v3576 = vadd.f32 0.0, %v3575
        %v3577 = vpop.f32.mrf.mxu0
        %3578 = vmatprep.mubr.bf16.mxu0 0
        %3579 = vmatmul.mubr.bf16.gmra.mxu0 %v3525
        %v3580 = vpop.f32.mrf.mxu0
        %v3581 = vadd.f32 0.0, %v3580
        %v3582 = vpop.f32.mrf.mxu0
        %v3583 = vpop.f32.mrf.mxu0
        %v3584 = vadd.f32 0.0, %v3583
        %v3585 = vpop.f32.mrf.mxu0
        %3586 = vmatprep.mubr.bf16.mxu0 0
        %3587 = vmatmul.mubr.bf16.gmra.mxu0 %v3528
        %v3588 = vpop.f32.mrf.mxu0
        %v3589 = vadd.f32 0.0, %v3588
        %v3590 = vpop.f32.mrf.mxu0
        %v3591 = vpop.f32.mrf.mxu0
        %v3592 = vadd.f32 0.0, %v3591
        %v3593 = vpop.f32.mrf.mxu0
        %3594 = vdwg.mxu0
        %v3595 = vadd.f32 %v3361, %v3565
        %v3596 = vadd.f32 %v3362, %v3568
        %v3597 = vadd.f32 %v3363, %v3573
        %v3598 = vadd.f32 %v3364, %v3576
        %v3599 = vadd.f32 %v3365, %v3581
        %v3600 = vadd.f32 %v3366, %v3584
        %v3601 = vadd.f32 %v3367, %v3589
        %v3602 = vadd.f32 %v3368, %v3592
        %v3603 = vld [vmem:[%s752] sm:$0x8]
        %v3604 = vld [vmem:[%s752 + $0x4] sm:$0xf]
        %v3605 = vld [vmem:[%s752 + $0xc] sm:$0x8]
        %v3606 = vld [vmem:[%s752 + $0x10] sm:$0xf]
        %v3607 = vld [vmem:[%s752 + $0x18] sm:$0x8]
        %v3608 = vld [vmem:[%s752 + $0x1c] sm:$0xf]
        %v3609 = vld [vmem:[%s752 + $0x24] sm:$0x8]
        %v3610 = vld [vmem:[%s752 + $0x28] sm:$0xf]
        %v3611 = vld [vmem:[%s752 + $0x30] sm:$0x8]
        %v3612 = vld [vmem:[%s752 + $0x34] sm:$0xf]
        %v3613 = vld [vmem:[%s752 + $0x3c] sm:$0x8]
        %v3614 = vld [vmem:[%s752 + $0x40] sm:$0xf]
        %v3615 = vld [vmem:[%s752 + $0x48] sm:$0x8]
        %v3616 = vld [vmem:[%s752 + $0x4c] sm:$0xf]
        %v3617 = vld [vmem:[%s752 + $0x54] sm:$0x8]
        %v3618 = vld [vmem:[%s752 + $0x58] sm:$0xf]
        %v3620 = vshrl.u32 %v3603, 16
        %v3622 = vrot.slane %v3620, 7
        %v3623 = vrot.slane %v3622, 4
        %v3625 = vshrl.u32 %v3604, 16
        %v3627 = vrot.slane %v3625, 7
        %v3628 = vshll.u32 %v3604, 16
        %v3630 = vor.u32 %v3627, %v3628
        %v3631 = vsel %vm922, %v3623, %v3630
        %v3633 = vshrl.u32 %v3605, 16
        %v3635 = vrot.slane %v3633, 7
        %v3636 = vrot.slane %v3635, 4
        %v3638 = vshrl.u32 %v3606, 16
        %v3640 = vrot.slane %v3638, 7
        %v3641 = vshll.u32 %v3606, 16
        %v3643 = vor.u32 %v3640, %v3641
        %v3644 = vsel %vm922, %v3636, %v3643
        %v3646 = vshrl.u32 %v3607, 16
        %v3648 = vrot.slane %v3646, 7
        %v3649 = vrot.slane %v3648, 4
        %v3651 = vshrl.u32 %v3608, 16
        %v3653 = vrot.slane %v3651, 7
        %v3654 = vshll.u32 %v3608, 16
        %v3656 = vor.u32 %v3653, %v3654
        %v3657 = vsel %vm922, %v3649, %v3656
        %v3659 = vshrl.u32 %v3609, 16
        %v3661 = vrot.slane %v3659, 7
        %v3662 = vrot.slane %v3661, 4
        %v3664 = vshrl.u32 %v3610, 16
        %v3666 = vrot.slane %v3664, 7
        %v3667 = vshll.u32 %v3610, 16
        %v3669 = vor.u32 %v3666, %v3667
        %v3670 = vsel %vm922, %v3662, %v3669
        %v3672 = vshrl.u32 %v3611, 16
        %v3674 = vrot.slane %v3672, 7
        %v3675 = vrot.slane %v3674, 4
        %v3677 = vshrl.u32 %v3612, 16
        %v3679 = vrot.slane %v3677, 7
        %v3680 = vshll.u32 %v3612, 16
        %v3682 = vor.u32 %v3679, %v3680
        %v3683 = vsel %vm922, %v3675, %v3682
        %v3685 = vshrl.u32 %v3613, 16
        %v3687 = vrot.slane %v3685, 7
        %v3688 = vrot.slane %v3687, 4
        %v3690 = vshrl.u32 %v3614, 16
        %v3692 = vrot.slane %v3690, 7
        %v3693 = vshll.u32 %v3614, 16
        %v3695 = vor.u32 %v3692, %v3693
        %v3696 = vsel %vm922, %v3688, %v3695
        %v3698 = vshrl.u32 %v3615, 16
        %v3700 = vrot.slane %v3698, 7
        %v3701 = vrot.slane %v3700, 4
        %v3703 = vshrl.u32 %v3616, 16
        %v3705 = vrot.slane %v3703, 7
        %v3706 = vshll.u32 %v3616, 16
        %v3708 = vor.u32 %v3705, %v3706
        %v3709 = vsel %vm922, %v3701, %v3708
        %v3711 = vshrl.u32 %v3617, 16
        %v3713 = vrot.slane %v3711, 7
        %v3714 = vrot.slane %v3713, 4
        %v3716 = vshrl.u32 %v3618, 16
        %v3718 = vrot.slane %v3716, 7
        %v3719 = vshll.u32 %v3618, 16
        %v3721 = vor.u32 %v3718, %v3719
        %v3722 = vsel %vm922, %v3714, %v3721
        %s3723 = scalar_lea.vmem %s2, 24
        %v3724 = vld [vmem:[%s3723] sm:$0xf]
        %v3725 = vld [vmem:[%s3723 + $0x4] sm:$0xf]
        %v3726 = vunpack.c.l.b16 %v3631
        %v3727 = vunpack.c.l.b16 %v3644
        %v3728 = vunpack.c.l.b16 %v3657
        %v3729 = vunpack.c.l.b16 %v3670
        %v3730 = vunpack.c.l.b16 %v3683
        %v3731 = vunpack.c.l.b16 %v3696
        %v3732 = vunpack.c.l.b16 %v3709
        %v3733 = vunpack.c.l.b16 %v3722
        %v3734 = vpack.c.b16 %v3727, %v3726
        %v3735 = vpack.c.b16 %v3729, %v3728
        %v3736 = vpack.c.b16 %v3731, %v3730
        %v3737 = vpack.c.b16 %v3733, %v3732
        %v3740 = vunpack.c.l.b16 %v3724
        %v3741 = vunpack.c.l.b16 %v3725
        %v3742 = vpack.c.b16 %v3741, %v3740
        %v3745 = vsel %vm499, %v3734, 0
        %v3748 = vsel %vm499, %v3735, 0
        %v3751 = vsel %vm499, %v3736, 0
        %v3754 = vsel %vm499, %v3737, 0
        %3756 = vmatprep.subr.bf16.mxu0 0
        %3757 = vmatpush1.bf16.msra.mxu0 0
        %3758 = vmatprep.subr.bf16.mxu0 0
        %3759 = vmatpush1.bf16.msra.mxu0 0
        %3760 = vmatprep.subr.bf16.mxu0 0
        %3761 = vmatpush1.bf16.msra.mxu0 0
        %3762 = vmatprep.subr.bf16.mxu0 0
        %3763 = vmatpush1.bf16.msra.mxu0 0
        %3764 = vmatprep.subr.bf16.mxu0 0
        %3765 = vmatpush1.bf16.msra.mxu0 0
        %3766 = vmatprep.subr.bf16.mxu0 0
        %3767 = vmatpush1.bf16.msra.mxu0 0
        %3768 = vmatprep.subr.bf16.mxu0 0
        %3769 = vmatpush1.bf16.msra.mxu0 0
        %3770 = vmatprep.subr.bf16.mxu0 0
        %3771 = vmatpush1.bf16.msra.mxu0 %v3742
        %3772 = vmatprep.subr.bf16.mxu0 0
        %3773 = vmatpush2.bf16.msra.mxu0 0
        %3774 = vmatprep.subr.bf16.mxu0 0
        %3775 = vmatpush2.bf16.msra.mxu0 0
        %3776 = vmatprep.subr.bf16.mxu0 0
        %3777 = vmatpush2.bf16.msra.mxu0 0
        %3778 = vmatprep.subr.bf16.mxu0 0
        %3779 = vmatpush2.bf16.msra.mxu0 0
        %3780 = vmatprep.subr.bf16.mxu0 0
        %3781 = vmatpush2.bf16.msra.mxu0 0
        %3782 = vmatprep.subr.bf16.mxu0 0
        %3783 = vmatpush2.bf16.msra.mxu0 0
        %3784 = vmatprep.subr.bf16.mxu0 0
        %3785 = vmatpush2.bf16.msra.mxu0 0
        %3786 = vmatprep.subr.bf16.mxu0 0
        %3787 = vmatpush2.bf16.msra.mxu0 0
        %3788 = vmatprep.mubr.bf16.mxu0 0
        %3789 = vmatmul.mubr.bf16.gmra.mxu0 %v3745
        %v3790 = vpop.f32.mrf.mxu0
        %v3791 = vadd.f32 0.0, %v3790
        %v3792 = vpop.f32.mrf.mxu0
        %v3793 = vpop.f32.mrf.mxu0
        %v3794 = vadd.f32 0.0, %v3793
        %v3795 = vpop.f32.mrf.mxu0
        %3796 = vmatprep.mubr.bf16.mxu0 0
        %3797 = vmatmul.mubr.bf16.gmra.mxu0 %v3748
        %v3798 = vpop.f32.mrf.mxu0
        %v3799 = vadd.f32 0.0, %v3798
        %v3800 = vpop.f32.mrf.mxu0
        %v3801 = vpop.f32.mrf.mxu0
        %v3802 = vadd.f32 0.0, %v3801
        %v3803 = vpop.f32.mrf.mxu0
        %3804 = vmatprep.mubr.bf16.mxu0 0
        %3805 = vmatmul.mubr.bf16.gmra.mxu0 %v3751
        %v3806 = vpop.f32.mrf.mxu0
        %v3807 = vadd.f32 0.0, %v3806
        %v3808 = vpop.f32.mrf.mxu0
        %v3809 = vpop.f32.mrf.mxu0
        %v3810 = vadd.f32 0.0, %v3809
        %v3811 = vpop.f32.mrf.mxu0
        %3812 = vmatprep.mubr.bf16.mxu0 0
        %3813 = vmatmul.mubr.bf16.gmra.mxu0 %v3754
        %v3814 = vpop.f32.mrf.mxu0
        %v3815 = vadd.f32 0.0, %v3814
        %v3816 = vpop.f32.mrf.mxu0
        %v3817 = vpop.f32.mrf.mxu0
        %v3818 = vadd.f32 0.0, %v3817
        %v3819 = vpop.f32.mrf.mxu0
        %3820 = vdwg.mxu0
        %v3821 = vadd.f32 %v3595, %v3791
        %v3822 = vadd.f32 %v3596, %v3794
        %v3823 = vadd.f32 %v3597, %v3799
        %v3824 = vadd.f32 %v3598, %v3802
        %v3825 = vadd.f32 %v3599, %v3807
        %v3826 = vadd.f32 %v3600, %v3810
        %v3827 = vadd.f32 %v3601, %v3815
        %v3828 = vadd.f32 %v3602, %v3818
        %s3829 = scalar_lea.vmem %s2, 32
        %v3830 = vld [vmem:[%s3829] sm:$0xf]
        %v3831 = vld [vmem:[%s3829 + $0x4] sm:$0xf]
        %v3840 = vunpack.c.l.b16 %v3604
        %v3841 = vunpack.c.l.b16 %v3606
        %v3842 = vunpack.c.l.b16 %v3608
        %v3843 = vunpack.c.l.b16 %v3610
        %v3844 = vunpack.c.l.b16 %v3612
        %v3845 = vunpack.c.l.b16 %v3614
        %v3846 = vunpack.c.l.b16 %v3616
        %v3847 = vunpack.c.l.b16 %v3618
        %v3848 = vpack.c.b16 %v3841, %v3840
        %v3849 = vpack.c.b16 %v3843, %v3842
        %v3850 = vpack.c.b16 %v3845, %v3844
        %v3851 = vpack.c.b16 %v3847, %v3846
        %v3854 = vunpack.c.l.b16 %v3830
        %v3855 = vunpack.c.l.b16 %v3831
        %v3856 = vpack.c.b16 %v3855, %v3854
        %v3859 = vsel %vm499, %v3848, 0
        %v3862 = vsel %vm499, %v3849, 0
        %v3865 = vsel %vm499, %v3850, 0
        %v3868 = vsel %vm499, %v3851, 0
        %3870 = vmatprep.subr.bf16.mxu0 0
        %3871 = vmatpush1.bf16.msra.mxu0 0
        %3872 = vmatprep.subr.bf16.mxu0 0
        %3873 = vmatpush1.bf16.msra.mxu0 0
        %3874 = vmatprep.subr.bf16.mxu0 0
        %3875 = vmatpush1.bf16.msra.mxu0 0
        %3876 = vmatprep.subr.bf16.mxu0 0
        %3877 = vmatpush1.bf16.msra.mxu0 0
        %3878 = vmatprep.subr.bf16.mxu0 0
        %3879 = vmatpush1.bf16.msra.mxu0 0
        %3880 = vmatprep.subr.bf16.mxu0 0
        %3881 = vmatpush1.bf16.msra.mxu0 0
        %3882 = vmatprep.subr.bf16.mxu0 0
        %3883 = vmatpush1.bf16.msra.mxu0 0
        %3884 = vmatprep.subr.bf16.mxu0 0
        %3885 = vmatpush1.bf16.msra.mxu0 %v3856
        %3886 = vmatprep.subr.bf16.mxu0 0
        %3887 = vmatpush2.bf16.msra.mxu0 0
        %3888 = vmatprep.subr.bf16.mxu0 0
        %3889 = vmatpush2.bf16.msra.mxu0 0
        %3890 = vmatprep.subr.bf16.mxu0 0
        %3891 = vmatpush2.bf16.msra.mxu0 0
        %3892 = vmatprep.subr.bf16.mxu0 0
        %3893 = vmatpush2.bf16.msra.mxu0 0
        %3894 = vmatprep.subr.bf16.mxu0 0
        %3895 = vmatpush2.bf16.msra.mxu0 0
        %3896 = vmatprep.subr.bf16.mxu0 0
        %3897 = vmatpush2.bf16.msra.mxu0 0
        %3898 = vmatprep.subr.bf16.mxu0 0
        %3899 = vmatpush2.bf16.msra.mxu0 0
        %3900 = vmatprep.subr.bf16.mxu0 0
        %3901 = vmatpush2.bf16.msra.mxu0 0
        %3902 = vmatprep.mubr.bf16.mxu0 0
        %3903 = vmatmul.mubr.bf16.gmra.mxu0 %v3859
        %v3904 = vpop.f32.mrf.mxu0
        %v3905 = vadd.f32 0.0, %v3904
        %v3906 = vpop.f32.mrf.mxu0
        %v3907 = vpop.f32.mrf.mxu0
        %v3908 = vadd.f32 0.0, %v3907
        %v3909 = vpop.f32.mrf.mxu0
        %3910 = vmatprep.mubr.bf16.mxu0 0
        %3911 = vmatmul.mubr.bf16.gmra.mxu0 %v3862
        %v3912 = vpop.f32.mrf.mxu0
        %v3913 = vadd.f32 0.0, %v3912
        %v3914 = vpop.f32.mrf.mxu0
        %v3915 = vpop.f32.mrf.mxu0
        %v3916 = vadd.f32 0.0, %v3915
        %v3917 = vpop.f32.mrf.mxu0
        %3918 = vmatprep.mubr.bf16.mxu0 0
        %3919 = vmatmul.mubr.bf16.gmra.mxu0 %v3865
        %v3920 = vpop.f32.mrf.mxu0
        %v3921 = vadd.f32 0.0, %v3920
        %v3922 = vpop.f32.mrf.mxu0
        %v3923 = vpop.f32.mrf.mxu0
        %v3924 = vadd.f32 0.0, %v3923
        %v3925 = vpop.f32.mrf.mxu0
        %3926 = vmatprep.mubr.bf16.mxu0 0
        %3927 = vmatmul.mubr.bf16.gmra.mxu0 %v3868
        %v3928 = vpop.f32.mrf.mxu0
        %v3929 = vadd.f32 0.0, %v3928
        %v3930 = vpop.f32.mrf.mxu0
        %v3931 = vpop.f32.mrf.mxu0
        %v3932 = vadd.f32 0.0, %v3931
        %v3933 = vpop.f32.mrf.mxu0
        %3934 = vdwg.mxu0
        %v3935 = vadd.f32 %v3821, %v3905
        %v3936 = vadd.f32 %v3822, %v3908
        %v3937 = vadd.f32 %v3823, %v3913
        %v3938 = vadd.f32 %v3824, %v3916
        %v3939 = vadd.f32 %v3825, %v3921
        %v3940 = vadd.f32 %v3826, %v3924
        %v3941 = vadd.f32 %v3827, %v3929
        %v3942 = vadd.f32 %v3828, %v3932
        %v3943 = vld [vmem:[%s752 + $0x4] sm:$0xf]
        %v3944 = vld [vmem:[%s752 + $0x8] sm:$0x1]
        %v3945 = vld [vmem:[%s752 + $0x10] sm:$0xf]
        %v3946 = vld [vmem:[%s752 + $0x14] sm:$0x1]
        %v3947 = vld [vmem:[%s752 + $0x1c] sm:$0xf]
        %v3948 = vld [vmem:[%s752 + $0x20] sm:$0x1]
        %v3949 = vld [vmem:[%s752 + $0x28] sm:$0xf]
        %v3950 = vld [vmem:[%s752 + $0x2c] sm:$0x1]
        %v3951 = vld [vmem:[%s752 + $0x34] sm:$0xf]
        %v3952 = vld [vmem:[%s752 + $0x38] sm:$0x1]
        %v3953 = vld [vmem:[%s752 + $0x40] sm:$0xf]
        %v3954 = vld [vmem:[%s752 + $0x44] sm:$0x1]
        %v3955 = vld [vmem:[%s752 + $0x4c] sm:$0xf]
        %v3956 = vld [vmem:[%s752 + $0x50] sm:$0x1]
        %v3957 = vld [vmem:[%s752 + $0x58] sm:$0xf]
        %v3958 = vld [vmem:[%s752 + $0x5c] sm:$0x1]
        %v3960 = vshrl.u32 %v3943, 16
        %v3962 = vrot.slane %v3960, 4
        %v3963 = vshll.u32 %v3943, 16
        %v3965 = vrot.slane %v3963, 5
        %v3966 = vor.u32 %v3962, %v3965
        %v3967 = vrot.slane %v3966, 4
        %v3969 = vshll.u32 %v3944, 16
        %v3971 = vrot.slane %v3969, 5
        %v3972 = vsel %vm1264, %v3967, %v3971
        %v3974 = vshrl.u32 %v3945, 16
        %v3976 = vrot.slane %v3974, 4
        %v3977 = vshll.u32 %v3945, 16
        %v3979 = vrot.slane %v3977, 5
        %v3980 = vor.u32 %v3976, %v3979
        %v3981 = vrot.slane %v3980, 4
        %v3983 = vshll.u32 %v3946, 16
        %v3985 = vrot.slane %v3983, 5
        %v3986 = vsel %vm1264, %v3981, %v3985
        %v3988 = vshrl.u32 %v3947, 16
        %v3990 = vrot.slane %v3988, 4
        %v3991 = vshll.u32 %v3947, 16
        %v3993 = vrot.slane %v3991, 5
        %v3994 = vor.u32 %v3990, %v3993
        %v3995 = vrot.slane %v3994, 4
        %v3997 = vshll.u32 %v3948, 16
        %v3999 = vrot.slane %v3997, 5
        %v4000 = vsel %vm1264, %v3995, %v3999
        %v4002 = vshrl.u32 %v3949, 16
        %v4004 = vrot.slane %v4002, 4
        %v4005 = vshll.u32 %v3949, 16
        %v4007 = vrot.slane %v4005, 5
        %v4008 = vor.u32 %v4004, %v4007
        %v4009 = vrot.slane %v4008, 4
        %v4011 = vshll.u32 %v3950, 16
        %v4013 = vrot.slane %v4011, 5
        %v4014 = vsel %vm1264, %v4009, %v4013
        %v4016 = vshrl.u32 %v3951, 16
        %v4018 = vrot.slane %v4016, 4
        %v4019 = vshll.u32 %v3951, 16
        %v4021 = vrot.slane %v4019, 5
        %v4022 = vor.u32 %v4018, %v4021
        %v4023 = vrot.slane %v4022, 4
        %v4025 = vshll.u32 %v3952, 16
        %v4027 = vrot.slane %v4025, 5
        %v4028 = vsel %vm1264, %v4023, %v4027
        %v4030 = vshrl.u32 %v3953, 16
        %v4032 = vrot.slane %v4030, 4
        %v4033 = vshll.u32 %v3953, 16
        %v4035 = vrot.slane %v4033, 5
        %v4036 = vor.u32 %v4032, %v4035
        %v4037 = vrot.slane %v4036, 4
        %v4039 = vshll.u32 %v3954, 16
        %v4041 = vrot.slane %v4039, 5
        %v4042 = vsel %vm1264, %v4037, %v4041
        %v4044 = vshrl.u32 %v3955, 16
        %v4046 = vrot.slane %v4044, 4
        %v4047 = vshll.u32 %v3955, 16
        %v4049 = vrot.slane %v4047, 5
        %v4050 = vor.u32 %v4046, %v4049
        %v4051 = vrot.slane %v4050, 4
        %v4053 = vshll.u32 %v3956, 16
        %v4055 = vrot.slane %v4053, 5
        %v4056 = vsel %vm1264, %v4051, %v4055
        %v4058 = vshrl.u32 %v3957, 16
        %v4060 = vrot.slane %v4058, 4
        %v4061 = vshll.u32 %v3957, 16
        %v4063 = vrot.slane %v4061, 5
        %v4064 = vor.u32 %v4060, %v4063
        %v4065 = vrot.slane %v4064, 4
        %v4067 = vshll.u32 %v3958, 16
        %v4069 = vrot.slane %v4067, 5
        %v4070 = vsel %vm1264, %v4065, %v4069
        %s4071 = scalar_lea.vmem %s2, 40
        %v4072 = vld [vmem:[%s4071] sm:$0xf]
        %v4073 = vld [vmem:[%s4071 + $0x4] sm:$0xf]
        %v4074 = vunpack.c.l.b16 %v3972
        %v4075 = vunpack.c.l.b16 %v3986
        %v4076 = vunpack.c.l.b16 %v4000
        %v4077 = vunpack.c.l.b16 %v4014
        %v4078 = vunpack.c.l.b16 %v4028
        %v4079 = vunpack.c.l.b16 %v4042
        %v4080 = vunpack.c.l.b16 %v4056
        %v4081 = vunpack.c.l.b16 %v4070
        %v4082 = vpack.c.b16 %v4075, %v4074
        %v4083 = vpack.c.b16 %v4077, %v4076
        %v4084 = vpack.c.b16 %v4079, %v4078
        %v4085 = vpack.c.b16 %v4081, %v4080
        %v4088 = vunpack.c.l.b16 %v4072
        %v4089 = vunpack.c.l.b16 %v4073
        %v4090 = vpack.c.b16 %v4089, %v4088
        %v4093 = vsel %vm499, %v4082, 0
        %v4096 = vsel %vm499, %v4083, 0
        %v4099 = vsel %vm499, %v4084, 0
        %v4102 = vsel %vm499, %v4085, 0
        %4104 = vmatprep.subr.bf16.mxu0 0
        %4105 = vmatpush1.bf16.msra.mxu0 0
        %4106 = vmatprep.subr.bf16.mxu0 0
        %4107 = vmatpush1.bf16.msra.mxu0 0
        %4108 = vmatprep.subr.bf16.mxu0 0
        %4109 = vmatpush1.bf16.msra.mxu0 0
        %4110 = vmatprep.subr.bf16.mxu0 0
        %4111 = vmatpush1.bf16.msra.mxu0 0
        %4112 = vmatprep.subr.bf16.mxu0 0
        %4113 = vmatpush1.bf16.msra.mxu0 0
        %4114 = vmatprep.subr.bf16.mxu0 0
        %4115 = vmatpush1.bf16.msra.mxu0 0
        %4116 = vmatprep.subr.bf16.mxu0 0
        %4117 = vmatpush1.bf16.msra.mxu0 0
        %4118 = vmatprep.subr.bf16.mxu0 0
        %4119 = vmatpush1.bf16.msra.mxu0 %v4090
        %4120 = vmatprep.subr.bf16.mxu0 0
        %4121 = vmatpush2.bf16.msra.mxu0 0
        %4122 = vmatprep.subr.bf16.mxu0 0
        %4123 = vmatpush2.bf16.msra.mxu0 0
        %4124 = vmatprep.subr.bf16.mxu0 0
        %4125 = vmatpush2.bf16.msra.mxu0 0
        %4126 = vmatprep.subr.bf16.mxu0 0
        %4127 = vmatpush2.bf16.msra.mxu0 0
        %4128 = vmatprep.subr.bf16.mxu0 0
        %4129 = vmatpush2.bf16.msra.mxu0 0
        %4130 = vmatprep.subr.bf16.mxu0 0
        %4131 = vmatpush2.bf16.msra.mxu0 0
        %4132 = vmatprep.subr.bf16.mxu0 0
        %4133 = vmatpush2.bf16.msra.mxu0 0
        %4134 = vmatprep.subr.bf16.mxu0 0
        %4135 = vmatpush2.bf16.msra.mxu0 0
        %4136 = vmatprep.mubr.bf16.mxu0 0
        %4137 = vmatmul.mubr.bf16.gmra.mxu0 %v4093
        %v4138 = vpop.f32.mrf.mxu0
        %v4139 = vadd.f32 0.0, %v4138
        %v4140 = vpop.f32.mrf.mxu0
        %v4141 = vpop.f32.mrf.mxu0
        %v4142 = vadd.f32 0.0, %v4141
        %v4143 = vpop.f32.mrf.mxu0
        %4144 = vmatprep.mubr.bf16.mxu0 0
        %4145 = vmatmul.mubr.bf16.gmra.mxu0 %v4096
        %v4146 = vpop.f32.mrf.mxu0
        %v4147 = vadd.f32 0.0, %v4146
        %v4148 = vpop.f32.mrf.mxu0
        %v4149 = vpop.f32.mrf.mxu0
        %v4150 = vadd.f32 0.0, %v4149
        %v4151 = vpop.f32.mrf.mxu0
        %4152 = vmatprep.mubr.bf16.mxu0 0
        %4153 = vmatmul.mubr.bf16.gmra.mxu0 %v4099
        %v4154 = vpop.f32.mrf.mxu0
        %v4155 = vadd.f32 0.0, %v4154
        %v4156 = vpop.f32.mrf.mxu0
        %v4157 = vpop.f32.mrf.mxu0
        %v4158 = vadd.f32 0.0, %v4157
        %v4159 = vpop.f32.mrf.mxu0
        %4160 = vmatprep.mubr.bf16.mxu0 0
        %4161 = vmatmul.mubr.bf16.gmra.mxu0 %v4102
        %v4162 = vpop.f32.mrf.mxu0
        %v4163 = vadd.f32 0.0, %v4162
        %v4164 = vpop.f32.mrf.mxu0
        %v4165 = vpop.f32.mrf.mxu0
        %v4166 = vadd.f32 0.0, %v4165
        %v4167 = vpop.f32.mrf.mxu0
        %4168 = vdwg.mxu0
        %v4169 = vadd.f32 %v3935, %v4139
        %v4170 = vadd.f32 %v3936, %v4142
        %v4171 = vadd.f32 %v3937, %v4147
        %v4172 = vadd.f32 %v3938, %v4150
        %v4173 = vadd.f32 %v3939, %v4155
        %v4174 = vadd.f32 %v3940, %v4158
        %v4175 = vadd.f32 %v3941, %v4163
        %v4176 = vadd.f32 %v3942, %v4166
        %v4177 = vld [vmem:[%s2057] sm:$0x8]
        %v4178 = vld [vmem:[%s2057 + $0x4] sm:$0xf]
        %v4179 = vld [vmem:[%s2057 + $0xc] sm:$0x8]
        %v4180 = vld [vmem:[%s2057 + $0x10] sm:$0xf]
        %v4181 = vld [vmem:[%s2057 + $0x18] sm:$0x8]
        %v4182 = vld [vmem:[%s2057 + $0x1c] sm:$0xf]
        %v4183 = vld [vmem:[%s2057 + $0x24] sm:$0x8]
        %v4184 = vld [vmem:[%s2057 + $0x28] sm:$0xf]
        %v4185 = vld [vmem:[%s2057 + $0x30] sm:$0x8]
        %v4186 = vld [vmem:[%s2057 + $0x34] sm:$0xf]
        %v4187 = vld [vmem:[%s2057 + $0x3c] sm:$0x8]
        %v4188 = vld [vmem:[%s2057 + $0x40] sm:$0xf]
        %v4189 = vld [vmem:[%s2057 + $0x48] sm:$0x8]
        %v4190 = vld [vmem:[%s2057 + $0x4c] sm:$0xf]
        %v4191 = vld [vmem:[%s2057 + $0x54] sm:$0x8]
        %v4192 = vld [vmem:[%s2057 + $0x58] sm:$0xf]
        %v4194 = vshrl.u32 %v4177, 16
        %v4196 = vrot.slane %v4194, 7
        %v4197 = vrot.slane %v4196, 4
        %v4199 = vshrl.u32 %v4178, 16
        %v4201 = vrot.slane %v4199, 7
        %v4202 = vshll.u32 %v4178, 16
        %v4204 = vor.u32 %v4201, %v4202
        %v4205 = vsel %vm922, %v4197, %v4204
        %v4207 = vshrl.u32 %v4179, 16
        %v4209 = vrot.slane %v4207, 7
        %v4210 = vrot.slane %v4209, 4
        %v4212 = vshrl.u32 %v4180, 16
        %v4214 = vrot.slane %v4212, 7
        %v4215 = vshll.u32 %v4180, 16
        %v4217 = vor.u32 %v4214, %v4215
        %v4218 = vsel %vm922, %v4210, %v4217
        %v4220 = vshrl.u32 %v4181, 16
        %v4222 = vrot.slane %v4220, 7
        %v4223 = vrot.slane %v4222, 4
        %v4225 = vshrl.u32 %v4182, 16
        %v4227 = vrot.slane %v4225, 7
        %v4228 = vshll.u32 %v4182, 16
        %v4230 = vor.u32 %v4227, %v4228
        %v4231 = vsel %vm922, %v4223, %v4230
        %v4233 = vshrl.u32 %v4183, 16
        %v4235 = vrot.slane %v4233, 7
        %v4236 = vrot.slane %v4235, 4
        %v4238 = vshrl.u32 %v4184, 16
        %v4240 = vrot.slane %v4238, 7
        %v4241 = vshll.u32 %v4184, 16
        %v4243 = vor.u32 %v4240, %v4241
        %v4244 = vsel %vm922, %v4236, %v4243
        %v4246 = vshrl.u32 %v4185, 16
        %v4248 = vrot.slane %v4246, 7
        %v4249 = vrot.slane %v4248, 4
        %v4251 = vshrl.u32 %v4186, 16
        %v4253 = vrot.slane %v4251, 7
        %v4254 = vshll.u32 %v4186, 16
        %v4256 = vor.u32 %v4253, %v4254
        %v4257 = vsel %vm922, %v4249, %v4256
        %v4259 = vshrl.u32 %v4187, 16
        %v4261 = vrot.slane %v4259, 7
        %v4262 = vrot.slane %v4261, 4
        %v4264 = vshrl.u32 %v4188, 16
        %v4266 = vrot.slane %v4264, 7
        %v4267 = vshll.u32 %v4188, 16
        %v4269 = vor.u32 %v4266, %v4267
        %v4270 = vsel %vm922, %v4262, %v4269
        %v4272 = vshrl.u32 %v4189, 16
        %v4274 = vrot.slane %v4272, 7
        %v4275 = vrot.slane %v4274, 4
        %v4277 = vshrl.u32 %v4190, 16
        %v4279 = vrot.slane %v4277, 7
        %v4280 = vshll.u32 %v4190, 16
        %v4282 = vor.u32 %v4279, %v4280
        %v4283 = vsel %vm922, %v4275, %v4282
        %v4285 = vshrl.u32 %v4191, 16
        %v4287 = vrot.slane %v4285, 7
        %v4288 = vrot.slane %v4287, 4
        %v4290 = vshrl.u32 %v4192, 16
        %v4292 = vrot.slane %v4290, 7
        %v4293 = vshll.u32 %v4192, 16
        %v4295 = vor.u32 %v4292, %v4293
        %v4296 = vsel %vm922, %v4288, %v4295
        %s4297 = scalar_lea.vmem %s2, 48
        %v4298 = vld [vmem:[%s4297] sm:$0xf]
        %v4299 = vld [vmem:[%s4297 + $0x4] sm:$0xf]
        %v4300 = vunpack.c.l.b16 %v4205
        %v4301 = vunpack.c.l.b16 %v4218
        %v4302 = vunpack.c.l.b16 %v4231
        %v4303 = vunpack.c.l.b16 %v4244
        %v4304 = vunpack.c.l.b16 %v4257
        %v4305 = vunpack.c.l.b16 %v4270
        %v4306 = vunpack.c.l.b16 %v4283
        %v4307 = vunpack.c.l.b16 %v4296
        %v4308 = vpack.c.b16 %v4301, %v4300
        %v4309 = vpack.c.b16 %v4303, %v4302
        %v4310 = vpack.c.b16 %v4305, %v4304
        %v4311 = vpack.c.b16 %v4307, %v4306
        %v4314 = vunpack.c.l.b16 %v4298
        %v4315 = vunpack.c.l.b16 %v4299
        %v4316 = vpack.c.b16 %v4315, %v4314
        %v4319 = vsel %vm499, %v4308, 0
        %v4322 = vsel %vm499, %v4309, 0
        %v4325 = vsel %vm499, %v4310, 0
        %v4328 = vsel %vm499, %v4311, 0
        %4330 = vmatprep.subr.bf16.mxu0 0
        %4331 = vmatpush1.bf16.msra.mxu0 0
        %4332 = vmatprep.subr.bf16.mxu0 0
        %4333 = vmatpush1.bf16.msra.mxu0 0
        %4334 = vmatprep.subr.bf16.mxu0 0
        %4335 = vmatpush1.bf16.msra.mxu0 0
        %4336 = vmatprep.subr.bf16.mxu0 0
        %4337 = vmatpush1.bf16.msra.mxu0 0
        %4338 = vmatprep.subr.bf16.mxu0 0
        %4339 = vmatpush1.bf16.msra.mxu0 0
        %4340 = vmatprep.subr.bf16.mxu0 0
        %4341 = vmatpush1.bf16.msra.mxu0 0
        %4342 = vmatprep.subr.bf16.mxu0 0
        %4343 = vmatpush1.bf16.msra.mxu0 0
        %4344 = vmatprep.subr.bf16.mxu0 0
        %4345 = vmatpush1.bf16.msra.mxu0 %v4316
        %4346 = vmatprep.subr.bf16.mxu0 0
        %4347 = vmatpush2.bf16.msra.mxu0 0
        %4348 = vmatprep.subr.bf16.mxu0 0
        %4349 = vmatpush2.bf16.msra.mxu0 0
        %4350 = vmatprep.subr.bf16.mxu0 0
        %4351 = vmatpush2.bf16.msra.mxu0 0
        %4352 = vmatprep.subr.bf16.mxu0 0
        %4353 = vmatpush2.bf16.msra.mxu0 0
        %4354 = vmatprep.subr.bf16.mxu0 0
        %4355 = vmatpush2.bf16.msra.mxu0 0
        %4356 = vmatprep.subr.bf16.mxu0 0
        %4357 = vmatpush2.bf16.msra.mxu0 0
        %4358 = vmatprep.subr.bf16.mxu0 0
        %4359 = vmatpush2.bf16.msra.mxu0 0
        %4360 = vmatprep.subr.bf16.mxu0 0
        %4361 = vmatpush2.bf16.msra.mxu0 0
        %4362 = vmatprep.mubr.bf16.mxu0 0
        %4363 = vmatmul.mubr.bf16.gmra.mxu0 %v4319
        %v4364 = vpop.f32.mrf.mxu0
        %v4365 = vadd.f32 0.0, %v4364
        %v4366 = vpop.f32.mrf.mxu0
        %v4367 = vpop.f32.mrf.mxu0
        %v4368 = vadd.f32 0.0, %v4367
        %v4369 = vpop.f32.mrf.mxu0
        %4370 = vmatprep.mubr.bf16.mxu0 0
        %4371 = vmatmul.mubr.bf16.gmra.mxu0 %v4322
        %v4372 = vpop.f32.mrf.mxu0
        %v4373 = vadd.f32 0.0, %v4372
        %v4374 = vpop.f32.mrf.mxu0
        %v4375 = vpop.f32.mrf.mxu0
        %v4376 = vadd.f32 0.0, %v4375
        %v4377 = vpop.f32.mrf.mxu0
        %4378 = vmatprep.mubr.bf16.mxu0 0
        %4379 = vmatmul.mubr.bf16.gmra.mxu0 %v4325
        %v4380 = vpop.f32.mrf.mxu0
        %v4381 = vadd.f32 0.0, %v4380
        %v4382 = vpop.f32.mrf.mxu0
        %v4383 = vpop.f32.mrf.mxu0
        %v4384 = vadd.f32 0.0, %v4383
        %v4385 = vpop.f32.mrf.mxu0
        %4386 = vmatprep.mubr.bf16.mxu0 0
        %4387 = vmatmul.mubr.bf16.gmra.mxu0 %v4328
        %v4388 = vpop.f32.mrf.mxu0
        %v4389 = vadd.f32 0.0, %v4388
        %v4390 = vpop.f32.mrf.mxu0
        %v4391 = vpop.f32.mrf.mxu0
        %v4392 = vadd.f32 0.0, %v4391
        %v4393 = vpop.f32.mrf.mxu0
        %4394 = vdwg.mxu0
        %v4395 = vadd.f32 %v4169, %v4365
        %v4396 = vadd.f32 %v4170, %v4368
        %v4397 = vadd.f32 %v4171, %v4373
        %v4398 = vadd.f32 %v4172, %v4376
        %v4399 = vadd.f32 %v4173, %v4381
        %v4400 = vadd.f32 %v4174, %v4384
        %v4401 = vadd.f32 %v4175, %v4389
        %v4402 = vadd.f32 %v4176, %v4392
        %s4403 = scalar_lea.vmem %s2, 56
        %v4404 = vld [vmem:[%s4403] sm:$0xf]
        %v4405 = vld [vmem:[%s4403 + $0x4] sm:$0xf]
        %v4414 = vunpack.c.l.b16 %v4178
        %v4415 = vunpack.c.l.b16 %v4180
        %v4416 = vunpack.c.l.b16 %v4182
        %v4417 = vunpack.c.l.b16 %v4184
        %v4418 = vunpack.c.l.b16 %v4186
        %v4419 = vunpack.c.l.b16 %v4188
        %v4420 = vunpack.c.l.b16 %v4190
        %v4421 = vunpack.c.l.b16 %v4192
        %v4422 = vpack.c.b16 %v4415, %v4414
        %v4423 = vpack.c.b16 %v4417, %v4416
        %v4424 = vpack.c.b16 %v4419, %v4418
        %v4425 = vpack.c.b16 %v4421, %v4420
        %v4428 = vunpack.c.l.b16 %v4404
        %v4429 = vunpack.c.l.b16 %v4405
        %v4430 = vpack.c.b16 %v4429, %v4428
        %v4433 = vsel %vm499, %v4422, 0
        %v4436 = vsel %vm499, %v4423, 0
        %v4439 = vsel %vm499, %v4424, 0
        %v4442 = vsel %vm499, %v4425, 0
        %4444 = vmatprep.subr.bf16.mxu0 0
        %4445 = vmatpush1.bf16.msra.mxu0 0
        %4446 = vmatprep.subr.bf16.mxu0 0
        %4447 = vmatpush1.bf16.msra.mxu0 0
        %4448 = vmatprep.subr.bf16.mxu0 0
        %4449 = vmatpush1.bf16.msra.mxu0 0
        %4450 = vmatprep.subr.bf16.mxu0 0
        %4451 = vmatpush1.bf16.msra.mxu0 0
        %4452 = vmatprep.subr.bf16.mxu0 0
        %4453 = vmatpush1.bf16.msra.mxu0 0
        %4454 = vmatprep.subr.bf16.mxu0 0
        %4455 = vmatpush1.bf16.msra.mxu0 0
        %4456 = vmatprep.subr.bf16.mxu0 0
        %4457 = vmatpush1.bf16.msra.mxu0 0
        %4458 = vmatprep.subr.bf16.mxu0 0
        %4459 = vmatpush1.bf16.msra.mxu0 %v4430
        %4460 = vmatprep.subr.bf16.mxu0 0
        %4461 = vmatpush2.bf16.msra.mxu0 0
        %4462 = vmatprep.subr.bf16.mxu0 0
        %4463 = vmatpush2.bf16.msra.mxu0 0
        %4464 = vmatprep.subr.bf16.mxu0 0
        %4465 = vmatpush2.bf16.msra.mxu0 0
        %4466 = vmatprep.subr.bf16.mxu0 0
        %4467 = vmatpush2.bf16.msra.mxu0 0
        %4468 = vmatprep.subr.bf16.mxu0 0
        %4469 = vmatpush2.bf16.msra.mxu0 0
        %4470 = vmatprep.subr.bf16.mxu0 0
        %4471 = vmatpush2.bf16.msra.mxu0 0
        %4472 = vmatprep.subr.bf16.mxu0 0
        %4473 = vmatpush2.bf16.msra.mxu0 0
        %4474 = vmatprep.subr.bf16.mxu0 0
        %4475 = vmatpush2.bf16.msra.mxu0 0
        %4476 = vmatprep.mubr.bf16.mxu0 0
        %4477 = vmatmul.mubr.bf16.gmra.mxu0 %v4433
        %v4478 = vpop.f32.mrf.mxu0
        %v4479 = vadd.f32 0.0, %v4478
        %v4480 = vpop.f32.mrf.mxu0
        %v4481 = vpop.f32.mrf.mxu0
        %v4482 = vadd.f32 0.0, %v4481
        %v4483 = vpop.f32.mrf.mxu0
        %4484 = vmatprep.mubr.bf16.mxu0 0
        %4485 = vmatmul.mubr.bf16.gmra.mxu0 %v4436
        %v4486 = vpop.f32.mrf.mxu0
        %v4487 = vadd.f32 0.0, %v4486
        %v4488 = vpop.f32.mrf.mxu0
        %v4489 = vpop.f32.mrf.mxu0
        %v4490 = vadd.f32 0.0, %v4489
        %v4491 = vpop.f32.mrf.mxu0
        %4492 = vmatprep.mubr.bf16.mxu0 0
        %4493 = vmatmul.mubr.bf16.gmra.mxu0 %v4439
        %v4494 = vpop.f32.mrf.mxu0
        %v4495 = vadd.f32 0.0, %v4494
        %v4496 = vpop.f32.mrf.mxu0
        %v4497 = vpop.f32.mrf.mxu0
        %v4498 = vadd.f32 0.0, %v4497
        %v4499 = vpop.f32.mrf.mxu0
        %4500 = vmatprep.mubr.bf16.mxu0 0
        %4501 = vmatmul.mubr.bf16.gmra.mxu0 %v4442
        %v4502 = vpop.f32.mrf.mxu0
        %v4503 = vadd.f32 0.0, %v4502
        %v4504 = vpop.f32.mrf.mxu0
        %v4505 = vpop.f32.mrf.mxu0
        %v4506 = vadd.f32 0.0, %v4505
        %v4507 = vpop.f32.mrf.mxu0
        %4508 = vdwg.mxu0
        %v4509 = vadd.f32 %v4395, %v4479
        %v4510 = vadd.f32 %v4396, %v4482
        %v4511 = vadd.f32 %v4397, %v4487
        %v4512 = vadd.f32 %v4398, %v4490
        %v4513 = vadd.f32 %v4399, %v4495
        %v4514 = vadd.f32 %v4400, %v4498
        %v4515 = vadd.f32 %v4401, %v4503
        %v4516 = vadd.f32 %v4402, %v4506
        %v4517 = vld [vmem:[%s2057 + $0x4] sm:$0xf]
        %v4518 = vld [vmem:[%s2057 + $0x8] sm:$0x1]
        %v4519 = vld [vmem:[%s2057 + $0x10] sm:$0xf]
        %v4520 = vld [vmem:[%s2057 + $0x14] sm:$0x1]
        %v4521 = vld [vmem:[%s2057 + $0x1c] sm:$0xf]
        %v4522 = vld [vmem:[%s2057 + $0x20] sm:$0x1]
        %v4523 = vld [vmem:[%s2057 + $0x28] sm:$0xf]
        %v4524 = vld [vmem:[%s2057 + $0x2c] sm:$0x1]
        %v4525 = vld [vmem:[%s2057 + $0x34] sm:$0xf]
        %v4526 = vld [vmem:[%s2057 + $0x38] sm:$0x1]
        %v4527 = vld [vmem:[%s2057 + $0x40] sm:$0xf]
        %v4528 = vld [vmem:[%s2057 + $0x44] sm:$0x1]
        %v4529 = vld [vmem:[%s2057 + $0x4c] sm:$0xf]
        %v4530 = vld [vmem:[%s2057 + $0x50] sm:$0x1]
        %v4531 = vld [vmem:[%s2057 + $0x58] sm:$0xf]
        %v4532 = vld [vmem:[%s2057 + $0x5c] sm:$0x1]
        %v4534 = vshrl.u32 %v4517, 16
        %v4536 = vrot.slane %v4534, 4
        %v4537 = vshll.u32 %v4517, 16
        %v4539 = vrot.slane %v4537, 5
        %v4540 = vor.u32 %v4536, %v4539
        %v4541 = vrot.slane %v4540, 4
        %v4543 = vshll.u32 %v4518, 16
        %v4545 = vrot.slane %v4543, 5
        %v4546 = vsel %vm1264, %v4541, %v4545
        %v4548 = vshrl.u32 %v4519, 16
        %v4550 = vrot.slane %v4548, 4
        %v4551 = vshll.u32 %v4519, 16
        %v4553 = vrot.slane %v4551, 5
        %v4554 = vor.u32 %v4550, %v4553
        %v4555 = vrot.slane %v4554, 4
        %v4557 = vshll.u32 %v4520, 16
        %v4559 = vrot.slane %v4557, 5
        %v4560 = vsel %vm1264, %v4555, %v4559
        %v4562 = vshrl.u32 %v4521, 16
        %v4564 = vrot.slane %v4562, 4
        %v4565 = vshll.u32 %v4521, 16
        %v4567 = vrot.slane %v4565, 5
        %v4568 = vor.u32 %v4564, %v4567
        %v4569 = vrot.slane %v4568, 4
        %v4571 = vshll.u32 %v4522, 16
        %v4573 = vrot.slane %v4571, 5
        %v4574 = vsel %vm1264, %v4569, %v4573
        %v4576 = vshrl.u32 %v4523, 16
        %v4578 = vrot.slane %v4576, 4
        %v4579 = vshll.u32 %v4523, 16
        %v4581 = vrot.slane %v4579, 5
        %v4582 = vor.u32 %v4578, %v4581
        %v4583 = vrot.slane %v4582, 4
        %v4585 = vshll.u32 %v4524, 16
        %v4587 = vrot.slane %v4585, 5
        %v4588 = vsel %vm1264, %v4583, %v4587
        %v4590 = vshrl.u32 %v4525, 16
        %v4592 = vrot.slane %v4590, 4
        %v4593 = vshll.u32 %v4525, 16
        %v4595 = vrot.slane %v4593, 5
        %v4596 = vor.u32 %v4592, %v4595
        %v4597 = vrot.slane %v4596, 4
        %v4599 = vshll.u32 %v4526, 16
        %v4601 = vrot.slane %v4599, 5
        %v4602 = vsel %vm1264, %v4597, %v4601
        %v4604 = vshrl.u32 %v4527, 16
        %v4606 = vrot.slane %v4604, 4
        %v4607 = vshll.u32 %v4527, 16
        %v4609 = vrot.slane %v4607, 5
        %v4610 = vor.u32 %v4606, %v4609
        %v4611 = vrot.slane %v4610, 4
        %v4613 = vshll.u32 %v4528, 16
        %v4615 = vrot.slane %v4613, 5
        %v4616 = vsel %vm1264, %v4611, %v4615
        %v4618 = vshrl.u32 %v4529, 16
        %v4620 = vrot.slane %v4618, 4
        %v4621 = vshll.u32 %v4529, 16
        %v4623 = vrot.slane %v4621, 5
        %v4624 = vor.u32 %v4620, %v4623
        %v4625 = vrot.slane %v4624, 4
        %v4627 = vshll.u32 %v4530, 16
        %v4629 = vrot.slane %v4627, 5
        %v4630 = vsel %vm1264, %v4625, %v4629
        %v4632 = vshrl.u32 %v4531, 16
        %v4634 = vrot.slane %v4632, 4
        %v4635 = vshll.u32 %v4531, 16
        %v4637 = vrot.slane %v4635, 5
        %v4638 = vor.u32 %v4634, %v4637
        %v4639 = vrot.slane %v4638, 4
        %v4641 = vshll.u32 %v4532, 16
        %v4643 = vrot.slane %v4641, 5
        %v4644 = vsel %vm1264, %v4639, %v4643
        %s4645 = scalar_lea.vmem %s2, 64
        %v4646 = vld [vmem:[%s4645] sm:$0xf]
        %v4647 = vld [vmem:[%s4645 + $0x4] sm:$0xf]
        %v4648 = vunpack.c.l.b16 %v4546
        %v4649 = vunpack.c.l.b16 %v4560
        %v4650 = vunpack.c.l.b16 %v4574
        %v4651 = vunpack.c.l.b16 %v4588
        %v4652 = vunpack.c.l.b16 %v4602
        %v4653 = vunpack.c.l.b16 %v4616
        %v4654 = vunpack.c.l.b16 %v4630
        %v4655 = vunpack.c.l.b16 %v4644
        %v4656 = vpack.c.b16 %v4649, %v4648
        %v4657 = vpack.c.b16 %v4651, %v4650
        %v4658 = vpack.c.b16 %v4653, %v4652
        %v4659 = vpack.c.b16 %v4655, %v4654
        %v4662 = vunpack.c.l.b16 %v4646
        %v4663 = vunpack.c.l.b16 %v4647
        %v4664 = vpack.c.b16 %v4663, %v4662
        %v4667 = vsel %vm499, %v4656, 0
        %v4670 = vsel %vm499, %v4657, 0
        %v4673 = vsel %vm499, %v4658, 0
        %v4676 = vsel %vm499, %v4659, 0
        %4678 = vmatprep.subr.bf16.mxu0 0
        %4679 = vmatpush1.bf16.msra.mxu0 0
        %4680 = vmatprep.subr.bf16.mxu0 0
        %4681 = vmatpush1.bf16.msra.mxu0 0
        %4682 = vmatprep.subr.bf16.mxu0 0
        %4683 = vmatpush1.bf16.msra.mxu0 0
        %4684 = vmatprep.subr.bf16.mxu0 0
        %4685 = vmatpush1.bf16.msra.mxu0 0
        %4686 = vmatprep.subr.bf16.mxu0 0
        %4687 = vmatpush1.bf16.msra.mxu0 0
        %4688 = vmatprep.subr.bf16.mxu0 0
        %4689 = vmatpush1.bf16.msra.mxu0 0
        %4690 = vmatprep.subr.bf16.mxu0 0
        %4691 = vmatpush1.bf16.msra.mxu0 0
        %4692 = vmatprep.subr.bf16.mxu0 0
        %4693 = vmatpush1.bf16.msra.mxu0 %v4664
        %4694 = vmatprep.subr.bf16.mxu0 0
        %4695 = vmatpush2.bf16.msra.mxu0 0
        %4696 = vmatprep.subr.bf16.mxu0 0
        %4697 = vmatpush2.bf16.msra.mxu0 0
        %4698 = vmatprep.subr.bf16.mxu0 0
        %4699 = vmatpush2.bf16.msra.mxu0 0
        %4700 = vmatprep.subr.bf16.mxu0 0
        %4701 = vmatpush2.bf16.msra.mxu0 0
        %4702 = vmatprep.subr.bf16.mxu0 0
        %4703 = vmatpush2.bf16.msra.mxu0 0
        %4704 = vmatprep.subr.bf16.mxu0 0
        %4705 = vmatpush2.bf16.msra.mxu0 0
        %4706 = vmatprep.subr.bf16.mxu0 0
        %4707 = vmatpush2.bf16.msra.mxu0 0
        %4708 = vmatprep.subr.bf16.mxu0 0
        %4709 = vmatpush2.bf16.msra.mxu0 0
        %4710 = vmatprep.mubr.bf16.mxu0 0
        %4711 = vmatmul.mubr.bf16.gmra.mxu0 %v4667
        %v4712 = vpop.f32.mrf.mxu0
        %v4713 = vadd.f32 0.0, %v4712
        %v4714 = vpop.f32.mrf.mxu0
        %v4715 = vpop.f32.mrf.mxu0
        %v4716 = vadd.f32 0.0, %v4715
        %v4717 = vpop.f32.mrf.mxu0
        %4718 = vmatprep.mubr.bf16.mxu0 0
        %4719 = vmatmul.mubr.bf16.gmra.mxu0 %v4670
        %v4720 = vpop.f32.mrf.mxu0
        %v4721 = vadd.f32 0.0, %v4720
        %v4722 = vpop.f32.mrf.mxu0
        %v4723 = vpop.f32.mrf.mxu0
        %v4724 = vadd.f32 0.0, %v4723
        %v4725 = vpop.f32.mrf.mxu0
        %4726 = vmatprep.mubr.bf16.mxu0 0
        %4727 = vmatmul.mubr.bf16.gmra.mxu0 %v4673
        %v4728 = vpop.f32.mrf.mxu0
        %v4729 = vadd.f32 0.0, %v4728
        %v4730 = vpop.f32.mrf.mxu0
        %v4731 = vpop.f32.mrf.mxu0
        %v4732 = vadd.f32 0.0, %v4731
        %v4733 = vpop.f32.mrf.mxu0
        %4734 = vmatprep.mubr.bf16.mxu0 0
        %4735 = vmatmul.mubr.bf16.gmra.mxu0 %v4676
        %v4736 = vpop.f32.mrf.mxu0
        %v4737 = vadd.f32 0.0, %v4736
        %v4738 = vpop.f32.mrf.mxu0
        %v4739 = vpop.f32.mrf.mxu0
        %v4740 = vadd.f32 0.0, %v4739
        %v4741 = vpop.f32.mrf.mxu0
        %4742 = vdwg.mxu0
        %v4743 = vadd.f32 %v4509, %v4713
        %v4744 = vadd.f32 %v4510, %v4716
        %v4745 = vadd.f32 %v4511, %v4721
        %v4746 = vadd.f32 %v4512, %v4724
        %v4747 = vadd.f32 %v4513, %v4729
        %v4748 = vadd.f32 %v4514, %v4732
        %v4749 = vadd.f32 %v4515, %v4737
        %v4750 = vadd.f32 %v4516, %v4740
        %v4751 = vadd.f32 %v4743, %v487
        %v4752 = vadd.f32 %v4744, %v488
        %v4753 = vadd.f32 %v4745, %v489
        %v4754 = vadd.f32 %v4746, %v490
        %v4755 = vadd.f32 %v4747, %v491
        %v4756 = vadd.f32 %v4748, %v492
        %v4757 = vadd.f32 %v4749, %v493
        %v4758 = vadd.f32 %v4750, %v494
        %4759 = vst.msk [vmem:[%s406] sm:$0xff] %vm499, %v4751
        %4760 = vst.msk [vmem:[%s406 + $0x8] sm:$0xff] %vm499, %v4752
        %4761 = vst.msk [vmem:[%s406 + $0x10] sm:$0xff] %vm499, %v4753
        %4762 = vst.msk [vmem:[%s406 + $0x18] sm:$0xff] %vm499, %v4754
        %4763 = vst.msk [vmem:[%s406 + $0x20] sm:$0xff] %vm499, %v4755
        %4764 = vst.msk [vmem:[%s406 + $0x28] sm:$0xff] %vm499, %v4756
        %4765 = vst.msk [vmem:[%s406 + $0x30] sm:$0xff] %vm499, %v4757
        %4766 = vst.msk [vmem:[%s406 + $0x38] sm:$0xff] %vm499, %v4758
        %s4767 = sand.u32 %s291, 1
        %s4768 = scalar_lea.sflag [#allocation4], %s4767
        %s4769 = sand.u32 %s291, 1
        %s4770 = smul.addr %s4769, 64
        %s4771 = scalar_lea.vmem [#allocation3], %s4770
        // Predicated region
        $region69: #{basic_block_forward.1} parent=67 // pred_check
          %p4772 = pneg %p301
        $region70: #{basic_block_forward.1} parent=67 // pred_check_branch
          %4774 = sbr.rel (%p4772) target = $region72
        $region71: #{basic_block_forward.1} parent=67 // pred_region
          %s4776 = ssub.s32 1024, 1024
          %4777 = vsyncadd %s4768, %s4776
          %s4778 = smul.addr %s26, 8
          %s4779 = smul.addr %s4778, 128
          %s4780 = scalar_lea.hbm %s12, %s4779
          %s4781 = sshll.u32 %s4771, 4
          %s4782 = int_to_ptr.vmem [resolvable:$true] %s4781
          %4787 = dma.vmem_to_hbm [thread:$0]  %s4782, 1024, %s4780, %s4768, 128, 128, 8
        $region72: #{basic_block_forward.1} parent=67 // pred_fallthru
          _
      $region68: #{basic_block_forward.1} parent=5 // pred_fallthru
        _
      %p4788 = scmp.le.s32.totalorder 2, %s21
      // Predicated region
      $region73: #{basic_block_forward.1} parent=5 // pred_check
        %p4789 = pneg %p4788
      $region74: #{basic_block_forward.1} parent=5 // pred_check_branch
        %4791 = sbr.rel (%p4789) target = $region76
      $region75: #{basic_block_forward.1} parent=5 // pred_region
        %s4792 = ssub.s32 %s21, 2
        // Predicated region
        $region77: #{basic_block_forward.1} parent=75 // pred_check
          %p4793 = pneg %p307
        $region78: #{basic_block_forward.1} parent=75 // pred_check_branch
          %4795 = sbr.rel (%p4793) target = $region80
        $region79: #{basic_block_forward.1} parent=75 // pred_region
          %s4796 = sand.u32 %s292, 1
          %s4797 = scalar_lea.sflag [#allocation4], %s4796
          %s4798 = sand.u32 %s292, 1
          %s4799 = smul.addr %s4798, 64
          %s4800 = scalar_lea.vmem [#allocation3], %s4799
          %4801 = dma.done %s4797, 1024
        $region80: #{basic_block_forward.1} parent=75 // pred_fallthru
          _
      $region76: #{basic_block_forward.1} parent=5 // pred_fallthru
        _
    $region6: #{basic_block_forward.1} parent=1 // loop_footer
      %s25 = sadd.s32 1, %s21
    $region7: #{basic_block_forward.1} parent=1 // loop_footer_branch
      %20 = sbr.rel target = $region3
    $region8: #{basic_block_forward.1} parent=1 // loop_exit
      _
    %4802 = vsyncpa [#allocation4], 1
    %s4803 = scalar_lea.sflag [#allocation4], 1
    %4804 = vsyncpa %s4803, 1

</llo_original>
